<compile_context>
chip_gen: v7x
topology: tpu7x:2x2x1
jax: 0.10.0
libtpu: 0.0.40
codegen_flags: <defaults>
</compile_context>

<pallas_src>
import functools
import math

import jax
import jax.numpy as jnp
from jax.experimental import pallas as pl
from jax.experimental.pallas import tpu as pltpu

BN_EPS = 1e-5
# PyTorch-default BatchNorm (gamma=1, beta=0, running_mean=0, running_var=1),
# eval mode, folded into the conv weights.
BN_SCALE = 1.0 / math.sqrt(1.0 + BN_EPS)

MAX_DISP = 16  # full-resolution disparity range; cost volume uses MAX_DISP // 4

_GEMM_TILE_M = 512                 # lane-axis tile (sweep 256-1024 at scale)
_VMEM_LIMIT = 48 * 1024 * 1024     # explicit scoped-VMEM budget (< v7x 64 MiB)


def _round_up(x, n):
    return ((x + n - 1) // n) * n


def _pick_tile_m(m):
    return _GEMM_TILE_M if m >= _GEMM_TILE_M else _round_up(m, 128)


# ----------------------------------------------------------------------------
# Pallas kernels (the GEMM / reduction hot path)
# ----------------------------------------------------------------------------
def _fused_matmul_t_kernel(x_ref, w_ref, b_ref, *rest, relu, has_res):
    """out(Cout, tm) = w(Cout, K) @ x(K, tm) + bias [+ res] [ReLU], f32 acc."""
    if has_res:
        res_ref, o_ref = rest
    else:
        (o_ref,) = rest
    acc = jnp.dot(w_ref[...], x_ref[...], preferred_element_type=jnp.float32)
    acc = acc + b_ref[...]                      # (Cout, 1) broadcast over lanes
    if has_res:
        acc = acc + res_ref[...]                # residual add (pre-activation)
    if relu:
        acc = jnp.maximum(acc, 0.0)
    o_ref[...] = acc.astype(o_ref.dtype)


def fused_matmul_t(x_t, w, bias, *, residual=None, relu=True):
    """Transposed fused conv-GEMM.

    x_t:      (K, M)     im2col columns (any float dtype; cast to bf16 here)
    w:        (Cout, K)  folded conv weights (cast to bf16 here)
    bias:     (Cout,)    f32 bias (BN shift)
    residual: (Cout, M)  optional f32 residual added before ReLU
    returns   (Cout, M)  f32, lane-dense stores (M on lanes).
    """
    k, m = x_t.shape
    cout = w.shape[0]
    tm = _pick_tile_m(m)
    m_pad = _round_up(m, tm)
    if m_pad != m:
        x_t = jnp.pad(x_t, ((0, 0), (0, m_pad - m)))
        if residual is not None:
            residual = jnp.pad(residual, ((0, 0), (0, m_pad - m)))

    x_bf = x_t.astype(jnp.bfloat16)
    w_bf = w.astype(jnp.bfloat16)
    b = bias.reshape(cout, 1).astype(jnp.float32)

    args = [x_bf, w_bf, b]
    in_specs = [
        pl.BlockSpec((k, tm), lambda i: (0, i)),
        pl.BlockSpec((cout, k), lambda i: (0, 0)),
        pl.BlockSpec((cout, 1), lambda i: (0, 0)),
    ]
    if residual is not None:
        args.append(residual.astype(jnp.float32))
        in_specs.append(pl.BlockSpec((cout, tm), lambda i: (0, i)))

    kernel = functools.partial(
        _fused_matmul_t_kernel, relu=relu, has_res=residual is not None)

    flops = 2 * m_pad * k * cout
    bytes_accessed = (k * m_pad * 2 + cout * k * 2 + cout * m_pad * 4
                      + (cout * m_pad * 4 if residual is not None else 0))

    out = pl.pallas_call(
        kernel,
        out_shape=jax.ShapeDtypeStruct((cout, m_pad), jnp.float32),
        grid=(m_pad // tm,),
        in_specs=in_specs,
        out_specs=pl.BlockSpec((cout, tm), lambda i: (0, i)),
        compiler_params=pltpu.CompilerParams(
            dimension_semantics=("parallel",),
            vmem_limit_bytes=_VMEM_LIMIT),
        cost_estimate=pl.CostEstimate(
            flops=flops, transcendentals=0, bytes_accessed=bytes_accessed),
    )(*args)
    if m_pad != m:
        out = out[:, :m]
    return out


def _softargmin_kernel(c_ref, wup_ref, d_ref, o_ref):
    """Fused D-axis linear upsample + softmax(-cost) + disparity expectation.

    c_ref:   (dq, tm)  low-D-resolution cost (pixels on lanes -> lane dense)
    wup_ref: (D, dq)   static 1D linear-upsample weights (D = full disparity)
    d_ref:   (D, 1)    disparity values
    o_ref:   (1, tm)   expected disparity (lane-dense store)
    """
    c = c_ref[...]
    wup = wup_ref[...]
    dq = c.shape[0]
    # D-axis x4 upsample as a sum of dq rank-1 broadcasts (VPU only).
    up = wup[:, 0:1] * c[0:1, :]
    for i in range(1, dq):
        up = up + wup[:, i:i + 1] * c[i:i + 1, :]
    neg = -up                                   # (D, tm)
    mx = jnp.max(neg, axis=0, keepdims=True)
    e = jnp.exp(neg - mx)
    s = jnp.sum(e, axis=0, keepdims=True)
    p = e / s                                   # softmax(-cost) over disparity
    o_ref[...] = jnp.sum(p * d_ref[...], axis=0, keepdims=True)


def softargmin_fused(cost_lo_t, w_up_t, disp_vals):
    """cost_lo_t: (dq, M) f32; w_up_t: (D, dq); disp_vals: (D, 1) -> (1, M)."""
    dq, m = cost_lo_t.shape
    d_full = w_up_t.shape[0]
    tm = _pick_tile_m(m)
    m_pad = _round_up(m, tm)
    if m_pad != m:
        cost_lo_t = jnp.pad(cost_lo_t, ((0, 0), (0, m_pad - m)))
    out = pl.pallas_call(
        _softargmin_kernel,
        out_shape=jax.ShapeDtypeStruct((1, m_pad), jnp.float32),
        grid=(m_pad // tm,),
        in_specs=[pl.BlockSpec((dq, tm), lambda i: (0, i)),
                  pl.BlockSpec((d_full, dq), lambda i: (0, 0)),
                  pl.BlockSpec((d_full, 1), lambda i: (0, 0))],
        out_specs=pl.BlockSpec((1, tm), lambda i: (0, i)),
        compiler_params=pltpu.CompilerParams(
            dimension_semantics=("parallel",),
            vmem_limit_bytes=_VMEM_LIMIT),
        cost_estimate=pl.CostEstimate(
            flops=6 * d_full * m_pad,
            transcendentals=d_full * m_pad,
            bytes_accessed=dq * m_pad * 4 + m_pad * 4),
    )(cost_lo_t, w_up_t, disp_vals)
    if m_pad != m:
        out = out[:, :m]
    return out


# ----------------------------------------------------------------------------
# Convolutions as (transposed) im2col + fused Pallas GEMM.
# Activations are kept in channel-first-flattened layout: (C, B, spatial...).
# ----------------------------------------------------------------------------
def conv2d_bn_t(x, w, *, stride=1, pad=1, relu=True, residual=None,
                bias=None, fold_bn=True):
    """x: (C, B, H, W) f32; w: (Cout, Cin, kh, kw); returns (Cout, B, Ho, Wo)."""
    c, b_, h, w_dim = x.shape
    cout, cin, kh, kw = w.shape
    assert cin == c
    xp = jnp.pad(x, ((0, 0), (0, 0), (pad, pad), (pad, pad)))
    xp = xp.astype(jnp.bfloat16)                # halve im2col HBM traffic
    ho = (h + 2 * pad - kh) // stride + 1
    wo = (w_dim + 2 * pad - kw) // stride + 1
    taps = []
    for i in range(kh):
        for j in range(kw):
            taps.append(xp[:, :,
                           i:i + (ho - 1) * stride + 1:stride,
                           j:j + (wo - 1) * stride + 1:stride])
    cols_t = jnp.stack(taps, axis=1)            # (C, kh*kw, B, Ho, Wo)
    cols_t = cols_t.reshape(c * kh * kw, b_ * ho * wo)
    w_mat = w.reshape(cout, c * kh * kw)
    if fold_bn:
        w_mat = w_mat * BN_SCALE
    bvec = bias if bias is not None else jnp.zeros((cout,), jnp.float32)
    res = None
    if residual is not None:
        res = residual.reshape(cout, b_ * ho * wo)
    out = fused_matmul_t(cols_t, w_mat, bvec, residual=res, relu=relu)
    return out.reshape(cout, b_, ho, wo)


def conv3d_bn_t(x, w, *, stride=1, pad=1, relu=True, residual=None,
                bias=None, fold_bn=True):
    """x: (C, B, D, H, W) f32; w: (Cout, Cin, kd, kh, kw)."""
    c, b_, d, h, w_dim = x.shape
    cout, cin, kd, kh, kw = w.shape
    assert cin == c
    xp = jnp.pad(x, ((0, 0), (0, 0), (pad, pad), (pad, pad), (pad, pad)))
    xp = xp.astype(jnp.bfloat16)
    do = (d + 2 * pad - kd) // stride + 1
    ho = (h + 2 * pad - kh) // stride + 1
    wo = (w_dim + 2 * pad - kw) // stride + 1
    taps = []
    for a in range(kd):
        for i in range(kh):
            for j in range(kw):
                taps.append(xp[:, :,
                               a:a + (do - 1) * stride + 1:stride,
                               i:i + (ho - 1) * stride + 1:stride,
                               j:j + (wo - 1) * stride + 1:stride])
    cols_t = jnp.stack(taps, axis=1)            # (C, k^3, B, Do, Ho, Wo)
    cols_t = cols_t.reshape(c * kd * kh * kw, b_ * do * ho * wo)
    w_mat = w.reshape(cout, c * kd * kh * kw)
    if fold_bn:
        w_mat = w_mat * BN_SCALE
    bvec = bias if bias is not None else jnp.zeros((cout,), jnp.float32)
    res = None
    if residual is not None:
        res = residual.reshape(cout, b_ * do * ho * wo)
    out = fused_matmul_t(cols_t, w_mat, bvec, residual=res, relu=relu)
    return out.reshape(cout, b_, do, ho, wo)


# ----------------------------------------------------------------------------
# Network pieces
# ----------------------------------------------------------------------------
def basic_block_2d(x, p, stride):
    out = conv2d_bn_t(x, p["conv1"], stride=stride, pad=1, relu=True)
    skip = x
    if "down" in p:
        skip = conv2d_bn_t(x, p["down"], stride=stride, pad=0, relu=False)
    # conv2 + BN + residual add + ReLU fused in one Pallas GEMM
    return conv2d_bn_t(out, p["conv2"], stride=1, pad=1, relu=True,
                       residual=skip)


def resnet2d_forward(p, x_nchw):
    x = x_nchw.transpose(1, 0, 2, 3)                 # NCHW -> (C, B, H, W)
    x = conv2d_bn_t(x, p["conv0"], stride=2, pad=1, relu=True)  # (8, B, H/2, W/2)
    x = basic_block_2d(x, p["block1"], stride=2)     # (16, B, H/4, W/4)
    x = basic_block_2d(x, p["block2"], stride=1)     # (16, B, H/4, W/4)
    x = basic_block_2d(x, p["block3"], stride=1)     # (32, B, H/4, W/4)
    return x


def cost_volume(lf, rf, dq):
    """PSMNet-style concat cost volume at 1/4 res: (2C, B, dq, H, W)."""
    c, b_, h, w = lf.shape
    slices = []
    for d in range(dq):
        if d == 0:
            l, r = lf, rf
        else:
            z = jnp.zeros((c, b_, h, d), lf.dtype)
            l = jnp.concatenate([z, lf[:, :, :, d:]], axis=3)
            r = jnp.concatenate([z, rf[:, :, :, :w - d]], axis=3)
        slices.append(jnp.concatenate([l, r], axis=0))
    return jnp.stack(slices, axis=2)


def basic_block_3d(x, p):
    out = conv3d_bn_t(x, p["conv1"], relu=True)
    return conv3d_bn_t(out, p["conv2"], relu=True, residual=x)


def resnet3d_forward(p, x):
    x = conv3d_bn_t(x, p["conv0"], relu=True)                   # 64 -> 16
    x = basic_block_3d(x, p["block"])                           # 16 -> 16
    x = conv3d_bn_t(x, p["conv1"], relu=True)                   # 16 -> 16
    x = conv3d_bn_t(x, p["conv_out"], relu=False,               # 16 -> 1 (cost)
                    bias=p["conv_out_b"], fold_bn=False)
    return x


def disparity_regressor(cost_t, max_disp):
    """cost_t: (1, B, dq, hq, wq) -> (B, 4*hq, 4*wq) expected disparity."""
    _, b_, dq, hq, wq = cost_t.shape
    h, w = hq * 4, wq * 4
    c = cost_t[0]                                               # (B, dq, hq, wq)
    # Spatial x4 bilinear (half-pixel, matches F.interpolate align_corners=False)
    # kept in JAX glue on the *low-D* volume; the D-axis x4 linear interp is
    # fused into the Pallas soft-argmin kernel (trilinear resize is separable,
    # so the composition is identical to a full trilinear upsample).
    c_sp = jax.image.resize(c, (b_, dq, h, w), method="linear")
    # Exact 1D resize weight matrix: columns of resize(eye) are the weights.
    w_d = jax.image.resize(jnp.eye(dq, dtype=jnp.float32), (dq, max_disp),
                           method="linear")                     # (dq, D)
    cost_lo_t = c_sp.transpose(1, 0, 2, 3).reshape(dq, b_ * h * w)
    disp_vals = jnp.arange(max_disp, dtype=jnp.float32).reshape(max_disp, 1)
    out = softargmin_fused(cost_lo_t, w_d.T, disp_vals)         # (1, B*H*W)
    return out.reshape(b_, h, w)


def sdenet_forward(params, left, right):
    left_ftrs = resnet2d_forward(params["resnet2d"], left)
    right_ftrs = resnet2d_forward(params["resnet2d"], right)    # siamese (shared)
    cv = cost_volume(left_ftrs, right_ftrs, MAX_DISP // 4)
    cost_features = resnet3d_forward(params["resnet3d"], cv)
    return disparity_regressor(cost_features, MAX_DISP)


# ----------------------------------------------------------------------------
# Deterministic parameter init
#   resnet2d_inplanes = [8, 16, 16]  -> ResNet2D planes [8, 16, 16, 32]
#   resnet3d_inplanes = [16, 16, 16] -> ResNet3D planes [16, 16, 16, 1]
# ----------------------------------------------------------------------------
def init_params(key):
    keys = iter(jax.random.split(key, 16))

    def conv(shape):
        fan_in = math.prod(shape[1:])
        return jax.random.normal(next(keys), shape, jnp.float32) * (
            0.5 / math.sqrt(fan_in))

    p2d = {
        "conv0": conv((8, 3, 3, 3)),
        "block1": {"conv1": conv((16, 8, 3, 3)),
                   "conv2": conv((16, 16, 3, 3)),
                   "down": conv((16, 8, 1, 1))},
        "block2": {"conv1": conv((16, 16, 3, 3)),
                   "conv2": conv((16, 16, 3, 3))},
        "block3": {"conv1": conv((32, 16, 3, 3)),
                   "conv2": conv((32, 32, 3, 3)),
                   "down": conv((32, 16, 1, 1))},
    }
    p3d = {
        "conv0": conv((16, 64, 3, 3, 3)),
        "block": {"conv1": conv((16, 16, 3, 3, 3)),
                  "conv2": conv((16, 16, 3, 3, 3))},
        "conv1": conv((16, 16, 3, 3, 3)),
        "conv_out": conv((1, 16, 3, 3, 3)),
        "conv_out_b": jnp.zeros((1,), jnp.float32),
    }
    return {"resnet2d": p2d, "resnet3d": p3d}


if __name__ == "__main__":
    key = jax.random.PRNGKey(0)
    pkey, lkey, rkey = jax.random.split(key, 3)
    params = init_params(pkey)
    left = jax.random.normal(lkey, (2, 3, 16, 16), jnp.float32)
    right = jax.random.normal(rkey, (2, 3, 16, 16), jnp.float32)

    disparity = jax.jit(sdenet_forward)(params, left, right)
    disparity = jax.block_until_ready(disparity)

    assert disparity.shape == (2, 16, 16), disparity.shape
    assert bool(jnp.all(jnp.isfinite(disparity)))
    print("KERNEL_OK")
</pallas_src>

<mosaic_0001>
module attributes {stable_mosaic.version = 11 : i64} {
  func.func @_fused_matmul_t_kernel(%arg0: i32, %arg1: memref<27x128xbf16, #tpu.memory_space<vmem>>, %arg2: memref<8x27xbf16, #tpu.memory_space<vmem>>, %arg3: memref<8x1xf32, #tpu.memory_space<vmem>>, %arg4: memref<8x128xf32, #tpu.memory_space<vmem>>) attributes {dimension_semantics = [#tpu.dimension_semantics<parallel>], iteration_bounds = array<i64: 1>, scalar_prefetch = 0 : i64, scratch_operands = 0 : i64, tpu.core_type = #tpu.core_type<tc>, window_params = [{transform_indices = @transform_0, window_bounds = array<i64: 27, 128>}, {pipeline_mode = #tpu.pipeline_mode<synchronous>, transform_indices = @transform_1, window_bounds = array<i64: 8, 27>}, {pipeline_mode = #tpu.pipeline_mode<synchronous>, transform_indices = @transform_2, window_bounds = array<i64: 8, 1>}, {transform_indices = @transform_3, window_bounds = array<i64: 8, 128>}]} {
    %c0 = arith.constant 0 : index
    %c0_0 = arith.constant 0 : index
    %0 = vector.load %arg2[%c0, %c0_0] : memref<8x27xbf16, #tpu.memory_space<vmem>>, vector<8x27xbf16>
    %c0_1 = arith.constant 0 : index
    %c0_2 = arith.constant 0 : index
    %1 = vector.load %arg1[%c0_1, %c0_2] : memref<27x128xbf16, #tpu.memory_space<vmem>>, vector<27x128xbf16>
    %cst = arith.constant dense<0.000000e+00> : vector<8x128xf32>
    %2 = tpu.matmul %0, %1, %cst {dimension_numbers = #tpu.dot_dimension_numbers<[1], [0], [0], [1], [0, 0, 1, 1], [], []>} : vector<8x27xbf16>, vector<27x128xbf16>, vector<8x128xf32> -> vector<8x128xf32>
    %c0_3 = arith.constant 0 : index
    %c0_4 = arith.constant 0 : index
    %3 = vector.load %arg3[%c0_3, %c0_4] : memref<8x1xf32, #tpu.memory_space<vmem>>, vector<8x1xf32>
    %4 = vector.broadcast %3 : vector<8x1xf32> to vector<8x128xf32>
    %5 = arith.addf %2, %4 : vector<8x128xf32>
    %cst_5 = arith.constant 0.000000e+00 : f32
    %6 = vector.broadcast %cst_5 : f32 to vector<8x128xf32>
    %7 = arith.maximumf %5, %6 : vector<8x128xf32>
    %c0_6 = arith.constant 0 : index
    %c0_7 = arith.constant 0 : index
    %8 = vector.load %arg4[%c0_6, %c0_7] : memref<8x128xf32, #tpu.memory_space<vmem>>, vector<8x128xf32>
    tpu.vector_store %arg4[%c0_6, %c0_7], %7 {strides = array<i32>} : memref<8x128xf32, #tpu.memory_space<vmem>>, vector<8x128xf32>,
    return
  }
  func.func @transform_0(%arg0: i32) -> (i32, i32) {
    %c0_i32 = arith.constant 0 : i32
    %c0_i32_0 = arith.constant 0 : i32
    return %c0_i32, %arg0 : i32, i32
  }
  func.func @transform_1(%arg0: i32) -> (i32, i32) {
    %c0_i32 = arith.constant 0 : i32
    %c0_i32_0 = arith.constant 0 : i32
    %c0_i32_1 = arith.constant 0 : i32
    return %c0_i32, %c0_i32_0 : i32, i32
  }
  func.func @transform_2(%arg0: i32) -> (i32, i32) {
    %c0_i32 = arith.constant 0 : i32
    %c0_i32_0 = arith.constant 0 : i32
    %c0_i32_1 = arith.constant 0 : i32
    return %c0_i32, %c0_i32_0 : i32, i32
  }
  func.func @transform_3(%arg0: i32) -> (i32, i32) {
    %c0_i32 = arith.constant 0 : i32
    %c0_i32_0 = arith.constant 0 : i32
    return %c0_i32, %arg0 : i32, i32
  }
}

module attributes {stable_mosaic.version = 11 : i64} {
  func.func @_fused_matmul_t_kernel(%arg0: i32, %arg1: memref<72x128xbf16, #tpu.memory_space<vmem>>, %arg2: memref<16x72xbf16, #tpu.memory_space<vmem>>, %arg3: memref<16x1xf32, #tpu.memory_space<vmem>>, %arg4: memref<16x128xf32, #tpu.memory_space<vmem>>) attributes {dimension_semantics = [#tpu.dimension_semantics<parallel>], iteration_bounds = array<i64: 1>, scalar_prefetch = 0 : i64, scratch_operands = 0 : i64, tpu.core_type = #tpu.core_type<tc>, window_params = [{transform_indices = @transform_0, window_bounds = array<i64: 72, 128>}, {pipeline_mode = #tpu.pipeline_mode<synchronous>, transform_indices = @transform_1, window_bounds = array<i64: 16, 72>}, {pipeline_mode = #tpu.pipeline_mode<synchronous>, transform_indices = @transform_2, window_bounds = array<i64: 16, 1>}, {transform_indices = @transform_3, window_bounds = array<i64: 16, 128>}]} {
    %c0 = arith.constant 0 : index
    %c0_0 = arith.constant 0 : index
    %0 = vector.load %arg2[%c0, %c0_0] : memref<16x72xbf16, #tpu.memory_space<vmem>>, vector<16x72xbf16>
    %c0_1 = arith.constant 0 : index
    %c0_2 = arith.constant 0 : index
    %1 = vector.load %arg1[%c0_1, %c0_2] : memref<72x128xbf16, #tpu.memory_space<vmem>>, vector<72x128xbf16>
    %cst = arith.constant dense<0.000000e+00> : vector<16x128xf32>
    %2 = tpu.matmul %0, %1, %cst {dimension_numbers = #tpu.dot_dimension_numbers<[1], [0], [0], [1], [0, 0, 1, 1], [], []>} : vector<16x72xbf16>, vector<72x128xbf16>, vector<16x128xf32> -> vector<16x128xf32>
    %c0_3 = arith.constant 0 : index
    %c0_4 = arith.constant 0 : index
    %3 = vector.load %arg3[%c0_3, %c0_4] : memref<16x1xf32, #tpu.memory_space<vmem>>, vector<16x1xf32>
    %4 = vector.broadcast %3 : vector<16x1xf32> to vector<16x128xf32>
    %5 = arith.addf %2, %4 : vector<16x128xf32>
    %cst_5 = arith.constant 0.000000e+00 : f32
    %6 = vector.broadcast %cst_5 : f32 to vector<16x128xf32>
    %7 = arith.maximumf %5, %6 : vector<16x128xf32>
    %c0_6 = arith.constant 0 : index
    %c0_7 = arith.constant 0 : index
    %8 = vector.load %arg4[%c0_6, %c0_7] : memref<16x128xf32, #tpu.memory_space<vmem>>, vector<16x128xf32>
    tpu.vector_store %arg4[%c0_6, %c0_7], %7 {strides = array<i32>} : memref<16x128xf32, #tpu.memory_space<vmem>>, vector<16x128xf32>,
    return
  }
  func.func @transform_0(%arg0: i32) -> (i32, i32) {
    %c0_i32 = arith.constant 0 : i32
    %c0_i32_0 = arith.constant 0 : i32
    return %c0_i32, %arg0 : i32, i32
  }
  func.func @transform_1(%arg0: i32) -> (i32, i32) {
    %c0_i32 = arith.constant 0 : i32
    %c0_i32_0 = arith.constant 0 : i32
    %c0_i32_1 = arith.constant 0 : i32
    return %c0_i32, %c0_i32_0 : i32, i32
  }
  func.func @transform_2(%arg0: i32) -> (i32, i32) {
    %c0_i32 = arith.constant 0 : i32
    %c0_i32_0 = arith.constant 0 : i32
    %c0_i32_1 = arith.constant 0 : i32
    return %c0_i32, %c0_i32_0 : i32, i32
  }
  func.func @transform_3(%arg0: i32) -> (i32, i32) {
    %c0_i32 = arith.constant 0 : i32
    %c0_i32_0 = arith.constant 0 : i32
    return %c0_i32, %arg0 : i32, i32
  }
}

module attributes {stable_mosaic.version = 11 : i64} {
  func.func @_fused_matmul_t_kernel(%arg0: i32, %arg1: memref<8x128xbf16, #tpu.memory_space<vmem>>, %arg2: memref<16x8xbf16, #tpu.memory_space<vmem>>, %arg3: memref<16x1xf32, #tpu.memory_space<vmem>>, %arg4: memref<16x128xf32, #tpu.memory_space<vmem>>) attributes {dimension_semantics = [#tpu.dimension_semantics<parallel>], iteration_bounds = array<i64: 1>, scalar_prefetch = 0 : i64, scratch_operands = 0 : i64, tpu.core_type = #tpu.core_type<tc>, window_params = [{transform_indices = @transform_0, window_bounds = array<i64: 8, 128>}, {pipeline_mode = #tpu.pipeline_mode<synchronous>, transform_indices = @transform_1, window_bounds = array<i64: 16, 8>}, {pipeline_mode = #tpu.pipeline_mode<synchronous>, transform_indices = @transform_2, window_bounds = array<i64: 16, 1>}, {transform_indices = @transform_3, window_bounds = array<i64: 16, 128>}]} {
    %c0 = arith.constant 0 : index
    %c0_0 = arith.constant 0 : index
    %0 = vector.load %arg2[%c0, %c0_0] : memref<16x8xbf16, #tpu.memory_space<vmem>>, vector<16x8xbf16>
    %c0_1 = arith.constant 0 : index
    %c0_2 = arith.constant 0 : index
    %1 = vector.load %arg1[%c0_1, %c0_2] : memref<8x128xbf16, #tpu.memory_space<vmem>>, vector<8x128xbf16>
    %cst = arith.constant dense<0.000000e+00> : vector<16x128xf32>
    %2 = tpu.matmul %0, %1, %cst {dimension_numbers = #tpu.dot_dimension_numbers<[1], [0], [0], [1], [0, 0, 1, 1], [], []>} : vector<16x8xbf16>, vector<8x128xbf16>, vector<16x128xf32> -> vector<16x128xf32>
    %c0_3 = arith.constant 0 : index
    %c0_4 = arith.constant 0 : index
    %3 = vector.load %arg3[%c0_3, %c0_4] : memref<16x1xf32, #tpu.memory_space<vmem>>, vector<16x1xf32>
    %4 = vector.broadcast %3 : vector<16x1xf32> to vector<16x128xf32>
    %5 = arith.addf %2, %4 : vector<16x128xf32>
    %c0_5 = arith.constant 0 : index
    %c0_6 = arith.constant 0 : index
    %6 = vector.load %arg4[%c0_5, %c0_6] : memref<16x128xf32, #tpu.memory_space<vmem>>, vector<16x128xf32>
    tpu.vector_store %arg4[%c0_5, %c0_6], %5 {strides = array<i32>} : memref<16x128xf32, #tpu.memory_space<vmem>>, vector<16x128xf32>,
    return
  }
  func.func @transform_0(%arg0: i32) -> (i32, i32) {
    %c0_i32 = arith.constant 0 : i32
    %c0_i32_0 = arith.constant 0 : i32
    return %c0_i32, %arg0 : i32, i32
  }
  func.func @transform_1(%arg0: i32) -> (i32, i32) {
    %c0_i32 = arith.constant 0 : i32
    %c0_i32_0 = arith.constant 0 : i32
    %c0_i32_1 = arith.constant 0 : i32
    return %c0_i32, %c0_i32_0 : i32, i32
  }
  func.func @transform_2(%arg0: i32) -> (i32, i32) {
    %c0_i32 = arith.constant 0 : i32
    %c0_i32_0 = arith.constant 0 : i32
    %c0_i32_1 = arith.constant 0 : i32
    return %c0_i32, %c0_i32_0 : i32, i32
  }
  func.func @transform_3(%arg0: i32) -> (i32, i32) {
    %c0_i32 = arith.constant 0 : i32
    %c0_i32_0 = arith.constant 0 : i32
    return %c0_i32, %arg0 : i32, i32
  }
}

module attributes {stable_mosaic.version = 11 : i64} {
  func.func @_fused_matmul_t_kernel(%arg0: i32, %arg1: memref<144x128xbf16, #tpu.memory_space<vmem>>, %arg2: memref<16x144xbf16, #tpu.memory_space<vmem>>, %arg3: memref<16x1xf32, #tpu.memory_space<vmem>>, %arg4: memref<16x128xf32, #tpu.memory_space<vmem>>) attributes {dimension_semantics = [#tpu.dimension_semantics<parallel>], iteration_bounds = array<i64: 1>, scalar_prefetch = 0 : i64, scratch_operands = 0 : i64, tpu.core_type = #tpu.core_type<tc>, window_params = [{transform_indices = @transform_0, window_bounds = array<i64: 144, 128>}, {pipeline_mode = #tpu.pipeline_mode<synchronous>, transform_indices = @transform_1, window_bounds = array<i64: 16, 144>}, {pipeline_mode = #tpu.pipeline_mode<synchronous>, transform_indices = @transform_2, window_bounds = array<i64: 16, 1>}, {transform_indices = @transform_3, window_bounds = array<i64: 16, 128>}]} {
    %c0 = arith.constant 0 : index
    %c0_0 = arith.constant 0 : index
    %0 = vector.load %arg2[%c0, %c0_0] : memref<16x144xbf16, #tpu.memory_space<vmem>>, vector<16x144xbf16>
    %c0_1 = arith.constant 0 : index
    %c0_2 = arith.constant 0 : index
    %1 = vector.load %arg1[%c0_1, %c0_2] : memref<144x128xbf16, #tpu.memory_space<vmem>>, vector<144x128xbf16>
    %cst = arith.constant dense<0.000000e+00> : vector<16x128xf32>
    %2 = tpu.matmul %0, %1, %cst {dimension_numbers = #tpu.dot_dimension_numbers<[1], [0], [0], [1], [0, 0, 1, 1], [], []>} : vector<16x144xbf16>, vector<144x128xbf16>, vector<16x128xf32> -> vector<16x128xf32>
    %c0_3 = arith.constant 0 : index
    %c0_4 = arith.constant 0 : index
    %3 = vector.load %arg3[%c0_3, %c0_4] : memref<16x1xf32, #tpu.memory_space<vmem>>, vector<16x1xf32>
    %4 = vector.broadcast %3 : vector<16x1xf32> to vector<16x128xf32>
    %5 = arith.addf %2, %4 : vector<16x128xf32>
    %cst_5 = arith.constant 0.000000e+00 : f32
    %6 = vector.broadcast %cst_5 : f32 to vector<16x128xf32>
    %7 = arith.maximumf %5, %6 : vector<16x128xf32>
    %c0_6 = arith.constant 0 : index
    %c0_7 = arith.constant 0 : index
    %8 = vector.load %arg4[%c0_6, %c0_7] : memref<16x128xf32, #tpu.memory_space<vmem>>, vector<16x128xf32>
    tpu.vector_store %arg4[%c0_6, %c0_7], %7 {strides = array<i32>} : memref<16x128xf32, #tpu.memory_space<vmem>>, vector<16x128xf32>,
    return
  }
  func.func @transform_0(%arg0: i32) -> (i32, i32) {
    %c0_i32 = arith.constant 0 : i32
    %c0_i32_0 = arith.constant 0 : i32
    return %c0_i32, %arg0 : i32, i32
  }
  func.func @transform_1(%arg0: i32) -> (i32, i32) {
    %c0_i32 = arith.constant 0 : i32
    %c0_i32_0 = arith.constant 0 : i32
    %c0_i32_1 = arith.constant 0 : i32
    return %c0_i32, %c0_i32_0 : i32, i32
  }
  func.func @transform_2(%arg0: i32) -> (i32, i32) {
    %c0_i32 = arith.constant 0 : i32
    %c0_i32_0 = arith.constant 0 : i32
    %c0_i32_1 = arith.constant 0 : i32
    return %c0_i32, %c0_i32_0 : i32, i32
  }
  func.func @transform_3(%arg0: i32) -> (i32, i32) {
    %c0_i32 = arith.constant 0 : i32
    %c0_i32_0 = arith.constant 0 : i32
    return %c0_i32, %arg0 : i32, i32
  }
}

module attributes {stable_mosaic.version = 11 : i64} {
  func.func @_fused_matmul_t_kernel(%arg0: i32, %arg1: memref<144x128xbf16, #tpu.memory_space<vmem>>, %arg2: memref<16x144xbf16, #tpu.memory_space<vmem>>, %arg3: memref<16x1xf32, #tpu.memory_space<vmem>>, %arg4: memref<16x128xf32, #tpu.memory_space<vmem>>, %arg5: memref<16x128xf32, #tpu.memory_space<vmem>>) attributes {dimension_semantics = [#tpu.dimension_semantics<parallel>], iteration_bounds = array<i64: 1>, scalar_prefetch = 0 : i64, scratch_operands = 0 : i64, tpu.core_type = #tpu.core_type<tc>, window_params = [{transform_indices = @transform_0, window_bounds = array<i64: 144, 128>}, {pipeline_mode = #tpu.pipeline_mode<synchronous>, transform_indices = @transform_1, window_bounds = array<i64: 16, 144>}, {pipeline_mode = #tpu.pipeline_mode<synchronous>, transform_indices = @transform_2, window_bounds = array<i64: 16, 1>}, {transform_indices = @transform_3, window_bounds = array<i64: 16, 128>}, {transform_indices = @transform_4, window_bounds = array<i64: 16, 128>}]} {
    %c0 = arith.constant 0 : index
    %c0_0 = arith.constant 0 : index
    %0 = vector.load %arg2[%c0, %c0_0] : memref<16x144xbf16, #tpu.memory_space<vmem>>, vector<16x144xbf16>
    %c0_1 = arith.constant 0 : index
    %c0_2 = arith.constant 0 : index
    %1 = vector.load %arg1[%c0_1, %c0_2] : memref<144x128xbf16, #tpu.memory_space<vmem>>, vector<144x128xbf16>
    %cst = arith.constant dense<0.000000e+00> : vector<16x128xf32>
    %2 = tpu.matmul %0, %1, %cst {dimension_numbers = #tpu.dot_dimension_numbers<[1], [0], [0], [1], [0, 0, 1, 1], [], []>} : vector<16x144xbf16>, vector<144x128xbf16>, vector<16x128xf32> -> vector<16x128xf32>
    %c0_3 = arith.constant 0 : index
    %c0_4 = arith.constant 0 : index
    %3 = vector.load %arg3[%c0_3, %c0_4] : memref<16x1xf32, #tpu.memory_space<vmem>>, vector<16x1xf32>
    %4 = vector.broadcast %3 : vector<16x1xf32> to vector<16x128xf32>
    %5 = arith.addf %2, %4 : vector<16x128xf32>
    %c0_5 = arith.constant 0 : index
    %c0_6 = arith.constant 0 : index
    %6 = vector.load %arg4[%c0_5, %c0_6] : memref<16x128xf32, #tpu.memory_space<vmem>>, vector<16x128xf32>
    %7 = arith.addf %5, %6 : vector<16x128xf32>
    %cst_7 = arith.constant 0.000000e+00 : f32
    %8 = vector.broadcast %cst_7 : f32 to vector<16x128xf32>
    %9 = arith.maximumf %7, %8 : vector<16x128xf32>
    %c0_8 = arith.constant 0 : index
    %c0_9 = arith.constant 0 : index
    %10 = vector.load %arg5[%c0_8, %c0_9] : memref<16x128xf32, #tpu.memory_space<vmem>>, vector<16x128xf32>
    tpu.vector_store %arg5[%c0_8, %c0_9], %9 {strides = array<i32>} : memref<16x128xf32, #tpu.memory_space<vmem>>, vector<16x128xf32>,
    return
  }
  func.func @transform_0(%arg0: i32) -> (i32, i32) {
    %c0_i32 = arith.constant 0 : i32
    %c0_i32_0 = arith.constant 0 : i32
    return %c0_i32, %arg0 : i32, i32
  }
  func.func @transform_1(%arg0: i32) -> (i32, i32) {
    %c0_i32 = arith.constant 0 : i32
    %c0_i32_0 = arith.constant 0 : i32
    %c0_i32_1 = arith.constant 0 : i32
    return %c0_i32, %c0_i32_0 : i32, i32
  }
  func.func @transform_2(%arg0: i32) -> (i32, i32) {
    %c0_i32 = arith.constant 0 : i32
    %c0_i32_0 = arith.constant 0 : i32
    %c0_i32_1 = arith.constant 0 : i32
    return %c0_i32, %c0_i32_0 : i32, i32
  }
  func.func @transform_3(%arg0: i32) -> (i32, i32) {
    %c0_i32 = arith.constant 0 : i32
    %c0_i32_0 = arith.constant 0 : i32
    return %c0_i32, %arg0 : i32, i32
  }
  func.func @transform_4(%arg0: i32) -> (i32, i32) {
    %c0_i32 = arith.constant 0 : i32
    %c0_i32_0 = arith.constant 0 : i32
    return %c0_i32, %arg0 : i32, i32
  }
}

module attributes {stable_mosaic.version = 11 : i64} {
  func.func @_fused_matmul_t_kernel(%arg0: i32, %arg1: memref<144x128xbf16, #tpu.memory_space<vmem>>, %arg2: memref<32x144xbf16, #tpu.memory_space<vmem>>, %arg3: memref<32x1xf32, #tpu.memory_space<vmem>>, %arg4: memref<32x128xf32, #tpu.memory_space<vmem>>) attributes {dimension_semantics = [#tpu.dimension_semantics<parallel>], iteration_bounds = array<i64: 1>, scalar_prefetch = 0 : i64, scratch_operands = 0 : i64, tpu.core_type = #tpu.core_type<tc>, window_params = [{transform_indices = @transform_0, window_bounds = array<i64: 144, 128>}, {pipeline_mode = #tpu.pipeline_mode<synchronous>, transform_indices = @transform_1, window_bounds = array<i64: 32, 144>}, {pipeline_mode = #tpu.pipeline_mode<synchronous>, transform_indices = @transform_2, window_bounds = array<i64: 32, 1>}, {transform_indices = @transform_3, window_bounds = array<i64: 32, 128>}]} {
    %c0 = arith.constant 0 : index
    %c0_0 = arith.constant 0 : index
    %0 = vector.load %arg2[%c0, %c0_0] : memref<32x144xbf16, #tpu.memory_space<vmem>>, vector<32x144xbf16>
    %c0_1 = arith.constant 0 : index
    %c0_2 = arith.constant 0 : index
    %1 = vector.load %arg1[%c0_1, %c0_2] : memref<144x128xbf16, #tpu.memory_space<vmem>>, vector<144x128xbf16>
    %cst = arith.constant dense<0.000000e+00> : vector<32x128xf32>
    %2 = tpu.matmul %0, %1, %cst {dimension_numbers = #tpu.dot_dimension_numbers<[1], [0], [0], [1], [0, 0, 1, 1], [], []>} : vector<32x144xbf16>, vector<144x128xbf16>, vector<32x128xf32> -> vector<32x128xf32>
    %c0_3 = arith.constant 0 : index
    %c0_4 = arith.constant 0 : index
    %3 = vector.load %arg3[%c0_3, %c0_4] : memref<32x1xf32, #tpu.memory_space<vmem>>, vector<32x1xf32>
    %4 = vector.broadcast %3 : vector<32x1xf32> to vector<32x128xf32>
    %5 = arith.addf %2, %4 : vector<32x128xf32>
    %cst_5 = arith.constant 0.000000e+00 : f32
    %6 = vector.broadcast %cst_5 : f32 to vector<32x128xf32>
    %7 = arith.maximumf %5, %6 : vector<32x128xf32>
    %c0_6 = arith.constant 0 : index
    %c0_7 = arith.constant 0 : index
    %8 = vector.load %arg4[%c0_6, %c0_7] : memref<32x128xf32, #tpu.memory_space<vmem>>, vector<32x128xf32>
    tpu.vector_store %arg4[%c0_6, %c0_7], %7 {strides = array<i32>} : memref<32x128xf32, #tpu.memory_space<vmem>>, vector<32x128xf32>,
    return
  }
  func.func @transform_0(%arg0: i32) -> (i32, i32) {
    %c0_i32 = arith.constant 0 : i32
    %c0_i32_0 = arith.constant 0 : i32
    return %c0_i32, %arg0 : i32, i32
  }
  func.func @transform_1(%arg0: i32) -> (i32, i32) {
    %c0_i32 = arith.constant 0 : i32
    %c0_i32_0 = arith.constant 0 : i32
    %c0_i32_1 = arith.constant 0 : i32
    return %c0_i32, %c0_i32_0 : i32, i32
  }
  func.func @transform_2(%arg0: i32) -> (i32, i32) {
    %c0_i32 = arith.constant 0 : i32
    %c0_i32_0 = arith.constant 0 : i32
    %c0_i32_1 = arith.constant 0 : i32
    return %c0_i32, %c0_i32_0 : i32, i32
  }
  func.func @transform_3(%arg0: i32) -> (i32, i32) {
    %c0_i32 = arith.constant 0 : i32
    %c0_i32_0 = arith.constant 0 : i32
    return %c0_i32, %arg0 : i32, i32
  }
}

module attributes {stable_mosaic.version = 11 : i64} {
  func.func @_fused_matmul_t_kernel(%arg0: i32, %arg1: memref<16x128xbf16, #tpu.memory_space<vmem>>, %arg2: memref<32x16xbf16, #tpu.memory_space<vmem>>, %arg3: memref<32x1xf32, #tpu.memory_space<vmem>>, %arg4: memref<32x128xf32, #tpu.memory_space<vmem>>) attributes {dimension_semantics = [#tpu.dimension_semantics<parallel>], iteration_bounds = array<i64: 1>, scalar_prefetch = 0 : i64, scratch_operands = 0 : i64, tpu.core_type = #tpu.core_type<tc>, window_params = [{transform_indices = @transform_0, window_bounds = array<i64: 16, 128>}, {pipeline_mode = #tpu.pipeline_mode<synchronous>, transform_indices = @transform_1, window_bounds = array<i64: 32, 16>}, {pipeline_mode = #tpu.pipeline_mode<synchronous>, transform_indices = @transform_2, window_bounds = array<i64: 32, 1>}, {transform_indices = @transform_3, window_bounds = array<i64: 32, 128>}]} {
    %c0 = arith.constant 0 : index
    %c0_0 = arith.constant 0 : index
    %0 = vector.load %arg2[%c0, %c0_0] : memref<32x16xbf16, #tpu.memory_space<vmem>>, vector<32x16xbf16>
    %c0_1 = arith.constant 0 : index
    %c0_2 = arith.constant 0 : index
    %1 = vector.load %arg1[%c0_1, %c0_2] : memref<16x128xbf16, #tpu.memory_space<vmem>>, vector<16x128xbf16>
    %cst = arith.constant dense<0.000000e+00> : vector<32x128xf32>
    %2 = tpu.matmul %0, %1, %cst {dimension_numbers = #tpu.dot_dimension_numbers<[1], [0], [0], [1], [0, 0, 1, 1], [], []>} : vector<32x16xbf16>, vector<16x128xbf16>, vector<32x128xf32> -> vector<32x128xf32>
    %c0_3 = arith.constant 0 : index
    %c0_4 = arith.constant 0 : index
    %3 = vector.load %arg3[%c0_3, %c0_4] : memref<32x1xf32, #tpu.memory_space<vmem>>, vector<32x1xf32>
    %4 = vector.broadcast %3 : vector<32x1xf32> to vector<32x128xf32>
    %5 = arith.addf %2, %4 : vector<32x128xf32>
    %c0_5 = arith.constant 0 : index
    %c0_6 = arith.constant 0 : index
    %6 = vector.load %arg4[%c0_5, %c0_6] : memref<32x128xf32, #tpu.memory_space<vmem>>, vector<32x128xf32>
    tpu.vector_store %arg4[%c0_5, %c0_6], %5 {strides = array<i32>} : memref<32x128xf32, #tpu.memory_space<vmem>>, vector<32x128xf32>,
    return
  }
  func.func @transform_0(%arg0: i32) -> (i32, i32) {
    %c0_i32 = arith.constant 0 : i32
    %c0_i32_0 = arith.constant 0 : i32
    return %c0_i32, %arg0 : i32, i32
  }
  func.func @transform_1(%arg0: i32) -> (i32, i32) {
    %c0_i32 = arith.constant 0 : i32
    %c0_i32_0 = arith.constant 0 : i32
    %c0_i32_1 = arith.constant 0 : i32
    return %c0_i32, %c0_i32_0 : i32, i32
  }
  func.func @transform_2(%arg0: i32) -> (i32, i32) {
    %c0_i32 = arith.constant 0 : i32
    %c0_i32_0 = arith.constant 0 : i32
    %c0_i32_1 = arith.constant 0 : i32
    return %c0_i32, %c0_i32_0 : i32, i32
  }
  func.func @transform_3(%arg0: i32) -> (i32, i32) {
    %c0_i32 = arith.constant 0 : i32
    %c0_i32_0 = arith.constant 0 : i32
    return %c0_i32, %arg0 : i32, i32
  }
}

module attributes {stable_mosaic.version = 11 : i64} {
  func.func @_fused_matmul_t_kernel(%arg0: i32, %arg1: memref<288x128xbf16, #tpu.memory_space<vmem>>, %arg2: memref<32x288xbf16, #tpu.memory_space<vmem>>, %arg3: memref<32x1xf32, #tpu.memory_space<vmem>>, %arg4: memref<32x128xf32, #tpu.memory_space<vmem>>, %arg5: memref<32x128xf32, #tpu.memory_space<vmem>>) attributes {dimension_semantics = [#tpu.dimension_semantics<parallel>], iteration_bounds = array<i64: 1>, scalar_prefetch = 0 : i64, scratch_operands = 0 : i64, tpu.core_type = #tpu.core_type<tc>, window_params = [{transform_indices = @transform_0, window_bounds = array<i64: 288, 128>}, {pipeline_mode = #tpu.pipeline_mode<synchronous>, transform_indices = @transform_1, window_bounds = array<i64: 32, 288>}, {pipeline_mode = #tpu.pipeline_mode<synchronous>, transform_indices = @transform_2, window_bounds = array<i64: 32, 1>}, {transform_indices = @transform_3, window_bounds = array<i64: 32, 128>}, {transform_indices = @transform_4, window_bounds = array<i64: 32, 128>}]} {
    %c0 = arith.constant 0 : index
    %c0_0 = arith.constant 0 : index
    %0 = vector.load %arg2[%c0, %c0_0] : memref<32x288xbf16, #tpu.memory_space<vmem>>, vector<32x288xbf16>
    %c0_1 = arith.constant 0 : index
    %c0_2 = arith.constant 0 : index
    %1 = vector.load %arg1[%c0_1, %c0_2] : memref<288x128xbf16, #tpu.memory_space<vmem>>, vector<288x128xbf16>
    %cst = arith.constant dense<0.000000e+00> : vector<32x128xf32>
    %2 = tpu.matmul %0, %1, %cst {dimension_numbers = #tpu.dot_dimension_numbers<[1], [0], [0], [1], [0, 0, 1, 1], [], []>} : vector<32x288xbf16>, vector<288x128xbf16>, vector<32x128xf32> -> vector<32x128xf32>
    %c0_3 = arith.constant 0 : index
    %c0_4 = arith.constant 0 : index
    %3 = vector.load %arg3[%c0_3, %c0_4] : memref<32x1xf32, #tpu.memory_space<vmem>>, vector<32x1xf32>
    %4 = vector.broadcast %3 : vector<32x1xf32> to vector<32x128xf32>
    %5 = arith.addf %2, %4 : vector<32x128xf32>
    %c0_5 = arith.constant 0 : index
    %c0_6 = arith.constant 0 : index
    %6 = vector.load %arg4[%c0_5, %c0_6] : memref<32x128xf32, #tpu.memory_space<vmem>>, vector<32x128xf32>
    %7 = arith.addf %5, %6 : vector<32x128xf32>
    %cst_7 = arith.constant 0.000000e+00 : f32
    %8 = vector.broadcast %cst_7 : f32 to vector<32x128xf32>
    %9 = arith.maximumf %7, %8 : vector<32x128xf32>
    %c0_8 = arith.constant 0 : index
    %c0_9 = arith.constant 0 : index
    %10 = vector.load %arg5[%c0_8, %c0_9] : memref<32x128xf32, #tpu.memory_space<vmem>>, vector<32x128xf32>
    tpu.vector_store %arg5[%c0_8, %c0_9], %9 {strides = array<i32>} : memref<32x128xf32, #tpu.memory_space<vmem>>, vector<32x128xf32>,
    return
  }
  func.func @transform_0(%arg0: i32) -> (i32, i32) {
    %c0_i32 = arith.constant 0 : i32
    %c0_i32_0 = arith.constant 0 : i32
    return %c0_i32, %arg0 : i32, i32
  }
  func.func @transform_1(%arg0: i32) -> (i32, i32) {
    %c0_i32 = arith.constant 0 : i32
    %c0_i32_0 = arith.constant 0 : i32
    %c0_i32_1 = arith.constant 0 : i32
    return %c0_i32, %c0_i32_0 : i32, i32
  }
  func.func @transform_2(%arg0: i32) -> (i32, i32) {
    %c0_i32 = arith.constant 0 : i32
    %c0_i32_0 = arith.constant 0 : i32
    %c0_i32_1 = arith.constant 0 : i32
    return %c0_i32, %c0_i32_0 : i32, i32
  }
  func.func @transform_3(%arg0: i32) -> (i32, i32) {
    %c0_i32 = arith.constant 0 : i32
    %c0_i32_0 = arith.constant 0 : i32
    return %c0_i32, %arg0 : i32, i32
  }
  func.func @transform_4(%arg0: i32) -> (i32, i32) {
    %c0_i32 = arith.constant 0 : i32
    %c0_i32_0 = arith.constant 0 : i32
    return %c0_i32, %arg0 : i32, i32
  }
}

module attributes {stable_mosaic.version = 11 : i64} {
  func.func @_fused_matmul_t_kernel(%arg0: i32, %arg1: memref<1728x128xbf16, #tpu.memory_space<vmem>>, %arg2: memref<16x1728xbf16, #tpu.memory_space<vmem>>, %arg3: memref<16x1xf32, #tpu.memory_space<vmem>>, %arg4: memref<16x128xf32, #tpu.memory_space<vmem>>) attributes {dimension_semantics = [#tpu.dimension_semantics<parallel>], iteration_bounds = array<i64: 1>, scalar_prefetch = 0 : i64, scratch_operands = 0 : i64, tpu.core_type = #tpu.core_type<tc>, window_params = [{transform_indices = @transform_0, window_bounds = array<i64: 1728, 128>}, {pipeline_mode = #tpu.pipeline_mode<synchronous>, transform_indices = @transform_1, window_bounds = array<i64: 16, 1728>}, {pipeline_mode = #tpu.pipeline_mode<synchronous>, transform_indices = @transform_2, window_bounds = array<i64: 16, 1>}, {transform_indices = @transform_3, window_bounds = array<i64: 16, 128>}]} {
    %c0 = arith.constant 0 : index
    %c0_0 = arith.constant 0 : index
    %0 = vector.load %arg2[%c0, %c0_0] : memref<16x1728xbf16, #tpu.memory_space<vmem>>, vector<16x1728xbf16>
    %c0_1 = arith.constant 0 : index
    %c0_2 = arith.constant 0 : index
    %1 = vector.load %arg1[%c0_1, %c0_2] : memref<1728x128xbf16, #tpu.memory_space<vmem>>, vector<1728x128xbf16>
    %cst = arith.constant dense<0.000000e+00> : vector<16x128xf32>
    %2 = tpu.matmul %0, %1, %cst {dimension_numbers = #tpu.dot_dimension_numbers<[1], [0], [0], [1], [0, 0, 1, 1], [], []>} : vector<16x1728xbf16>, vector<1728x128xbf16>, vector<16x128xf32> -> vector<16x128xf32>
    %c0_3 = arith.constant 0 : index
    %c0_4 = arith.constant 0 : index
    %3 = vector.load %arg3[%c0_3, %c0_4] : memref<16x1xf32, #tpu.memory_space<vmem>>, vector<16x1xf32>
    %4 = vector.broadcast %3 : vector<16x1xf32> to vector<16x128xf32>
    %5 = arith.addf %2, %4 : vector<16x128xf32>
    %cst_5 = arith.constant 0.000000e+00 : f32
    %6 = vector.broadcast %cst_5 : f32 to vector<16x128xf32>
    %7 = arith.maximumf %5, %6 : vector<16x128xf32>
    %c0_6 = arith.constant 0 : index
    %c0_7 = arith.constant 0 : index
    %8 = vector.load %arg4[%c0_6, %c0_7] : memref<16x128xf32, #tpu.memory_space<vmem>>, vector<16x128xf32>
    tpu.vector_store %arg4[%c0_6, %c0_7], %7 {strides = array<i32>} : memref<16x128xf32, #tpu.memory_space<vmem>>, vector<16x128xf32>,
    return
  }
  func.func @transform_0(%arg0: i32) -> (i32, i32) {
    %c0_i32 = arith.constant 0 : i32
    %c0_i32_0 = arith.constant 0 : i32
    return %c0_i32, %arg0 : i32, i32
  }
  func.func @transform_1(%arg0: i32) -> (i32, i32) {
    %c0_i32 = arith.constant 0 : i32
    %c0_i32_0 = arith.constant 0 : i32
    %c0_i32_1 = arith.constant 0 : i32
    return %c0_i32, %c0_i32_0 : i32, i32
  }
  func.func @transform_2(%arg0: i32) -> (i32, i32) {
    %c0_i32 = arith.constant 0 : i32
    %c0_i32_0 = arith.constant 0 : i32
    %c0_i32_1 = arith.constant 0 : i32
    return %c0_i32, %c0_i32_0 : i32, i32
  }
  func.func @transform_3(%arg0: i32) -> (i32, i32) {
    %c0_i32 = arith.constant 0 : i32
    %c0_i32_0 = arith.constant 0 : i32
    return %c0_i32, %arg0 : i32, i32
  }
}

module attributes {stable_mosaic.version = 11 : i64} {
  func.func @_fused_matmul_t_kernel(%arg0: i32, %arg1: memref<432x128xbf16, #tpu.memory_space<vmem>>, %arg2: memref<16x432xbf16, #tpu.memory_space<vmem>>, %arg3: memref<16x1xf32, #tpu.memory_space<vmem>>, %arg4: memref<16x128xf32, #tpu.memory_space<vmem>>) attributes {dimension_semantics = [#tpu.dimension_semantics<parallel>], iteration_bounds = array<i64: 1>, scalar_prefetch = 0 : i64, scratch_operands = 0 : i64, tpu.core_type = #tpu.core_type<tc>, window_params = [{transform_indices = @transform_0, window_bounds = array<i64: 432, 128>}, {pipeline_mode = #tpu.pipeline_mode<synchronous>, transform_indices = @transform_1, window_bounds = array<i64: 16, 432>}, {pipeline_mode = #tpu.pipeline_mode<synchronous>, transform_indices = @transform_2, window_bounds = array<i64: 16, 1>}, {transform_indices = @transform_3, window_bounds = array<i64: 16, 128>}]} {
    %c0 = arith.constant 0 : index
    %c0_0 = arith.constant 0 : index
    %0 = vector.load %arg2[%c0, %c0_0] : memref<16x432xbf16, #tpu.memory_space<vmem>>, vector<16x432xbf16>
    %c0_1 = arith.constant 0 : index
    %c0_2 = arith.constant 0 : index
    %1 = vector.load %arg1[%c0_1, %c0_2] : memref<432x128xbf16, #tpu.memory_space<vmem>>, vector<432x128xbf16>
    %cst = arith.constant dense<0.000000e+00> : vector<16x128xf32>
    %2 = tpu.matmul %0, %1, %cst {dimension_numbers = #tpu.dot_dimension_numbers<[1], [0], [0], [1], [0, 0, 1, 1], [], []>} : vector<16x432xbf16>, vector<432x128xbf16>, vector<16x128xf32> -> vector<16x128xf32>
    %c0_3 = arith.constant 0 : index
    %c0_4 = arith.constant 0 : index
    %3 = vector.load %arg3[%c0_3, %c0_4] : memref<16x1xf32, #tpu.memory_space<vmem>>, vector<16x1xf32>
    %4 = vector.broadcast %3 : vector<16x1xf32> to vector<16x128xf32>
    %5 = arith.addf %2, %4 : vector<16x128xf32>
    %cst_5 = arith.constant 0.000000e+00 : f32
    %6 = vector.broadcast %cst_5 : f32 to vector<16x128xf32>
    %7 = arith.maximumf %5, %6 : vector<16x128xf32>
    %c0_6 = arith.constant 0 : index
    %c0_7 = arith.constant 0 : index
    %8 = vector.load %arg4[%c0_6, %c0_7] : memref<16x128xf32, #tpu.memory_space<vmem>>, vector<16x128xf32>
    tpu.vector_store %arg4[%c0_6, %c0_7], %7 {strides = array<i32>} : memref<16x128xf32, #tpu.memory_space<vmem>>, vector<16x128xf32>,
    return
  }
  func.func @transform_0(%arg0: i32) -> (i32, i32) {
    %c0_i32 = arith.constant 0 : i32
    %c0_i32_0 = arith.constant 0 : i32
    return %c0_i32, %arg0 : i32, i32
  }
  func.func @transform_1(%arg0: i32) -> (i32, i32) {
    %c0_i32 = arith.constant 0 : i32
    %c0_i32_0 = arith.constant 0 : i32
    %c0_i32_1 = arith.constant 0 : i32
    return %c0_i32, %c0_i32_0 : i32, i32
  }
  func.func @transform_2(%arg0: i32) -> (i32, i32) {
    %c0_i32 = arith.constant 0 : i32
    %c0_i32_0 = arith.constant 0 : i32
    %c0_i32_1 = arith.constant 0 : i32
    return %c0_i32, %c0_i32_0 : i32, i32
  }
  func.func @transform_3(%arg0: i32) -> (i32, i32) {
    %c0_i32 = arith.constant 0 : i32
    %c0_i32_0 = arith.constant 0 : i32
    return %c0_i32, %arg0 : i32, i32
  }
}

module attributes {stable_mosaic.version = 11 : i64} {
  func.func @_fused_matmul_t_kernel(%arg0: i32, %arg1: memref<432x128xbf16, #tpu.memory_space<vmem>>, %arg2: memref<16x432xbf16, #tpu.memory_space<vmem>>, %arg3: memref<16x1xf32, #tpu.memory_space<vmem>>, %arg4: memref<16x128xf32, #tpu.memory_space<vmem>>, %arg5: memref<16x128xf32, #tpu.memory_space<vmem>>) attributes {dimension_semantics = [#tpu.dimension_semantics<parallel>], iteration_bounds = array<i64: 1>, scalar_prefetch = 0 : i64, scratch_operands = 0 : i64, tpu.core_type = #tpu.core_type<tc>, window_params = [{transform_indices = @transform_0, window_bounds = array<i64: 432, 128>}, {pipeline_mode = #tpu.pipeline_mode<synchronous>, transform_indices = @transform_1, window_bounds = array<i64: 16, 432>}, {pipeline_mode = #tpu.pipeline_mode<synchronous>, transform_indices = @transform_2, window_bounds = array<i64: 16, 1>}, {transform_indices = @transform_3, window_bounds = array<i64: 16, 128>}, {transform_indices = @transform_4, window_bounds = array<i64: 16, 128>}]} {
    %c0 = arith.constant 0 : index
    %c0_0 = arith.constant 0 : index
    %0 = vector.load %arg2[%c0, %c0_0] : memref<16x432xbf16, #tpu.memory_space<vmem>>, vector<16x432xbf16>
    %c0_1 = arith.constant 0 : index
    %c0_2 = arith.constant 0 : index
    %1 = vector.load %arg1[%c0_1, %c0_2] : memref<432x128xbf16, #tpu.memory_space<vmem>>, vector<432x128xbf16>
    %cst = arith.constant dense<0.000000e+00> : vector<16x128xf32>
    %2 = tpu.matmul %0, %1, %cst {dimension_numbers = #tpu.dot_dimension_numbers<[1], [0], [0], [1], [0, 0, 1, 1], [], []>} : vector<16x432xbf16>, vector<432x128xbf16>, vector<16x128xf32> -> vector<16x128xf32>
    %c0_3 = arith.constant 0 : index
    %c0_4 = arith.constant 0 : index
    %3 = vector.load %arg3[%c0_3, %c0_4] : memref<16x1xf32, #tpu.memory_space<vmem>>, vector<16x1xf32>
    %4 = vector.broadcast %3 : vector<16x1xf32> to vector<16x128xf32>
    %5 = arith.addf %2, %4 : vector<16x128xf32>
    %c0_5 = arith.constant 0 : index
    %c0_6 = arith.constant 0 : index
    %6 = vector.load %arg4[%c0_5, %c0_6] : memref<16x128xf32, #tpu.memory_space<vmem>>, vector<16x128xf32>
    %7 = arith.addf %5, %6 : vector<16x128xf32>
    %cst_7 = arith.constant 0.000000e+00 : f32
    %8 = vector.broadcast %cst_7 : f32 to vector<16x128xf32>
    %9 = arith.maximumf %7, %8 : vector<16x128xf32>
    %c0_8 = arith.constant 0 : index
    %c0_9 = arith.constant 0 : index
    %10 = vector.load %arg5[%c0_8, %c0_9] : memref<16x128xf32, #tpu.memory_space<vmem>>, vector<16x128xf32>
    tpu.vector_store %arg5[%c0_8, %c0_9], %9 {strides = array<i32>} : memref<16x128xf32, #tpu.memory_space<vmem>>, vector<16x128xf32>,
    return
  }
  func.func @transform_0(%arg0: i32) -> (i32, i32) {
    %c0_i32 = arith.constant 0 : i32
    %c0_i32_0 = arith.constant 0 : i32
    return %c0_i32, %arg0 : i32, i32
  }
  func.func @transform_1(%arg0: i32) -> (i32, i32) {
    %c0_i32 = arith.constant 0 : i32
    %c0_i32_0 = arith.constant 0 : i32
    %c0_i32_1 = arith.constant 0 : i32
    return %c0_i32, %c0_i32_0 : i32, i32
  }
  func.func @transform_2(%arg0: i32) -> (i32, i32) {
    %c0_i32 = arith.constant 0 : i32
    %c0_i32_0 = arith.constant 0 : i32
    %c0_i32_1 = arith.constant 0 : i32
    return %c0_i32, %c0_i32_0 : i32, i32
  }
  func.func @transform_3(%arg0: i32) -> (i32, i32) {
    %c0_i32 = arith.constant 0 : i32
    %c0_i32_0 = arith.constant 0 : i32
    return %c0_i32, %arg0 : i32, i32
  }
  func.func @transform_4(%arg0: i32) -> (i32, i32) {
    %c0_i32 = arith.constant 0 : i32
    %c0_i32_0 = arith.constant 0 : i32
    return %c0_i32, %arg0 : i32, i32
  }
}

module attributes {stable_mosaic.version = 11 : i64} {
  func.func @_fused_matmul_t_kernel(%arg0: i32, %arg1: memref<432x128xbf16, #tpu.memory_space<vmem>>, %arg2: memref<1x432xbf16, #tpu.memory_space<vmem>>, %arg3: memref<1x1xf32, #tpu.memory_space<vmem>>, %arg4: memref<1x128xf32, #tpu.memory_space<vmem>>) attributes {dimension_semantics = [#tpu.dimension_semantics<parallel>], iteration_bounds = array<i64: 1>, scalar_prefetch = 0 : i64, scratch_operands = 0 : i64, tpu.core_type = #tpu.core_type<tc>, window_params = [{transform_indices = @transform_0, window_bounds = array<i64: 432, 128>}, {pipeline_mode = #tpu.pipeline_mode<synchronous>, transform_indices = @transform_1, window_bounds = array<i64: 1, 432>}, {pipeline_mode = #tpu.pipeline_mode<synchronous>, transform_indices = @transform_2, window_bounds = array<i64: 1, 1>}, {transform_indices = @transform_3, window_bounds = array<i64: 1, 128>}]} {
    %c0 = arith.constant 0 : index
    %c0_0 = arith.constant 0 : index
    %0 = vector.load %arg2[%c0, %c0_0] : memref<1x432xbf16, #tpu.memory_space<vmem>>, vector<1x432xbf16>
    %c0_1 = arith.constant 0 : index
    %c0_2 = arith.constant 0 : index
    %1 = vector.load %arg1[%c0_1, %c0_2] : memref<432x128xbf16, #tpu.memory_space<vmem>>, vector<432x128xbf16>
    %cst = arith.constant dense<0.000000e+00> : vector<1x128xf32>
    %2 = tpu.matmul %0, %1, %cst {dimension_numbers = #tpu.dot_dimension_numbers<[1], [0], [0], [1], [0, 0, 1, 1], [], []>} : vector<1x432xbf16>, vector<432x128xbf16>, vector<1x128xf32> -> vector<1x128xf32>
    %c0_3 = arith.constant 0 : index
    %c0_4 = arith.constant 0 : index
    %3 = vector.load %arg3[%c0_3, %c0_4] : memref<1x1xf32, #tpu.memory_space<vmem>>, vector<1x1xf32>
    %4 = vector.broadcast %3 : vector<1x1xf32> to vector<1x128xf32>
    %5 = arith.addf %2, %4 : vector<1x128xf32>
    %c0_5 = arith.constant 0 : index
    %c0_6 = arith.constant 0 : index
    %6 = vector.load %arg4[%c0_5, %c0_6] : memref<1x128xf32, #tpu.memory_space<vmem>>, vector<1x128xf32>
    tpu.vector_store %arg4[%c0_5, %c0_6], %5 {strides = array<i32>} : memref<1x128xf32, #tpu.memory_space<vmem>>, vector<1x128xf32>,
    return
  }
  func.func @transform_0(%arg0: i32) -> (i32, i32) {
    %c0_i32 = arith.constant 0 : i32
    %c0_i32_0 = arith.constant 0 : i32
    return %c0_i32, %arg0 : i32, i32
  }
  func.func @transform_1(%arg0: i32) -> (i32, i32) {
    %c0_i32 = arith.constant 0 : i32
    %c0_i32_0 = arith.constant 0 : i32
    %c0_i32_1 = arith.constant 0 : i32
    return %c0_i32, %c0_i32_0 : i32, i32
  }
  func.func @transform_2(%arg0: i32) -> (i32, i32) {
    %c0_i32 = arith.constant 0 : i32
    %c0_i32_0 = arith.constant 0 : i32
    %c0_i32_1 = arith.constant 0 : i32
    return %c0_i32, %c0_i32_0 : i32, i32
  }
  func.func @transform_3(%arg0: i32) -> (i32, i32) {
    %c0_i32 = arith.constant 0 : i32
    %c0_i32_0 = arith.constant 0 : i32
    return %c0_i32, %arg0 : i32, i32
  }
}

module attributes {stable_mosaic.version = 11 : i64} {
  func.func @_softargmin_kernel(%arg0: i32, %arg1: memref<4x512xf32, #tpu.memory_space<vmem>>, %arg2: memref<16x4xf32, #tpu.memory_space<vmem>>, %arg3: memref<16x1xf32, #tpu.memory_space<vmem>>, %arg4: memref<1x512xf32, #tpu.memory_space<vmem>>) attributes {dimension_semantics = [#tpu.dimension_semantics<parallel>], iteration_bounds = array<i64: 1>, scalar_prefetch = 0 : i64, scratch_operands = 0 : i64, tpu.core_type = #tpu.core_type<tc>, window_params = [{transform_indices = @transform_0, window_bounds = array<i64: 4, 512>}, {pipeline_mode = #tpu.pipeline_mode<synchronous>, transform_indices = @transform_1, window_bounds = array<i64: 16, 4>}, {pipeline_mode = #tpu.pipeline_mode<synchronous>, transform_indices = @transform_2, window_bounds = array<i64: 16, 1>}, {transform_indices = @transform_3, window_bounds = array<i64: 1, 512>}]} {
    %c0 = arith.constant 0 : index
    %c0_0 = arith.constant 0 : index
    %0 = vector.load %arg1[%c0, %c0_0] : memref<4x512xf32, #tpu.memory_space<vmem>>, vector<4x512xf32>
    %c0_1 = arith.constant 0 : index
    %c0_2 = arith.constant 0 : index
    %1 = vector.load %arg2[%c0_1, %c0_2] : memref<16x4xf32, #tpu.memory_space<vmem>>, vector<16x4xf32>
    %2 = vector.extract_strided_slice %1 {offsets = [0, 0], sizes = [16, 1], strides = [1, 1]} : vector<16x4xf32> to vector<16x1xf32>
    %3 = vector.extract_strided_slice %0 {offsets = [0, 0], sizes = [1, 512], strides = [1, 1]} : vector<4x512xf32> to vector<1x512xf32>
    %4 = vector.broadcast %2 : vector<16x1xf32> to vector<16x512xf32>
    %5 = vector.broadcast %3 : vector<1x512xf32> to vector<16x512xf32>
    %6 = arith.mulf %4, %5 : vector<16x512xf32>
    %7 = vector.extract_strided_slice %1 {offsets = [0, 1], sizes = [16, 1], strides = [1, 1]} : vector<16x4xf32> to vector<16x1xf32>
    %8 = vector.extract_strided_slice %0 {offsets = [1, 0], sizes = [1, 512], strides = [1, 1]} : vector<4x512xf32> to vector<1x512xf32>
    %9 = vector.broadcast %7 : vector<16x1xf32> to vector<16x512xf32>
    %10 = vector.broadcast %8 : vector<1x512xf32> to vector<16x512xf32>
    %11 = arith.mulf %9, %10 : vector<16x512xf32>
    %12 = arith.addf %6, %11 : vector<16x512xf32>
    %13 = vector.extract_strided_slice %1 {offsets = [0, 2], sizes = [16, 1], strides = [1, 1]} : vector<16x4xf32> to vector<16x1xf32>
    %14 = vector.extract_strided_slice %0 {offsets = [2, 0], sizes = [1, 512], strides = [1, 1]} : vector<4x512xf32> to vector<1x512xf32>
    %15 = vector.broadcast %13 : vector<16x1xf32> to vector<16x512xf32>
    %16 = vector.broadcast %14 : vector<1x512xf32> to vector<16x512xf32>
    %17 = arith.mulf %15, %16 : vector<16x512xf32>
    %18 = arith.addf %12, %17 : vector<16x512xf32>
    %19 = vector.extract_strided_slice %1 {offsets = [0, 3], sizes = [16, 1], strides = [1, 1]} : vector<16x4xf32> to vector<16x1xf32>
    %20 = vector.extract_strided_slice %0 {offsets = [3, 0], sizes = [1, 512], strides = [1, 1]} : vector<4x512xf32> to vector<1x512xf32>
    %21 = vector.broadcast %19 : vector<16x1xf32> to vector<16x512xf32>
    %22 = vector.broadcast %20 : vector<1x512xf32> to vector<16x512xf32>
    %23 = arith.mulf %21, %22 : vector<16x512xf32>
    %24 = arith.addf %18, %23 : vector<16x512xf32>
    %cst = arith.constant 0.000000e+00 : f32
    %25 = vector.broadcast %cst : f32 to vector<16x512xf32>
    %26 = arith.subf %25, %24 : vector<16x512xf32>
    %cst_3 = arith.constant dense<0xFF800000> : vector<512xf32>
    %27 = vector.multi_reduction <maximumf>, %26, %cst_3 [0] : vector<16x512xf32> to vector<512xf32>
    %28 = vector.shape_cast %27 : vector<512xf32> to vector<1x512xf32>
    %29 = vector.broadcast %28 : vector<1x512xf32> to vector<16x512xf32>
    %30 = arith.subf %26, %29 : vector<16x512xf32>
    %31 = math.exp %30 : vector<16x512xf32>
    %cst_4 = arith.constant dense<0.000000e+00> : vector<512xf32>
    %32 = vector.multi_reduction <add>, %31, %cst_4 [0] : vector<16x512xf32> to vector<512xf32>
    %33 = vector.shape_cast %32 : vector<512xf32> to vector<1x512xf32>
    %34 = vector.broadcast %33 : vector<1x512xf32> to vector<16x512xf32>
    %35 = arith.divf %31, %34 : vector<16x512xf32>
    %c0_5 = arith.constant 0 : index
    %c0_6 = arith.constant 0 : index
    %36 = vector.load %arg3[%c0_5, %c0_6] : memref<16x1xf32, #tpu.memory_space<vmem>>, vector<16x1xf32>
    %37 = vector.broadcast %36 : vector<16x1xf32> to vector<16x512xf32>
    %38 = arith.mulf %35, %37 : vector<16x512xf32>
    %cst_7 = arith.constant dense<0.000000e+00> : vector<512xf32>
    %39 = vector.multi_reduction <add>, %38, %cst_7 [0] : vector<16x512xf32> to vector<512xf32>
    %40 = vector.shape_cast %39 : vector<512xf32> to vector<1x512xf32>
    %c0_8 = arith.constant 0 : index
    %c0_9 = arith.constant 0 : index
    %41 = vector.load %arg4[%c0_8, %c0_9] : memref<1x512xf32, #tpu.memory_space<vmem>>, vector<1x512xf32>
    tpu.vector_store %arg4[%c0_8, %c0_9], %40 {strides = array<i32>} : memref<1x512xf32, #tpu.memory_space<vmem>>, vector<1x512xf32>,
    return
  }
  func.func @transform_0(%arg0: i32) -> (i32, i32) {
    %c0_i32 = arith.constant 0 : i32
    %c0_i32_0 = arith.constant 0 : i32
    return %c0_i32, %arg0 : i32, i32
  }
  func.func @transform_1(%arg0: i32) -> (i32, i32) {
    %c0_i32 = arith.constant 0 : i32
    %c0_i32_0 = arith.constant 0 : i32
    %c0_i32_1 = arith.constant 0 : i32
    return %c0_i32, %c0_i32_0 : i32, i32
  }
  func.func @transform_2(%arg0: i32) -> (i32, i32) {
    %c0_i32 = arith.constant 0 : i32
    %c0_i32_0 = arith.constant 0 : i32
    %c0_i32_1 = arith.constant 0 : i32
    return %c0_i32, %c0_i32_0 : i32, i32
  }
  func.func @transform_3(%arg0: i32) -> (i32, i32) {
    %c0_i32 = arith.constant 0 : i32
    %c0_i32_0 = arith.constant 0 : i32
    return %c0_i32, %arg0 : i32, i32
  }
}

</mosaic_0001>

<llo_original>
// kernel: sdenet_forward.24
$region0: #{sdenet_forward.24}
  #allocation0 [shape = 'u32[]', space=smem, size = 0x4, offset = 0x4, fixed_abs, tag = 'smem constant byte address 0x4 - core index']
  #allocation1 [shape = 'u32[144,128]{1,0:T(1,128)}', space=vmem, size = 0x12000, scoped, tag = 'internal scratch']
  %s0 = inlined_call_operand.vmem [shape: bf16[27,128], index: 0, kind: input, shape index: {}]
  %s1 = inlined_call_operand.vmem [shape: bf16[8,27], index: 1, kind: input, shape index: {}]
  %s2 = inlined_call_operand.vmem [shape: f32[8,1], index: 2, kind: input, shape index: {}]
  %s3 = inlined_call_operand.vmem [shape: f32[8,128], index: 3, kind: output, shape index: {}]
  %s4 = sld [smem:[#allocation0]]
  $region22: #{sdenet_forward.24} parent=0
    _
  %s6 = ssub.s32 1, %s4
  %s7 = scalar_select 0, %s6, %s4
  // Predicated region
  $region2: #{sdenet_forward.24} parent=0 // pred_check
    _
  $region3: #{sdenet_forward.24} parent=0 // pred_check_branch
    %9 = sbr.rel (0) target = $region5
  $region4: #{sdenet_forward.24} parent=0 // pred_region
    _
  $region5: #{sdenet_forward.24} parent=0 // pred_fallthru
    _
  // Predicated region
  $region6: #{sdenet_forward.24} parent=0 // pred_check
    _
  $region7: #{sdenet_forward.24} parent=0 // pred_check_branch
    %11 = sbr.rel (0) target = $region9
  $region8: #{sdenet_forward.24} parent=0 // pred_region
    _
  $region9: #{sdenet_forward.24} parent=0 // pred_fallthru
    _
  // Predicated region
  $region10: #{sdenet_forward.24} parent=0 // pred_check
    _
  $region11: #{sdenet_forward.24} parent=0 // pred_check_branch
    %13 = sbr.rel (0) target = $region13
  $region12: #{sdenet_forward.24} parent=0 // pred_region
    _
  $region13: #{sdenet_forward.24} parent=0 // pred_fallthru
    _
  %v15 = vld [vmem:[%s1] sm:$0xf]
  %v16 = vld [vmem:[%s0] sm:$0xf]
  %v17 = vld [vmem:[%s0 + $0x4] sm:$0xf]
  %v18 = vld [vmem:[%s0 + $0x8] sm:$0xf]
  %v19 = vld [vmem:[%s0 + $0xc] sm:$0x3]
  %v20 = vld [vmem:[%s2] sm:$0xff]
  %22 = vset.pattern.permute.xlu0 0
  %23 = vperm.xlu0 %22, %v20
  %v24 = vpop.permute.xlu0 %23
  %v30 = vunpack.c.l.b16 %v16
  %v31 = vunpack.c.l.b16 %v17
  %v32 = vunpack.c.l.b16 %v18
  %v33 = vunpack.c.l.b16 %v19
  %v34 = vpack.c.b16 %v31, %v30
  %v35 = vpack.c.b16 %v33, %v32
  %vm37 = vcmask 220160
  %v39 = vsel %vm37, %v15, 0
  %vm41 = vcmask 1044480
  %vm42 = vcmask 1045504
  %v43 = vsel %vm41, 4294967295, 65535
  %v44 = vsel %vm42, %v43, 0
  %v46 = vand.u32 %v35, %v44
  %48 = vmatprep.subr.bf16.mxu0 0
  %49 = vmatpush1.bf16.msra.mxu0 %v34
  %50 = vmatprep.subr.bf16.mxu0 0
  %51 = vmatpush1.bf16.msra.mxu0 %v46
  %52 = vmatprep.subr.bf16.mxu0 0
  %53 = vmatpush1.bf16.msra.mxu0 0
  %54 = vmatprep.subr.bf16.mxu0 0
  %55 = vmatpush1.bf16.msra.mxu0 0
  %56 = vmatprep.subr.bf16.mxu0 0
  %57 = vmatpush1.bf16.msra.mxu0 0
  %58 = vmatprep.subr.bf16.mxu0 0
  %59 = vmatpush1.bf16.msra.mxu0 0
  %60 = vmatprep.subr.bf16.mxu0 0
  %61 = vmatpush1.bf16.msra.mxu0 0
  %62 = vmatprep.subr.bf16.mxu0 0
  %63 = vmatpush1.bf16.msra.mxu0 0
  %64 = vmatprep.subr.bf16.mxu0 0
  %65 = vmatpush1.bf16.msra.mxu0 0
  %66 = vmatprep.subr.bf16.mxu0 0
  %67 = vmatpush1.bf16.msra.mxu0 0
  %68 = vmatprep.subr.bf16.mxu0 0
  %69 = vmatpush1.bf16.msra.mxu0 0
  %70 = vmatprep.subr.bf16.mxu0 0
  %71 = vmatpush1.bf16.msra.mxu0 0
  %72 = vmatprep.subr.bf16.mxu0 0
  %73 = vmatpush1.bf16.msra.mxu0 0
  %74 = vmatprep.subr.bf16.mxu0 0
  %75 = vmatpush1.bf16.msra.mxu0 0
  %76 = vmatprep.subr.bf16.mxu0 0
  %77 = vmatpush1.bf16.msra.mxu0 0
  %78 = vmatprep.subr.bf16.mxu0 0
  %79 = vmatpush1.bf16.msra.mxu0 0
  %80 = vmatprep.mubr.bf16.mxu0 0
  %81 = vmatmul.mubr.bf16.gmra.mrb[0].mxu0 %v39
  %v82 = vpop.f32.mrb[0].mxu0
  %v83 = vadd.f32 %v24, %v82
  %v84 = vpop.f32.mrb[0].mxu0
  %v85 = vpop.f32.mrb[0].mxu0
  %v86 = vpop.f32.mrb[0].mxu0
  %87 = vdwg.mxu0
  %v88 = vmax.f32 %v83, 0.0
  %89 = vst [vmem:[%s3] sm:$0xff] %v88
  // Predicated region
  $region14: #{sdenet_forward.24} parent=0 // pred_check
    _
  $region15: #{sdenet_forward.24} parent=0 // pred_check_branch
    %91 = sbr.rel (0) target = $region17
  $region16: #{sdenet_forward.24} parent=0 // pred_region
    _
  $region17: #{sdenet_forward.24} parent=0 // pred_fallthru
    _
  // Predicated region
  $region18: #{sdenet_forward.24} parent=0 // pred_check
    _
  $region19: #{sdenet_forward.24} parent=0 // pred_check_branch
    %93 = sbr.rel (0) target = $region21
  $region20: #{sdenet_forward.24} parent=0 // pred_region
    _
  $region21: #{sdenet_forward.24} parent=0 // pred_fallthru
    _

// kernel: sdenet_forward.25
$region0: #{sdenet_forward.25}
  #allocation0 [shape = 'u32[]', space=smem, size = 0x4, offset = 0x4, fixed_abs, tag = 'smem constant byte address 0x4 - core index']
  #allocation1 [shape = 'u32[144,128]{1,0:T(1,128)}', space=vmem, size = 0x12000, scoped, tag = 'internal scratch']
  %s0 = inlined_call_operand.vmem [shape: bf16[72,128], index: 0, kind: input, shape index: {}]
  %s1 = inlined_call_operand.vmem [shape: bf16[16,72], index: 1, kind: input, shape index: {}]
  %s2 = inlined_call_operand.vmem [shape: f32[16,1], index: 2, kind: input, shape index: {}]
  %s3 = inlined_call_operand.vmem [shape: f32[16,128], index: 3, kind: output, shape index: {}]
  %s4 = sld [smem:[#allocation0]]
  $region22: #{sdenet_forward.25} parent=0
    _
  %s6 = ssub.s32 1, %s4
  %s7 = scalar_select 0, %s6, %s4
  // Predicated region
  $region2: #{sdenet_forward.25} parent=0 // pred_check
    _
  $region3: #{sdenet_forward.25} parent=0 // pred_check_branch
    %9 = sbr.rel (0) target = $region5
  $region4: #{sdenet_forward.25} parent=0 // pred_region
    _
  $region5: #{sdenet_forward.25} parent=0 // pred_fallthru
    _
  // Predicated region
  $region6: #{sdenet_forward.25} parent=0 // pred_check
    _
  $region7: #{sdenet_forward.25} parent=0 // pred_check_branch
    %11 = sbr.rel (0) target = $region9
  $region8: #{sdenet_forward.25} parent=0 // pred_region
    _
  $region9: #{sdenet_forward.25} parent=0 // pred_fallthru
    _
  // Predicated region
  $region10: #{sdenet_forward.25} parent=0 // pred_check
    _
  $region11: #{sdenet_forward.25} parent=0 // pred_check_branch
    %13 = sbr.rel (0) target = $region13
  $region12: #{sdenet_forward.25} parent=0 // pred_region
    _
  $region13: #{sdenet_forward.25} parent=0 // pred_fallthru
    _
  %v15 = vld [vmem:[%s1] sm:$0xf]
  %v16 = vld [vmem:[%s1 + $0x4] sm:$0xf]
  %v17 = vld [vmem:[%s0] sm:$0xf]
  %v18 = vld [vmem:[%s0 + $0x4] sm:$0xf]
  %v19 = vld [vmem:[%s0 + $0x8] sm:$0xf]
  %v20 = vld [vmem:[%s0 + $0xc] sm:$0xf]
  %v21 = vld [vmem:[%s0 + $0x10] sm:$0xf]
  %v22 = vld [vmem:[%s0 + $0x14] sm:$0xf]
  %v23 = vld [vmem:[%s0 + $0x18] sm:$0xf]
  %v24 = vld [vmem:[%s0 + $0x1c] sm:$0xf]
  %v25 = vld [vmem:[%s0 + $0x20] sm:$0xf]
  %v26 = vld [vmem:[%s2] sm:$0xff]
  %v27 = vld [vmem:[%s2 + $0x8] sm:$0xff]
  %29 = vset.pattern.permute.xlu0 0
  %30 = vperm.xlu0 %29, %v26
  %v31 = vpop.permute.xlu0 %30
  %34 = vset.pattern.permute.xlu0 0
  %35 = vperm.xlu0 %34, %v27
  %v36 = vpop.permute.xlu0 %35
  %v40 = vunpack.c.l.b16 %v15
  %v41 = vunpack.c.l.b16 %v16
  %v42 = vpack.c.b16 %v41, %v40
  %v52 = vunpack.c.l.b16 %v17
  %v53 = vunpack.c.l.b16 %v18
  %v54 = vunpack.c.l.b16 %v19
  %v55 = vunpack.c.l.b16 %v20
  %v56 = vunpack.c.l.b16 %v21
  %v57 = vunpack.c.l.b16 %v22
  %v58 = vunpack.c.l.b16 %v23
  %v59 = vunpack.c.l.b16 %v24
  %v60 = vunpack.c.l.b16 %v25
  %v61 = vpack.c.b16 %v53, %v52
  %v62 = vpack.c.b16 %v55, %v54
  %v63 = vpack.c.b16 %v57, %v56
  %v64 = vpack.c.b16 %v59, %v58
  %v65 = vpack.c.b16 %v60, %v60
  %vm70 = vcmask 588800
  %v72 = vsel %vm70, %v42, 0
  %vm74 = vcmask 1043456
  %v76 = vsel %vm74, %v65, 0
  %78 = vmatprep.subr.bf16.mxu0 0
  %79 = vmatpush1.bf16.msra.mxu0 %v61
  %80 = vmatprep.subr.bf16.mxu0 0
  %81 = vmatpush1.bf16.msra.mxu0 %v62
  %82 = vmatprep.subr.bf16.mxu0 0
  %83 = vmatpush1.bf16.msra.mxu0 %v63
  %84 = vmatprep.subr.bf16.mxu0 0
  %85 = vmatpush1.bf16.msra.mxu0 %v64
  %86 = vmatprep.subr.bf16.mxu0 0
  %87 = vmatpush1.bf16.msra.mxu0 %v76
  %88 = vmatprep.subr.bf16.mxu0 0
  %89 = vmatpush1.bf16.msra.mxu0 0
  %90 = vmatprep.subr.bf16.mxu0 0
  %91 = vmatpush1.bf16.msra.mxu0 0
  %92 = vmatprep.subr.bf16.mxu0 0
  %93 = vmatpush1.bf16.msra.mxu0 0
  %94 = vmatprep.subr.bf16.mxu0 0
  %95 = vmatpush1.bf16.msra.mxu0 0
  %96 = vmatprep.subr.bf16.mxu0 0
  %97 = vmatpush1.bf16.msra.mxu0 0
  %98 = vmatprep.subr.bf16.mxu0 0
  %99 = vmatpush1.bf16.msra.mxu0 0
  %100 = vmatprep.subr.bf16.mxu0 0
  %101 = vmatpush1.bf16.msra.mxu0 0
  %102 = vmatprep.subr.bf16.mxu0 0
  %103 = vmatpush1.bf16.msra.mxu0 0
  %104 = vmatprep.subr.bf16.mxu0 0
  %105 = vmatpush1.bf16.msra.mxu0 0
  %106 = vmatprep.subr.bf16.mxu0 0
  %107 = vmatpush1.bf16.msra.mxu0 0
  %108 = vmatprep.subr.bf16.mxu0 0
  %109 = vmatpush1.bf16.msra.mxu0 0
  %110 = vmatprep.mubr.bf16.mxu0 0
  %111 = vmatmul.mubr.bf16.gmra.mrb[0].mxu0 %v72
  %v112 = vpop.f32.mrb[0].mxu0
  %v113 = vadd.f32 %v31, %v112
  %v114 = vpop.f32.mrb[0].mxu0
  %v115 = vpop.f32.mrb[0].mxu0
  %v116 = vadd.f32 %v36, %v115
  %v117 = vpop.f32.mrb[0].mxu0
  %118 = vdwg.mxu0
  %v119 = vmax.f32 %v113, 0.0
  %v120 = vmax.f32 %v116, 0.0
  %121 = vst [vmem:[%s3] sm:$0xff] %v119
  %122 = vst [vmem:[%s3 + $0x8] sm:$0xff] %v120
  // Predicated region
  $region14: #{sdenet_forward.25} parent=0 // pred_check
    _
  $region15: #{sdenet_forward.25} parent=0 // pred_check_branch
    %124 = sbr.rel (0) target = $region17
  $region16: #{sdenet_forward.25} parent=0 // pred_region
    _
  $region17: #{sdenet_forward.25} parent=0 // pred_fallthru
    _
  // Predicated region
  $region18: #{sdenet_forward.25} parent=0 // pred_check
    _
  $region19: #{sdenet_forward.25} parent=0 // pred_check_branch
    %126 = sbr.rel (0) target = $region21
  $region20: #{sdenet_forward.25} parent=0 // pred_region
    _
  $region21: #{sdenet_forward.25} parent=0 // pred_fallthru
    _

// kernel: sdenet_forward.26
$region0: #{sdenet_forward.26}
  #allocation0 [shape = 'u32[]', space=smem, size = 0x4, offset = 0x4, fixed_abs, tag = 'smem constant byte address 0x4 - core index']
  #allocation1 [shape = 'u32[144,128]{1,0:T(1,128)}', space=vmem, size = 0x12000, scoped, tag = 'internal scratch']
  %s0 = inlined_call_operand.vmem [shape: bf16[8,128], index: 0, kind: input, shape index: {}]
  %s1 = inlined_call_operand.vmem [shape: bf16[16,8], index: 1, kind: input, shape index: {}]
  %s2 = inlined_call_operand.vmem [shape: f32[16,1], index: 2, kind: input, shape index: {}]
  %s3 = inlined_call_operand.vmem [shape: f32[16,128], index: 3, kind: output, shape index: {}]
  %s4 = sld [smem:[#allocation0]]
  $region22: #{sdenet_forward.26} parent=0
    _
  %s6 = ssub.s32 1, %s4
  %s7 = scalar_select 0, %s6, %s4
  // Predicated region
  $region2: #{sdenet_forward.26} parent=0 // pred_check
    _
  $region3: #{sdenet_forward.26} parent=0 // pred_check_branch
    %9 = sbr.rel (0) target = $region5
  $region4: #{sdenet_forward.26} parent=0 // pred_region
    _
  $region5: #{sdenet_forward.26} parent=0 // pred_fallthru
    _
  // Predicated region
  $region6: #{sdenet_forward.26} parent=0 // pred_check
    _
  $region7: #{sdenet_forward.26} parent=0 // pred_check_branch
    %11 = sbr.rel (0) target = $region9
  $region8: #{sdenet_forward.26} parent=0 // pred_region
    _
  $region9: #{sdenet_forward.26} parent=0 // pred_fallthru
    _
  // Predicated region
  $region10: #{sdenet_forward.26} parent=0 // pred_check
    _
  $region11: #{sdenet_forward.26} parent=0 // pred_check_branch
    %13 = sbr.rel (0) target = $region13
  $region12: #{sdenet_forward.26} parent=0 // pred_region
    _
  $region13: #{sdenet_forward.26} parent=0 // pred_fallthru
    _
  %v15 = vld [vmem:[%s1] sm:$0xf]
  %v16 = vld [vmem:[%s1 + $0x4] sm:$0xf]
  %v17 = vld [vmem:[%s0] sm:$0xf]
  %v18 = vld [vmem:[%s2] sm:$0xff]
  %v19 = vld [vmem:[%s2 + $0x8] sm:$0xff]
  %21 = vset.pattern.permute.xlu0 0
  %22 = vperm.xlu0 %21, %v18
  %v23 = vpop.permute.xlu0 %22
  %26 = vset.pattern.permute.xlu0 0
  %27 = vperm.xlu0 %26, %v19
  %v28 = vpop.permute.xlu0 %27
  %v32 = vunpack.c.l.b16 %v15
  %v33 = vunpack.c.l.b16 %v16
  %v34 = vpack.c.b16 %v33, %v32
  %vm35 = vcmask 64512
  %v37 = vsel %vm35, %v34, 0
  %vm39 = vcmask 1043456
  %v41 = vsel %vm39, %v17, 0
  %43 = vmatprep.subr.bf16.mxu0 0
  %44 = vmatpush1.bf16.msra.mxu0 %v41
  %45 = vmatprep.subr.bf16.mxu0 0
  %46 = vmatpush1.bf16.msra.mxu0 0
  %47 = vmatprep.subr.bf16.mxu0 0
  %48 = vmatpush1.bf16.msra.mxu0 0
  %49 = vmatprep.subr.bf16.mxu0 0
  %50 = vmatpush1.bf16.msra.mxu0 0
  %51 = vmatprep.subr.bf16.mxu0 0
  %52 = vmatpush1.bf16.msra.mxu0 0
  %53 = vmatprep.subr.bf16.mxu0 0
  %54 = vmatpush1.bf16.msra.mxu0 0
  %55 = vmatprep.subr.bf16.mxu0 0
  %56 = vmatpush1.bf16.msra.mxu0 0
  %57 = vmatprep.subr.bf16.mxu0 0
  %58 = vmatpush1.bf16.msra.mxu0 0
  %59 = vmatprep.subr.bf16.mxu0 0
  %60 = vmatpush1.bf16.msra.mxu0 0
  %61 = vmatprep.subr.bf16.mxu0 0
  %62 = vmatpush1.bf16.msra.mxu0 0
  %63 = vmatprep.subr.bf16.mxu0 0
  %64 = vmatpush1.bf16.msra.mxu0 0
  %65 = vmatprep.subr.bf16.mxu0 0
  %66 = vmatpush1.bf16.msra.mxu0 0
  %67 = vmatprep.subr.bf16.mxu0 0
  %68 = vmatpush1.bf16.msra.mxu0 0
  %69 = vmatprep.subr.bf16.mxu0 0
  %70 = vmatpush1.bf16.msra.mxu0 0
  %71 = vmatprep.subr.bf16.mxu0 0
  %72 = vmatpush1.bf16.msra.mxu0 0
  %73 = vmatprep.subr.bf16.mxu0 0
  %74 = vmatpush1.bf16.msra.mxu0 0
  %75 = vmatprep.mubr.bf16.mxu0 0
  %76 = vmatmul.mubr.bf16.gmra.mrb[0].mxu0 %v37
  %v77 = vpop.f32.mrb[0].mxu0
  %v78 = vadd.f32 %v23, %v77
  %v79 = vpop.f32.mrb[0].mxu0
  %v80 = vpop.f32.mrb[0].mxu0
  %v81 = vadd.f32 %v28, %v80
  %v82 = vpop.f32.mrb[0].mxu0
  %83 = vdwg.mxu0
  %84 = vst [vmem:[%s3] sm:$0xff] %v78
  %85 = vst [vmem:[%s3 + $0x8] sm:$0xff] %v81
  // Predicated region
  $region14: #{sdenet_forward.26} parent=0 // pred_check
    _
  $region15: #{sdenet_forward.26} parent=0 // pred_check_branch
    %87 = sbr.rel (0) target = $region17
  $region16: #{sdenet_forward.26} parent=0 // pred_region
    _
  $region17: #{sdenet_forward.26} parent=0 // pred_fallthru
    _
  // Predicated region
  $region18: #{sdenet_forward.26} parent=0 // pred_check
    _
  $region19: #{sdenet_forward.26} parent=0 // pred_check_branch
    %89 = sbr.rel (0) target = $region21
  $region20: #{sdenet_forward.26} parent=0 // pred_region
    _
  $region21: #{sdenet_forward.26} parent=0 // pred_fallthru
    _

// kernel: sdenet_forward.28
$region0: #{sdenet_forward.28}
  #allocation0 [shape = 'u32[]', space=smem, size = 0x4, offset = 0x4, fixed_abs, tag = 'smem constant byte address 0x4 - core index']
  #allocation1 [shape = 'u32[144,128]{1,0:T(1,128)}', space=vmem, size = 0x12000, scoped, tag = 'internal scratch']
  %s0 = inlined_call_operand.vmem [shape: bf16[144,128], index: 0, kind: input, shape index: {}]
  %s1 = inlined_call_operand.vmem [shape: bf16[16,144], index: 1, kind: input, shape index: {}]
  %s2 = inlined_call_operand.vmem [shape: f32[16,1], index: 2, kind: input, shape index: {}]
  %s3 = inlined_call_operand.vmem [shape: f32[16,128], index: 3, kind: output, shape index: {}]
  %s4 = sld [smem:[#allocation0]]
  $region22: #{sdenet_forward.28} parent=0
    _
  %s6 = ssub.s32 1, %s4
  %s7 = scalar_select 0, %s6, %s4
  // Predicated region
  $region2: #{sdenet_forward.28} parent=0 // pred_check
    _
  $region3: #{sdenet_forward.28} parent=0 // pred_check_branch
    %9 = sbr.rel (0) target = $region5
  $region4: #{sdenet_forward.28} parent=0 // pred_region
    _
  $region5: #{sdenet_forward.28} parent=0 // pred_fallthru
    _
  // Predicated region
  $region6: #{sdenet_forward.28} parent=0 // pred_check
    _
  $region7: #{sdenet_forward.28} parent=0 // pred_check_branch
    %11 = sbr.rel (0) target = $region9
  $region8: #{sdenet_forward.28} parent=0 // pred_region
    _
  $region9: #{sdenet_forward.28} parent=0 // pred_fallthru
    _
  // Predicated region
  $region10: #{sdenet_forward.28} parent=0 // pred_check
    _
  $region11: #{sdenet_forward.28} parent=0 // pred_check_branch
    %13 = sbr.rel (0) target = $region13
  $region12: #{sdenet_forward.28} parent=0 // pred_region
    _
  $region13: #{sdenet_forward.28} parent=0 // pred_fallthru
    _
  %v15 = vld [vmem:[%s1] sm:$0xff]
  %v16 = vld [vmem:[%s1 + $0x8] sm:$0xff]
  %v17 = vld [vmem:[%s0] sm:$0xf]
  %v18 = vld [vmem:[%s0 + $0x4] sm:$0xf]
  %v19 = vld [vmem:[%s0 + $0x8] sm:$0xf]
  %v20 = vld [vmem:[%s0 + $0xc] sm:$0xf]
  %v21 = vld [vmem:[%s0 + $0x10] sm:$0xf]
  %v22 = vld [vmem:[%s0 + $0x14] sm:$0xf]
  %v23 = vld [vmem:[%s0 + $0x18] sm:$0xf]
  %v24 = vld [vmem:[%s0 + $0x1c] sm:$0xf]
  %v25 = vld [vmem:[%s0 + $0x20] sm:$0xf]
  %v26 = vld [vmem:[%s0 + $0x24] sm:$0xf]
  %v27 = vld [vmem:[%s0 + $0x28] sm:$0xf]
  %v28 = vld [vmem:[%s0 + $0x2c] sm:$0xf]
  %v29 = vld [vmem:[%s0 + $0x30] sm:$0xf]
  %v30 = vld [vmem:[%s0 + $0x34] sm:$0xf]
  %v31 = vld [vmem:[%s0 + $0x38] sm:$0xf]
  %v32 = vld [vmem:[%s0 + $0x3c] sm:$0xf]
  %v33 = vld [vmem:[%s0 + $0x40] sm:$0xf]
  %v34 = vld [vmem:[%s0 + $0x44] sm:$0xf]
  %v35 = vld [vmem:[%s2] sm:$0xff]
  %v36 = vld [vmem:[%s2 + $0x8] sm:$0xff]
  %38 = vset.pattern.permute.xlu0 0
  %39 = vperm.xlu0 %38, %v35
  %v40 = vpop.permute.xlu0 %39
  %43 = vset.pattern.permute.xlu0 0
  %44 = vperm.xlu0 %43, %v36
  %v45 = vpop.permute.xlu0 %44
  %v49 = vunpack.c.l.b16 %v15
  %v50 = vunpack.c.h.b16 %v15
  %v51 = vunpack.c.l.b16 %v16
  %v52 = vunpack.c.h.b16 %v16
  %v53 = vpack.c.b16 %v51, %v49
  %v54 = vpack.c.b16 %v52, %v50
  %v74 = vunpack.c.l.b16 %v17
  %v75 = vunpack.c.l.b16 %v18
  %v76 = vunpack.c.l.b16 %v19
  %v77 = vunpack.c.l.b16 %v20
  %v78 = vunpack.c.l.b16 %v21
  %v79 = vunpack.c.l.b16 %v22
  %v80 = vunpack.c.l.b16 %v23
  %v81 = vunpack.c.l.b16 %v24
  %v82 = vunpack.c.l.b16 %v25
  %v83 = vunpack.c.l.b16 %v26
  %v84 = vunpack.c.l.b16 %v27
  %v85 = vunpack.c.l.b16 %v28
  %v86 = vunpack.c.l.b16 %v29
  %v87 = vunpack.c.l.b16 %v30
  %v88 = vunpack.c.l.b16 %v31
  %v89 = vunpack.c.l.b16 %v32
  %v90 = vunpack.c.l.b16 %v33
  %v91 = vunpack.c.l.b16 %v34
  %v92 = vpack.c.b16 %v75, %v74
  %v93 = vpack.c.b16 %v77, %v76
  %v94 = vpack.c.b16 %v79, %v78
  %v95 = vpack.c.b16 %v81, %v80
  %v96 = vpack.c.b16 %v83, %v82
  %v97 = vpack.c.b16 %v85, %v84
  %v98 = vpack.c.b16 %v87, %v86
  %v99 = vpack.c.b16 %v89, %v88
  %v100 = vpack.c.b16 %v91, %v90
  %vm110 = vcmask 130048
  %v112 = vsel %vm110, %v54, 0
  %114 = vmatprep.subr.bf16.mxu0 0
  %115 = vmatpush1.bf16.msra.mxu0 %v92
  %116 = vmatprep.subr.bf16.mxu0 0
  %117 = vmatpush1.bf16.msra.mxu0 %v93
  %118 = vmatprep.subr.bf16.mxu0 0
  %119 = vmatpush1.bf16.msra.mxu0 %v94
  %120 = vmatprep.subr.bf16.mxu0 0
  %121 = vmatpush1.bf16.msra.mxu0 %v95
  %122 = vmatprep.subr.bf16.mxu0 0
  %123 = vmatpush1.bf16.msra.mxu0 %v96
  %124 = vmatprep.subr.bf16.mxu0 0
  %125 = vmatpush1.bf16.msra.mxu0 %v97
  %126 = vmatprep.subr.bf16.mxu0 0
  %127 = vmatpush1.bf16.msra.mxu0 %v98
  %128 = vmatprep.subr.bf16.mxu0 0
  %129 = vmatpush1.bf16.msra.mxu0 %v99
  %130 = vmatprep.subr.bf16.mxu0 0
  %131 = vmatpush1.bf16.msra.mxu0 %v100
  %132 = vmatprep.subr.bf16.mxu0 0
  %133 = vmatpush1.bf16.msra.mxu0 0
  %134 = vmatprep.subr.bf16.mxu0 0
  %135 = vmatpush1.bf16.msra.mxu0 0
  %136 = vmatprep.subr.bf16.mxu0 0
  %137 = vmatpush1.bf16.msra.mxu0 0
  %138 = vmatprep.subr.bf16.mxu0 0
  %139 = vmatpush1.bf16.msra.mxu0 0
  %140 = vmatprep.subr.bf16.mxu0 0
  %141 = vmatpush1.bf16.msra.mxu0 0
  %142 = vmatprep.subr.bf16.mxu0 0
  %143 = vmatpush1.bf16.msra.mxu0 0
  %144 = vmatprep.subr.bf16.mxu0 0
  %145 = vmatpush1.bf16.msra.mxu0 0
  %146 = vmatprep.mubr.bf16.mxu0 %v112
  %147 = vmatmul.mubr.bf16.gmra.mrb[0].mxu0 %v53
  %v148 = vpop.f32.mrb[0].mxu0
  %v149 = vadd.f32 %v40, %v148
  %v150 = vpop.f32.mrb[0].mxu0
  %v151 = vpop.f32.mrb[0].mxu0
  %v152 = vadd.f32 %v45, %v151
  %v153 = vpop.f32.mrb[0].mxu0
  %154 = vdwg.mxu0
  %v155 = vmax.f32 %v149, 0.0
  %v156 = vmax.f32 %v152, 0.0
  %157 = vst [vmem:[%s3] sm:$0xff] %v155
  %158 = vst [vmem:[%s3 + $0x8] sm:$0xff] %v156
  // Predicated region
  $region14: #{sdenet_forward.28} parent=0 // pred_check
    _
  $region15: #{sdenet_forward.28} parent=0 // pred_check_branch
    %160 = sbr.rel (0) target = $region17
  $region16: #{sdenet_forward.28} parent=0 // pred_region
    _
  $region17: #{sdenet_forward.28} parent=0 // pred_fallthru
    _
  // Predicated region
  $region18: #{sdenet_forward.28} parent=0 // pred_check
    _
  $region19: #{sdenet_forward.28} parent=0 // pred_check_branch
    %162 = sbr.rel (0) target = $region21
  $region20: #{sdenet_forward.28} parent=0 // pred_region
    _
  $region21: #{sdenet_forward.28} parent=0 // pred_fallthru
    _

// kernel: sdenet_forward.27
$region0: #{sdenet_forward.27}
  #allocation0 [shape = 'u32[]', space=smem, size = 0x4, offset = 0x4, fixed_abs, tag = 'smem constant byte address 0x4 - core index']
  #allocation1 [shape = 'u32[144,128]{1,0:T(1,128)}', space=vmem, size = 0x12000, scoped, tag = 'internal scratch']
  %s0 = inlined_call_operand.vmem [shape: bf16[144,128], index: 0, kind: input, shape index: {}]
  %s1 = inlined_call_operand.vmem [shape: bf16[16,144], index: 1, kind: input, shape index: {}]
  %s2 = inlined_call_operand.vmem [shape: f32[16,1], index: 2, kind: input, shape index: {}]
  %s3 = inlined_call_operand.vmem [shape: f32[16,128], index: 3, kind: input, shape index: {}]
  %s4 = inlined_call_operand.vmem [shape: f32[16,128], index: 4, kind: output, shape index: {}]
  %s5 = sld [smem:[#allocation0]]
  $region26: #{sdenet_forward.27} parent=0
    _
  %s7 = ssub.s32 1, %s5
  %s8 = scalar_select 0, %s7, %s5
  // Predicated region
  $region2: #{sdenet_forward.27} parent=0 // pred_check
    _
  $region3: #{sdenet_forward.27} parent=0 // pred_check_branch
    %10 = sbr.rel (0) target = $region5
  $region4: #{sdenet_forward.27} parent=0 // pred_region
    _
  $region5: #{sdenet_forward.27} parent=0 // pred_fallthru
    _
  // Predicated region
  $region6: #{sdenet_forward.27} parent=0 // pred_check
    _
  $region7: #{sdenet_forward.27} parent=0 // pred_check_branch
    %12 = sbr.rel (0) target = $region9
  $region8: #{sdenet_forward.27} parent=0 // pred_region
    _
  $region9: #{sdenet_forward.27} parent=0 // pred_fallthru
    _
  // Predicated region
  $region10: #{sdenet_forward.27} parent=0 // pred_check
    _
  $region11: #{sdenet_forward.27} parent=0 // pred_check_branch
    %14 = sbr.rel (0) target = $region13
  $region12: #{sdenet_forward.27} parent=0 // pred_region
    _
  $region13: #{sdenet_forward.27} parent=0 // pred_fallthru
    _
  // Predicated region
  $region14: #{sdenet_forward.27} parent=0 // pred_check
    _
  $region15: #{sdenet_forward.27} parent=0 // pred_check_branch
    %16 = sbr.rel (0) target = $region17
  $region16: #{sdenet_forward.27} parent=0 // pred_region
    _
  $region17: #{sdenet_forward.27} parent=0 // pred_fallthru
    _
  %v18 = vld [vmem:[%s1] sm:$0xff]
  %v19 = vld [vmem:[%s1 + $0x8] sm:$0xff]
  %v20 = vld [vmem:[%s0] sm:$0xf]
  %v21 = vld [vmem:[%s0 + $0x4] sm:$0xf]
  %v22 = vld [vmem:[%s0 + $0x8] sm:$0xf]
  %v23 = vld [vmem:[%s0 + $0xc] sm:$0xf]
  %v24 = vld [vmem:[%s0 + $0x10] sm:$0xf]
  %v25 = vld [vmem:[%s0 + $0x14] sm:$0xf]
  %v26 = vld [vmem:[%s0 + $0x18] sm:$0xf]
  %v27 = vld [vmem:[%s0 + $0x1c] sm:$0xf]
  %v28 = vld [vmem:[%s0 + $0x20] sm:$0xf]
  %v29 = vld [vmem:[%s0 + $0x24] sm:$0xf]
  %v30 = vld [vmem:[%s0 + $0x28] sm:$0xf]
  %v31 = vld [vmem:[%s0 + $0x2c] sm:$0xf]
  %v32 = vld [vmem:[%s0 + $0x30] sm:$0xf]
  %v33 = vld [vmem:[%s0 + $0x34] sm:$0xf]
  %v34 = vld [vmem:[%s0 + $0x38] sm:$0xf]
  %v35 = vld [vmem:[%s0 + $0x3c] sm:$0xf]
  %v36 = vld [vmem:[%s0 + $0x40] sm:$0xf]
  %v37 = vld [vmem:[%s0 + $0x44] sm:$0xf]
  %v38 = vld [vmem:[%s2] sm:$0xff]
  %v39 = vld [vmem:[%s2 + $0x8] sm:$0xff]
  %41 = vset.pattern.permute.xlu0 0
  %42 = vperm.xlu0 %41, %v38
  %v43 = vpop.permute.xlu0 %42
  %46 = vset.pattern.permute.xlu0 0
  %47 = vperm.xlu0 %46, %v39
  %v48 = vpop.permute.xlu0 %47
  %v52 = vunpack.c.l.b16 %v18
  %v53 = vunpack.c.h.b16 %v18
  %v54 = vunpack.c.l.b16 %v19
  %v55 = vunpack.c.h.b16 %v19
  %v56 = vpack.c.b16 %v54, %v52
  %v57 = vpack.c.b16 %v55, %v53
  %v77 = vunpack.c.l.b16 %v20
  %v78 = vunpack.c.l.b16 %v21
  %v79 = vunpack.c.l.b16 %v22
  %v80 = vunpack.c.l.b16 %v23
  %v81 = vunpack.c.l.b16 %v24
  %v82 = vunpack.c.l.b16 %v25
  %v83 = vunpack.c.l.b16 %v26
  %v84 = vunpack.c.l.b16 %v27
  %v85 = vunpack.c.l.b16 %v28
  %v86 = vunpack.c.l.b16 %v29
  %v87 = vunpack.c.l.b16 %v30
  %v88 = vunpack.c.l.b16 %v31
  %v89 = vunpack.c.l.b16 %v32
  %v90 = vunpack.c.l.b16 %v33
  %v91 = vunpack.c.l.b16 %v34
  %v92 = vunpack.c.l.b16 %v35
  %v93 = vunpack.c.l.b16 %v36
  %v94 = vunpack.c.l.b16 %v37
  %v95 = vpack.c.b16 %v78, %v77
  %v96 = vpack.c.b16 %v80, %v79
  %v97 = vpack.c.b16 %v82, %v81
  %v98 = vpack.c.b16 %v84, %v83
  %v99 = vpack.c.b16 %v86, %v85
  %v100 = vpack.c.b16 %v88, %v87
  %v101 = vpack.c.b16 %v90, %v89
  %v102 = vpack.c.b16 %v92, %v91
  %v103 = vpack.c.b16 %v94, %v93
  %vm113 = vcmask 130048
  %v115 = vsel %vm113, %v57, 0
  %117 = vmatprep.subr.bf16.mxu0 0
  %118 = vmatpush1.bf16.msra.mxu0 %v95
  %119 = vmatprep.subr.bf16.mxu0 0
  %120 = vmatpush1.bf16.msra.mxu0 %v96
  %121 = vmatprep.subr.bf16.mxu0 0
  %122 = vmatpush1.bf16.msra.mxu0 %v97
  %123 = vmatprep.subr.bf16.mxu0 0
  %124 = vmatpush1.bf16.msra.mxu0 %v98
  %125 = vmatprep.subr.bf16.mxu0 0
  %126 = vmatpush1.bf16.msra.mxu0 %v99
  %127 = vmatprep.subr.bf16.mxu0 0
  %128 = vmatpush1.bf16.msra.mxu0 %v100
  %129 = vmatprep.subr.bf16.mxu0 0
  %130 = vmatpush1.bf16.msra.mxu0 %v101
  %131 = vmatprep.subr.bf16.mxu0 0
  %132 = vmatpush1.bf16.msra.mxu0 %v102
  %133 = vmatprep.subr.bf16.mxu0 0
  %134 = vmatpush1.bf16.msra.mxu0 %v103
  %135 = vmatprep.subr.bf16.mxu0 0
  %136 = vmatpush1.bf16.msra.mxu0 0
  %137 = vmatprep.subr.bf16.mxu0 0
  %138 = vmatpush1.bf16.msra.mxu0 0
  %139 = vmatprep.subr.bf16.mxu0 0
  %140 = vmatpush1.bf16.msra.mxu0 0
  %141 = vmatprep.subr.bf16.mxu0 0
  %142 = vmatpush1.bf16.msra.mxu0 0
  %143 = vmatprep.subr.bf16.mxu0 0
  %144 = vmatpush1.bf16.msra.mxu0 0
  %145 = vmatprep.subr.bf16.mxu0 0
  %146 = vmatpush1.bf16.msra.mxu0 0
  %147 = vmatprep.subr.bf16.mxu0 0
  %148 = vmatpush1.bf16.msra.mxu0 0
  %149 = vmatprep.mubr.bf16.mxu0 %v115
  %150 = vmatmul.mubr.bf16.gmra.mrb[0].mxu0 %v56
  %v151 = vpop.f32.mrb[0].mxu0
  %v152 = vadd.f32 %v43, %v151
  %v153 = vpop.f32.mrb[0].mxu0
  %v154 = vpop.f32.mrb[0].mxu0
  %v155 = vadd.f32 %v48, %v154
  %v156 = vpop.f32.mrb[0].mxu0
  %157 = vdwg.mxu0
  %v158 = vld [vmem:[%s3] sm:$0xff]
  %v159 = vld [vmem:[%s3 + $0x8] sm:$0xff]
  %v160 = vadd.f32 %v152, %v158
  %v161 = vadd.f32 %v155, %v159
  %v162 = vmax.f32 %v160, 0.0
  %v163 = vmax.f32 %v161, 0.0
  %164 = vst [vmem:[%s4] sm:$0xff] %v162
  %165 = vst [vmem:[%s4 + $0x8] sm:$0xff] %v163
  // Predicated region
  $region18: #{sdenet_forward.27} parent=0 // pred_check
    _
  $region19: #{sdenet_forward.27} parent=0 // pred_check_branch
    %167 = sbr.rel (0) target = $region21
  $region20: #{sdenet_forward.27} parent=0 // pred_region
    _
  $region21: #{sdenet_forward.27} parent=0 // pred_fallthru
    _
  // Predicated region
  $region22: #{sdenet_forward.27} parent=0 // pred_check
    _
  $region23: #{sdenet_forward.27} parent=0 // pred_check_branch
    %169 = sbr.rel (0) target = $region25
  $region24: #{sdenet_forward.27} parent=0 // pred_region
    _
  $region25: #{sdenet_forward.27} parent=0 // pred_fallthru
    _

// kernel: sdenet_forward.30
$region0: #{sdenet_forward.30}
  #allocation0 [shape = 'u32[]', space=smem, size = 0x4, offset = 0x4, fixed_abs, tag = 'smem constant byte address 0x4 - core index']
  #allocation1 [shape = 'u32[144,128]{1,0:T(1,128)}', space=vmem, size = 0x12000, scoped, tag = 'internal scratch']
  %s0 = inlined_call_operand.vmem [shape: bf16[144,128], index: 0, kind: input, shape index: {}]
  %s1 = inlined_call_operand.vmem [shape: bf16[32,144], index: 1, kind: input, shape index: {}]
  %s2 = inlined_call_operand.vmem [shape: f32[32,1], index: 2, kind: input, shape index: {}]
  %s3 = inlined_call_operand.vmem [shape: f32[32,128], index: 3, kind: output, shape index: {}]
  %s4 = sld [smem:[#allocation0]]
  $region22: #{sdenet_forward.30} parent=0
    _
  %s6 = ssub.s32 1, %s4
  %s7 = scalar_select 0, %s6, %s4
  // Predicated region
  $region2: #{sdenet_forward.30} parent=0 // pred_check
    _
  $region3: #{sdenet_forward.30} parent=0 // pred_check_branch
    %9 = sbr.rel (0) target = $region5
  $region4: #{sdenet_forward.30} parent=0 // pred_region
    _
  $region5: #{sdenet_forward.30} parent=0 // pred_fallthru
    _
  // Predicated region
  $region6: #{sdenet_forward.30} parent=0 // pred_check
    _
  $region7: #{sdenet_forward.30} parent=0 // pred_check_branch
    %11 = sbr.rel (0) target = $region9
  $region8: #{sdenet_forward.30} parent=0 // pred_region
    _
  $region9: #{sdenet_forward.30} parent=0 // pred_fallthru
    _
  // Predicated region
  $region10: #{sdenet_forward.30} parent=0 // pred_check
    _
  $region11: #{sdenet_forward.30} parent=0 // pred_check_branch
    %13 = sbr.rel (0) target = $region13
  $region12: #{sdenet_forward.30} parent=0 // pred_region
    _
  $region13: #{sdenet_forward.30} parent=0 // pred_fallthru
    _
  %v15 = vld [vmem:[%s1] sm:$0xff]
  %v16 = vld [vmem:[%s1 + $0x8] sm:$0xff]
  %v17 = vld [vmem:[%s1 + $0x10] sm:$0xff]
  %v18 = vld [vmem:[%s1 + $0x18] sm:$0xff]
  %v19 = vld [vmem:[%s0] sm:$0xf]
  %v20 = vld [vmem:[%s0 + $0x4] sm:$0xf]
  %v21 = vld [vmem:[%s0 + $0x8] sm:$0xf]
  %v22 = vld [vmem:[%s0 + $0xc] sm:$0xf]
  %v23 = vld [vmem:[%s0 + $0x10] sm:$0xf]
  %v24 = vld [vmem:[%s0 + $0x14] sm:$0xf]
  %v25 = vld [vmem:[%s0 + $0x18] sm:$0xf]
  %v26 = vld [vmem:[%s0 + $0x1c] sm:$0xf]
  %v27 = vld [vmem:[%s0 + $0x20] sm:$0xf]
  %v28 = vld [vmem:[%s0 + $0x24] sm:$0xf]
  %v29 = vld [vmem:[%s0 + $0x28] sm:$0xf]
  %v30 = vld [vmem:[%s0 + $0x2c] sm:$0xf]
  %v31 = vld [vmem:[%s0 + $0x30] sm:$0xf]
  %v32 = vld [vmem:[%s0 + $0x34] sm:$0xf]
  %v33 = vld [vmem:[%s0 + $0x38] sm:$0xf]
  %v34 = vld [vmem:[%s0 + $0x3c] sm:$0xf]
  %v35 = vld [vmem:[%s0 + $0x40] sm:$0xf]
  %v36 = vld [vmem:[%s0 + $0x44] sm:$0xf]
  %v37 = vld [vmem:[%s2] sm:$0xff]
  %v38 = vld [vmem:[%s2 + $0x8] sm:$0xff]
  %v39 = vld [vmem:[%s2 + $0x10] sm:$0xff]
  %v40 = vld [vmem:[%s2 + $0x18] sm:$0xff]
  %42 = vset.pattern.permute.xlu0 0
  %43 = vperm.xlu0 %42, %v37
  %v44 = vpop.permute.xlu0 %43
  %47 = vset.pattern.permute.xlu0 0
  %48 = vperm.xlu0 %47, %v38
  %v49 = vpop.permute.xlu0 %48
  %52 = vset.pattern.permute.xlu0 0
  %53 = vperm.xlu0 %52, %v39
  %v54 = vpop.permute.xlu0 %53
  %57 = vset.pattern.permute.xlu0 0
  %58 = vperm.xlu0 %57, %v40
  %v59 = vpop.permute.xlu0 %58
  %v65 = vunpack.c.l.b16 %v15
  %v66 = vunpack.c.h.b16 %v15
  %v67 = vunpack.c.l.b16 %v16
  %v68 = vunpack.c.h.b16 %v16
  %v69 = vunpack.c.l.b16 %v17
  %v70 = vunpack.c.h.b16 %v17
  %v71 = vunpack.c.l.b16 %v18
  %v72 = vunpack.c.h.b16 %v18
  %v73 = vpack.c.b16 %v67, %v65
  %v74 = vpack.c.b16 %v68, %v66
  %v75 = vpack.c.b16 %v71, %v69
  %v76 = vpack.c.b16 %v72, %v70
  %v97 = vunpack.c.l.b16 %v19
  %v98 = vunpack.c.l.b16 %v20
  %v99 = vunpack.c.l.b16 %v21
  %v100 = vunpack.c.l.b16 %v22
  %v101 = vunpack.c.l.b16 %v23
  %v102 = vunpack.c.l.b16 %v24
  %v103 = vunpack.c.l.b16 %v25
  %v104 = vunpack.c.l.b16 %v26
  %v105 = vunpack.c.l.b16 %v27
  %v106 = vunpack.c.l.b16 %v28
  %v107 = vunpack.c.l.b16 %v29
  %v108 = vunpack.c.l.b16 %v30
  %v109 = vunpack.c.l.b16 %v31
  %v110 = vunpack.c.l.b16 %v32
  %v111 = vunpack.c.l.b16 %v33
  %v112 = vunpack.c.l.b16 %v34
  %v113 = vunpack.c.l.b16 %v35
  %v114 = vunpack.c.l.b16 %v36
  %v115 = vpack.c.b16 %v98, %v97
  %v116 = vpack.c.b16 %v100, %v99
  %v117 = vpack.c.b16 %v102, %v101
  %v118 = vpack.c.b16 %v104, %v103
  %v119 = vpack.c.b16 %v106, %v105
  %v120 = vpack.c.b16 %v108, %v107
  %v121 = vpack.c.b16 %v110, %v109
  %v122 = vpack.c.b16 %v112, %v111
  %v123 = vpack.c.b16 %v114, %v113
  %vm133 = vcmask 130048
  %v135 = vsel %vm133, %v74, 0
  %v138 = vsel %vm133, %v76, 0
  %140 = vmatprep.subr.bf16.mxu0 0
  %141 = vmatpush1.bf16.msra.mxu0 %v115
  %142 = vmatprep.subr.bf16.mxu0 0
  %143 = vmatpush1.bf16.msra.mxu0 %v116
  %144 = vmatprep.subr.bf16.mxu0 0
  %145 = vmatpush1.bf16.msra.mxu0 %v117
  %146 = vmatprep.subr.bf16.mxu0 0
  %147 = vmatpush1.bf16.msra.mxu0 %v118
  %148 = vmatprep.subr.bf16.mxu0 0
  %149 = vmatpush1.bf16.msra.mxu0 %v119
  %150 = vmatprep.subr.bf16.mxu0 0
  %151 = vmatpush1.bf16.msra.mxu0 %v120
  %152 = vmatprep.subr.bf16.mxu0 0
  %153 = vmatpush1.bf16.msra.mxu0 %v121
  %154 = vmatprep.subr.bf16.mxu0 0
  %155 = vmatpush1.bf16.msra.mxu0 %v122
  %156 = vmatprep.subr.bf16.mxu0 0
  %157 = vmatpush1.bf16.msra.mxu0 %v123
  %158 = vmatprep.subr.bf16.mxu0 0
  %159 = vmatpush1.bf16.msra.mxu0 0
  %160 = vmatprep.subr.bf16.mxu0 0
  %161 = vmatpush1.bf16.msra.mxu0 0
  %162 = vmatprep.subr.bf16.mxu0 0
  %163 = vmatpush1.bf16.msra.mxu0 0
  %164 = vmatprep.subr.bf16.mxu0 0
  %165 = vmatpush1.bf16.msra.mxu0 0
  %166 = vmatprep.subr.bf16.mxu0 0
  %167 = vmatpush1.bf16.msra.mxu0 0
  %168 = vmatprep.subr.bf16.mxu0 0
  %169 = vmatpush1.bf16.msra.mxu0 0
  %170 = vmatprep.subr.bf16.mxu0 0
  %171 = vmatpush1.bf16.msra.mxu0 0
  %172 = vmatprep.mubr.bf16.mxu0 %v135
  %173 = vmatmul.mubr.bf16.gmra.mrb[0].mxu0 %v73
  %v174 = vpop.f32.mrb[0].mxu0
  %v175 = vadd.f32 %v44, %v174
  %v176 = vpop.f32.mrb[0].mxu0
  %v177 = vpop.f32.mrb[0].mxu0
  %v178 = vadd.f32 %v49, %v177
  %v179 = vpop.f32.mrb[0].mxu0
  %180 = vmatprep.mubr.bf16.mxu0 %v138
  %181 = vmatmul.mubr.bf16.gmra.mrb[0].mxu0 %v75
  %v182 = vpop.f32.mrb[0].mxu0
  %v183 = vadd.f32 %v54, %v182
  %v184 = vpop.f32.mrb[0].mxu0
  %v185 = vpop.f32.mrb[0].mxu0
  %v186 = vadd.f32 %v59, %v185
  %v187 = vpop.f32.mrb[0].mxu0
  %188 = vdwg.mxu0
  %v189 = vmax.f32 %v175, 0.0
  %v190 = vmax.f32 %v178, 0.0
  %v191 = vmax.f32 %v183, 0.0
  %v192 = vmax.f32 %v186, 0.0
  %193 = vst [vmem:[%s3] sm:$0xff] %v189
  %194 = vst [vmem:[%s3 + $0x8] sm:$0xff] %v190
  %195 = vst [vmem:[%s3 + $0x10] sm:$0xff] %v191
  %196 = vst [vmem:[%s3 + $0x18] sm:$0xff] %v192
  // Predicated region
  $region14: #{sdenet_forward.30} parent=0 // pred_check
    _
  $region15: #{sdenet_forward.30} parent=0 // pred_check_branch
    %198 = sbr.rel (0) target = $region17
  $region16: #{sdenet_forward.30} parent=0 // pred_region
    _
  $region17: #{sdenet_forward.30} parent=0 // pred_fallthru
    _
  // Predicated region
  $region18: #{sdenet_forward.30} parent=0 // pred_check
    _
  $region19: #{sdenet_forward.30} parent=0 // pred_check_branch
    %200 = sbr.rel (0) target = $region21
  $region20: #{sdenet_forward.30} parent=0 // pred_region
    _
  $region21: #{sdenet_forward.30} parent=0 // pred_fallthru
    _

// kernel: sdenet_forward.31
$region0: #{sdenet_forward.31}
  #allocation0 [shape = 'u32[]', space=smem, size = 0x4, offset = 0x4, fixed_abs, tag = 'smem constant byte address 0x4 - core index']
  #allocation1 [shape = 'u32[144,128]{1,0:T(1,128)}', space=vmem, size = 0x12000, scoped, tag = 'internal scratch']
  %s0 = inlined_call_operand.vmem [shape: bf16[16,128], index: 0, kind: input, shape index: {}]
  %s1 = inlined_call_operand.vmem [shape: bf16[32,16], index: 1, kind: input, shape index: {}]
  %s2 = inlined_call_operand.vmem [shape: f32[32,1], index: 2, kind: input, shape index: {}]
  %s3 = inlined_call_operand.vmem [shape: f32[32,128], index: 3, kind: output, shape index: {}]
  %s4 = sld [smem:[#allocation0]]
  $region22: #{sdenet_forward.31} parent=0
    _
  %s6 = ssub.s32 1, %s4
  %s7 = scalar_select 0, %s6, %s4
  // Predicated region
  $region2: #{sdenet_forward.31} parent=0 // pred_check
    _
  $region3: #{sdenet_forward.31} parent=0 // pred_check_branch
    %9 = sbr.rel (0) target = $region5
  $region4: #{sdenet_forward.31} parent=0 // pred_region
    _
  $region5: #{sdenet_forward.31} parent=0 // pred_fallthru
    _
  // Predicated region
  $region6: #{sdenet_forward.31} parent=0 // pred_check
    _
  $region7: #{sdenet_forward.31} parent=0 // pred_check_branch
    %11 = sbr.rel (0) target = $region9
  $region8: #{sdenet_forward.31} parent=0 // pred_region
    _
  $region9: #{sdenet_forward.31} parent=0 // pred_fallthru
    _
  // Predicated region
  $region10: #{sdenet_forward.31} parent=0 // pred_check
    _
  $region11: #{sdenet_forward.31} parent=0 // pred_check_branch
    %13 = sbr.rel (0) target = $region13
  $region12: #{sdenet_forward.31} parent=0 // pred_region
    _
  $region13: #{sdenet_forward.31} parent=0 // pred_fallthru
    _
  %v15 = vld [vmem:[%s1] sm:$0xf]
  %v16 = vld [vmem:[%s1 + $0x4] sm:$0xf]
  %v17 = vld [vmem:[%s1 + $0x8] sm:$0xf]
  %v18 = vld [vmem:[%s1 + $0xc] sm:$0xf]
  %v19 = vld [vmem:[%s0] sm:$0xf]
  %v20 = vld [vmem:[%s0 + $0x4] sm:$0xf]
  %v21 = vld [vmem:[%s2] sm:$0xff]
  %v22 = vld [vmem:[%s2 + $0x8] sm:$0xff]
  %v23 = vld [vmem:[%s2 + $0x10] sm:$0xff]
  %v24 = vld [vmem:[%s2 + $0x18] sm:$0xff]
  %26 = vset.pattern.permute.xlu0 0
  %27 = vperm.xlu0 %26, %v21
  %v28 = vpop.permute.xlu0 %27
  %31 = vset.pattern.permute.xlu0 0
  %32 = vperm.xlu0 %31, %v22
  %v33 = vpop.permute.xlu0 %32
  %36 = vset.pattern.permute.xlu0 0
  %37 = vperm.xlu0 %36, %v23
  %v38 = vpop.permute.xlu0 %37
  %41 = vset.pattern.permute.xlu0 0
  %42 = vperm.xlu0 %41, %v24
  %v43 = vpop.permute.xlu0 %42
  %v49 = vunpack.c.l.b16 %v15
  %v50 = vunpack.c.l.b16 %v16
  %v51 = vunpack.c.l.b16 %v17
  %v52 = vunpack.c.l.b16 %v18
  %v53 = vpack.c.b16 %v50, %v49
  %v54 = vpack.c.b16 %v52, %v51
  %v57 = vunpack.c.l.b16 %v19
  %v58 = vunpack.c.l.b16 %v20
  %v59 = vpack.c.b16 %v58, %v57
  %vm61 = vcmask 130048
  %v63 = vsel %vm61, %v53, 0
  %v66 = vsel %vm61, %v54, 0
  %68 = vmatprep.subr.bf16.mxu0 0
  %69 = vmatpush1.bf16.msra.mxu0 %v59
  %70 = vmatprep.subr.bf16.mxu0 0
  %71 = vmatpush1.bf16.msra.mxu0 0
  %72 = vmatprep.subr.bf16.mxu0 0
  %73 = vmatpush1.bf16.msra.mxu0 0
  %74 = vmatprep.subr.bf16.mxu0 0
  %75 = vmatpush1.bf16.msra.mxu0 0
  %76 = vmatprep.subr.bf16.mxu0 0
  %77 = vmatpush1.bf16.msra.mxu0 0
  %78 = vmatprep.subr.bf16.mxu0 0
  %79 = vmatpush1.bf16.msra.mxu0 0
  %80 = vmatprep.subr.bf16.mxu0 0
  %81 = vmatpush1.bf16.msra.mxu0 0
  %82 = vmatprep.subr.bf16.mxu0 0
  %83 = vmatpush1.bf16.msra.mxu0 0
  %84 = vmatprep.subr.bf16.mxu0 0
  %85 = vmatpush1.bf16.msra.mxu0 0
  %86 = vmatprep.subr.bf16.mxu0 0
  %87 = vmatpush1.bf16.msra.mxu0 0
  %88 = vmatprep.subr.bf16.mxu0 0
  %89 = vmatpush1.bf16.msra.mxu0 0
  %90 = vmatprep.subr.bf16.mxu0 0
  %91 = vmatpush1.bf16.msra.mxu0 0
  %92 = vmatprep.subr.bf16.mxu0 0
  %93 = vmatpush1.bf16.msra.mxu0 0
  %94 = vmatprep.subr.bf16.mxu0 0
  %95 = vmatpush1.bf16.msra.mxu0 0
  %96 = vmatprep.subr.bf16.mxu0 0
  %97 = vmatpush1.bf16.msra.mxu0 0
  %98 = vmatprep.subr.bf16.mxu0 0
  %99 = vmatpush1.bf16.msra.mxu0 0
  %100 = vmatprep.mubr.bf16.mxu0 0
  %101 = vmatmul.mubr.bf16.gmra.mrb[0].mxu0 %v63
  %v102 = vpop.f32.mrb[0].mxu0
  %v103 = vadd.f32 %v28, %v102
  %v104 = vpop.f32.mrb[0].mxu0
  %v105 = vpop.f32.mrb[0].mxu0
  %v106 = vadd.f32 %v33, %v105
  %v107 = vpop.f32.mrb[0].mxu0
  %108 = vmatprep.mubr.bf16.mxu0 0
  %109 = vmatmul.mubr.bf16.gmra.mrb[0].mxu0 %v66
  %v110 = vpop.f32.mrb[0].mxu0
  %v111 = vadd.f32 %v38, %v110
  %v112 = vpop.f32.mrb[0].mxu0
  %v113 = vpop.f32.mrb[0].mxu0
  %v114 = vadd.f32 %v43, %v113
  %v115 = vpop.f32.mrb[0].mxu0
  %116 = vdwg.mxu0
  %117 = vst [vmem:[%s3] sm:$0xff] %v103
  %118 = vst [vmem:[%s3 + $0x8] sm:$0xff] %v106
  %119 = vst [vmem:[%s3 + $0x10] sm:$0xff] %v111
  %120 = vst [vmem:[%s3 + $0x18] sm:$0xff] %v114
  // Predicated region
  $region14: #{sdenet_forward.31} parent=0 // pred_check
    _
  $region15: #{sdenet_forward.31} parent=0 // pred_check_branch
    %122 = sbr.rel (0) target = $region17
  $region16: #{sdenet_forward.31} parent=0 // pred_region
    _
  $region17: #{sdenet_forward.31} parent=0 // pred_fallthru
    _
  // Predicated region
  $region18: #{sdenet_forward.31} parent=0 // pred_check
    _
  $region19: #{sdenet_forward.31} parent=0 // pred_check_branch
    %124 = sbr.rel (0) target = $region21
  $region20: #{sdenet_forward.31} parent=0 // pred_region
    _
  $region21: #{sdenet_forward.31} parent=0 // pred_fallthru
    _

// kernel: sdenet_forward.32
$region0: #{sdenet_forward.32}
  #allocation0 [shape = 'u32[]', space=smem, size = 0x4, offset = 0x4, fixed_abs, tag = 'smem constant byte address 0x4 - core index']
  #allocation1 [shape = 'u32[144,128]{1,0:T(1,128)}', space=vmem, size = 0x12000, scoped, tag = 'internal scratch']
  %s0 = inlined_call_operand.vmem [shape: bf16[288,128], index: 0, kind: input, shape index: {}]
  %s1 = inlined_call_operand.vmem [shape: bf16[32,288], index: 1, kind: input, shape index: {}]
  %s2 = inlined_call_operand.vmem [shape: f32[32,1], index: 2, kind: input, shape index: {}]
  %s3 = inlined_call_operand.vmem [shape: f32[32,128], index: 3, kind: input, shape index: {}]
  %s4 = inlined_call_operand.vmem [shape: f32[32,128], index: 4, kind: output, shape index: {}]
  %s5 = sld [smem:[#allocation0]]
  $region26: #{sdenet_forward.32} parent=0
    _
  %s7 = ssub.s32 1, %s5
  %s8 = scalar_select 0, %s7, %s5
  // Predicated region
  $region2: #{sdenet_forward.32} parent=0 // pred_check
    _
  $region3: #{sdenet_forward.32} parent=0 // pred_check_branch
    %10 = sbr.rel (0) target = $region5
  $region4: #{sdenet_forward.32} parent=0 // pred_region
    _
  $region5: #{sdenet_forward.32} parent=0 // pred_fallthru
    _
  // Predicated region
  $region6: #{sdenet_forward.32} parent=0 // pred_check
    _
  $region7: #{sdenet_forward.32} parent=0 // pred_check_branch
    %12 = sbr.rel (0) target = $region9
  $region8: #{sdenet_forward.32} parent=0 // pred_region
    _
  $region9: #{sdenet_forward.32} parent=0 // pred_fallthru
    _
  // Predicated region
  $region10: #{sdenet_forward.32} parent=0 // pred_check
    _
  $region11: #{sdenet_forward.32} parent=0 // pred_check_branch
    %14 = sbr.rel (0) target = $region13
  $region12: #{sdenet_forward.32} parent=0 // pred_region
    _
  $region13: #{sdenet_forward.32} parent=0 // pred_fallthru
    _
  // Predicated region
  $region14: #{sdenet_forward.32} parent=0 // pred_check
    _
  $region15: #{sdenet_forward.32} parent=0 // pred_check_branch
    %16 = sbr.rel (0) target = $region17
  $region16: #{sdenet_forward.32} parent=0 // pred_region
    _
  $region17: #{sdenet_forward.32} parent=0 // pred_fallthru
    _
  %v18 = vld [vmem:[%s1] sm:$0xff]
  %v19 = vld [vmem:[%s1 + $0x8] sm:$0xf]
  %v20 = vld [vmem:[%s1 + $0xc] sm:$0xff]
  %v21 = vld [vmem:[%s1 + $0x14] sm:$0xf]
  %v22 = vld [vmem:[%s1 + $0x18] sm:$0xff]
  %v23 = vld [vmem:[%s1 + $0x20] sm:$0xf]
  %v24 = vld [vmem:[%s1 + $0x24] sm:$0xff]
  %v25 = vld [vmem:[%s1 + $0x2c] sm:$0xf]
  %v26 = vld [vmem:[%s0] sm:$0xf]
  %v27 = vld [vmem:[%s0 + $0x4] sm:$0xf]
  %v28 = vld [vmem:[%s0 + $0x8] sm:$0xf]
  %v29 = vld [vmem:[%s0 + $0xc] sm:$0xf]
  %v30 = vld [vmem:[%s0 + $0x10] sm:$0xf]
  %v31 = vld [vmem:[%s0 + $0x14] sm:$0xf]
  %v32 = vld [vmem:[%s0 + $0x18] sm:$0xf]
  %v33 = vld [vmem:[%s0 + $0x1c] sm:$0xf]
  %v34 = vld [vmem:[%s0 + $0x20] sm:$0xf]
  %v35 = vld [vmem:[%s0 + $0x24] sm:$0xf]
  %v36 = vld [vmem:[%s0 + $0x28] sm:$0xf]
  %v37 = vld [vmem:[%s0 + $0x2c] sm:$0xf]
  %v38 = vld [vmem:[%s0 + $0x30] sm:$0xf]
  %v39 = vld [vmem:[%s0 + $0x34] sm:$0xf]
  %v40 = vld [vmem:[%s0 + $0x38] sm:$0xf]
  %v41 = vld [vmem:[%s0 + $0x3c] sm:$0xf]
  %v42 = vld [vmem:[%s0 + $0x40] sm:$0xf]
  %v43 = vld [vmem:[%s0 + $0x44] sm:$0xf]
  %v44 = vld [vmem:[%s0 + $0x48] sm:$0xf]
  %v45 = vld [vmem:[%s0 + $0x4c] sm:$0xf]
  %v46 = vld [vmem:[%s0 + $0x50] sm:$0xf]
  %v47 = vld [vmem:[%s0 + $0x54] sm:$0xf]
  %v48 = vld [vmem:[%s0 + $0x58] sm:$0xf]
  %v49 = vld [vmem:[%s0 + $0x5c] sm:$0xf]
  %v50 = vld [vmem:[%s0 + $0x60] sm:$0xf]
  %v51 = vld [vmem:[%s0 + $0x64] sm:$0xf]
  %v52 = vld [vmem:[%s0 + $0x68] sm:$0xf]
  %v53 = vld [vmem:[%s0 + $0x6c] sm:$0xf]
  %v54 = vld [vmem:[%s0 + $0x70] sm:$0xf]
  %v55 = vld [vmem:[%s0 + $0x74] sm:$0xf]
  %v56 = vld [vmem:[%s0 + $0x78] sm:$0xf]
  %v57 = vld [vmem:[%s0 + $0x7c] sm:$0xf]
  %v58 = vld [vmem:[%s0 + $0x80] sm:$0xf]
  %v59 = vld [vmem:[%s0 + $0x84] sm:$0xf]
  %v60 = vld [vmem:[%s0 + $0x88] sm:$0xf]
  %v61 = vld [vmem:[%s0 + $0x8c] sm:$0xf]
  %v62 = vld [vmem:[%s2] sm:$0xff]
  %v63 = vld [vmem:[%s2 + $0x8] sm:$0xff]
  %v64 = vld [vmem:[%s2 + $0x10] sm:$0xff]
  %v65 = vld [vmem:[%s2 + $0x18] sm:$0xff]
  %67 = vset.pattern.permute.xlu0 0
  %68 = vperm.xlu0 %67, %v62
  %v69 = vpop.permute.xlu0 %68
  %72 = vset.pattern.permute.xlu0 0
  %73 = vperm.xlu0 %72, %v63
  %v74 = vpop.permute.xlu0 %73
  %77 = vset.pattern.permute.xlu0 0
  %78 = vperm.xlu0 %77, %v64
  %v79 = vpop.permute.xlu0 %78
  %82 = vset.pattern.permute.xlu0 0
  %83 = vperm.xlu0 %82, %v65
  %v84 = vpop.permute.xlu0 %83
  %v94 = vunpack.c.l.b16 %v18
  %v95 = vunpack.c.h.b16 %v18
  %v96 = vunpack.c.l.b16 %v19
  %v97 = vunpack.c.l.b16 %v20
  %v98 = vunpack.c.h.b16 %v20
  %v99 = vunpack.c.l.b16 %v21
  %v100 = vunpack.c.l.b16 %v22
  %v101 = vunpack.c.h.b16 %v22
  %v102 = vunpack.c.l.b16 %v23
  %v103 = vunpack.c.l.b16 %v24
  %v104 = vunpack.c.h.b16 %v24
  %v105 = vunpack.c.l.b16 %v25
  %v106 = vpack.c.b16 %v97, %v94
  %v107 = vpack.c.b16 %v98, %v95
  %v108 = vpack.c.b16 %v99, %v96
  %v109 = vpack.c.b16 %v103, %v100
  %v110 = vpack.c.b16 %v104, %v101
  %v111 = vpack.c.b16 %v105, %v102
  %v152 = vunpack.c.l.b16 %v26
  %v153 = vunpack.c.l.b16 %v27
  %v154 = vunpack.c.l.b16 %v28
  %v155 = vunpack.c.l.b16 %v29
  %v156 = vunpack.c.l.b16 %v30
  %v157 = vunpack.c.l.b16 %v31
  %v158 = vunpack.c.l.b16 %v32
  %v159 = vunpack.c.l.b16 %v33
  %v160 = vunpack.c.l.b16 %v34
  %v161 = vunpack.c.l.b16 %v35
  %v162 = vunpack.c.l.b16 %v36
  %v163 = vunpack.c.l.b16 %v37
  %v164 = vunpack.c.l.b16 %v38
  %v165 = vunpack.c.l.b16 %v39
  %v166 = vunpack.c.l.b16 %v40
  %v167 = vunpack.c.l.b16 %v41
  %v168 = vunpack.c.l.b16 %v42
  %v169 = vunpack.c.l.b16 %v43
  %v170 = vunpack.c.l.b16 %v44
  %v171 = vunpack.c.l.b16 %v45
  %v172 = vunpack.c.l.b16 %v46
  %v173 = vunpack.c.l.b16 %v47
  %v174 = vunpack.c.l.b16 %v48
  %v175 = vunpack.c.l.b16 %v49
  %v176 = vunpack.c.l.b16 %v50
  %v177 = vunpack.c.l.b16 %v51
  %v178 = vunpack.c.l.b16 %v52
  %v179 = vunpack.c.l.b16 %v53
  %v180 = vunpack.c.l.b16 %v54
  %v181 = vunpack.c.l.b16 %v55
  %v182 = vunpack.c.l.b16 %v56
  %v183 = vunpack.c.l.b16 %v57
  %v184 = vunpack.c.l.b16 %v58
  %v185 = vunpack.c.l.b16 %v59
  %v186 = vunpack.c.l.b16 %v60
  %v187 = vunpack.c.l.b16 %v61
  %v188 = vpack.c.b16 %v153, %v152
  %v189 = vpack.c.b16 %v155, %v154
  %v190 = vpack.c.b16 %v157, %v156
  %v191 = vpack.c.b16 %v159, %v158
  %v192 = vpack.c.b16 %v161, %v160
  %v193 = vpack.c.b16 %v163, %v162
  %v194 = vpack.c.b16 %v165, %v164
  %v195 = vpack.c.b16 %v167, %v166
  %v196 = vpack.c.b16 %v169, %v168
  %v197 = vpack.c.b16 %v171, %v170
  %v198 = vpack.c.b16 %v173, %v172
  %v199 = vpack.c.b16 %v175, %v174
  %v200 = vpack.c.b16 %v177, %v176
  %v201 = vpack.c.b16 %v179, %v178
  %v202 = vpack.c.b16 %v181, %v180
  %v203 = vpack.c.b16 %v183, %v182
  %v204 = vpack.c.b16 %v185, %v184
  %v205 = vpack.c.b16 %v187, %v186
  %vm224 = vcmask 261120
  %v226 = vsel %vm224, %v108, 0
  %v229 = vsel %vm224, %v111, 0
  %231 = vmatprep.subr.bf16.mxu0 0
  %232 = vmatpush1.bf16.msra.mxu0 %v188
  %233 = vmatprep.subr.bf16.mxu0 0
  %234 = vmatpush1.bf16.msra.mxu0 %v189
  %235 = vmatprep.subr.bf16.mxu0 0
  %236 = vmatpush1.bf16.msra.mxu0 %v190
  %237 = vmatprep.subr.bf16.mxu0 0
  %238 = vmatpush1.bf16.msra.mxu0 %v191
  %239 = vmatprep.subr.bf16.mxu0 0
  %240 = vmatpush1.bf16.msra.mxu0 %v192
  %241 = vmatprep.subr.bf16.mxu0 0
  %242 = vmatpush1.bf16.msra.mxu0 %v193
  %243 = vmatprep.subr.bf16.mxu0 0
  %244 = vmatpush1.bf16.msra.mxu0 %v194
  %245 = vmatprep.subr.bf16.mxu0 0
  %246 = vmatpush1.bf16.msra.mxu0 %v195
  %247 = vmatprep.subr.bf16.mxu0 0
  %248 = vmatpush1.bf16.msra.mxu0 %v196
  %249 = vmatprep.subr.bf16.mxu0 0
  %250 = vmatpush1.bf16.msra.mxu0 %v197
  %251 = vmatprep.subr.bf16.mxu0 0
  %252 = vmatpush1.bf16.msra.mxu0 %v198
  %253 = vmatprep.subr.bf16.mxu0 0
  %254 = vmatpush1.bf16.msra.mxu0 %v199
  %255 = vmatprep.subr.bf16.mxu0 0
  %256 = vmatpush1.bf16.msra.mxu0 %v200
  %257 = vmatprep.subr.bf16.mxu0 0
  %258 = vmatpush1.bf16.msra.mxu0 %v201
  %259 = vmatprep.subr.bf16.mxu0 0
  %260 = vmatpush1.bf16.msra.mxu0 %v202
  %261 = vmatprep.subr.bf16.mxu0 0
  %262 = vmatpush1.bf16.msra.mxu0 %v203
  %263 = vmatprep.mubr.bf16.mxu0 %v107
  %264 = vmatmul.mubr.bf16.gmra.mrb[0].mxu0 %v106
  %v265 = vpop.f32.mrb[0].mxu0
  %v266 = vadd.f32 %v69, %v265
  %v267 = vpop.f32.mrb[0].mxu0
  %v268 = vpop.f32.mrb[0].mxu0
  %v269 = vadd.f32 %v74, %v268
  %v270 = vpop.f32.mrb[0].mxu0
  %271 = vmatprep.mubr.bf16.mxu0 %v110
  %272 = vmatmul.mubr.bf16.gmra.mrb[0].mxu0 %v109
  %v273 = vpop.f32.mrb[0].mxu0
  %v274 = vadd.f32 %v79, %v273
  %v275 = vpop.f32.mrb[0].mxu0
  %v276 = vpop.f32.mrb[0].mxu0
  %v277 = vadd.f32 %v84, %v276
  %v278 = vpop.f32.mrb[0].mxu0
  %279 = vdwg.mxu0
  %280 = vmatprep.subr.bf16.mxu0 0
  %281 = vmatpush1.bf16.msra.mxu0 %v204
  %282 = vmatprep.subr.bf16.mxu0 0
  %283 = vmatpush1.bf16.msra.mxu0 %v205
  %284 = vmatprep.subr.bf16.mxu0 0
  %285 = vmatpush1.bf16.msra.mxu0 0
  %286 = vmatprep.subr.bf16.mxu0 0
  %287 = vmatpush1.bf16.msra.mxu0 0
  %288 = vmatprep.subr.bf16.mxu0 0
  %289 = vmatpush1.bf16.msra.mxu0 0
  %290 = vmatprep.subr.bf16.mxu0 0
  %291 = vmatpush1.bf16.msra.mxu0 0
  %292 = vmatprep.subr.bf16.mxu0 0
  %293 = vmatpush1.bf16.msra.mxu0 0
  %294 = vmatprep.subr.bf16.mxu0 0
  %295 = vmatpush1.bf16.msra.mxu0 0
  %296 = vmatprep.subr.bf16.mxu0 0
  %297 = vmatpush1.bf16.msra.mxu0 0
  %298 = vmatprep.subr.bf16.mxu0 0
  %299 = vmatpush1.bf16.msra.mxu0 0
  %300 = vmatprep.subr.bf16.mxu0 0
  %301 = vmatpush1.bf16.msra.mxu0 0
  %302 = vmatprep.subr.bf16.mxu0 0
  %303 = vmatpush1.bf16.msra.mxu0 0
  %304 = vmatprep.subr.bf16.mxu0 0
  %305 = vmatpush1.bf16.msra.mxu0 0
  %306 = vmatprep.subr.bf16.mxu0 0
  %307 = vmatpush1.bf16.msra.mxu0 0
  %308 = vmatprep.subr.bf16.mxu0 0
  %309 = vmatpush1.bf16.msra.mxu0 0
  %310 = vmatprep.subr.bf16.mxu0 0
  %311 = vmatpush1.bf16.msra.mxu0 0
  %312 = vmatprep.mubr.bf16.mxu0 0
  %313 = vmatmul.mubr.bf16.gmra.mrb[0].mxu0 %v226
  %v314 = vpop.f32.mrb[0].mxu0
  %v315 = vadd.f32 %v266, %v314
  %v316 = vpop.f32.mrb[0].mxu0
  %v317 = vpop.f32.mrb[0].mxu0
  %v318 = vadd.f32 %v269, %v317
  %v319 = vpop.f32.mrb[0].mxu0
  %320 = vmatprep.mubr.bf16.mxu0 0
  %321 = vmatmul.mubr.bf16.gmra.mrb[0].mxu0 %v229
  %v322 = vpop.f32.mrb[0].mxu0
  %v323 = vadd.f32 %v274, %v322
  %v324 = vpop.f32.mrb[0].mxu0
  %v325 = vpop.f32.mrb[0].mxu0
  %v326 = vadd.f32 %v277, %v325
  %v327 = vpop.f32.mrb[0].mxu0
  %328 = vdwg.mxu0
  %v329 = vld [vmem:[%s3] sm:$0xff]
  %v330 = vld [vmem:[%s3 + $0x8] sm:$0xff]
  %v331 = vld [vmem:[%s3 + $0x10] sm:$0xff]
  %v332 = vld [vmem:[%s3 + $0x18] sm:$0xff]
  %v333 = vadd.f32 %v315, %v329
  %v334 = vadd.f32 %v318, %v330
  %v335 = vadd.f32 %v323, %v331
  %v336 = vadd.f32 %v326, %v332
  %v337 = vmax.f32 %v333, 0.0
  %v338 = vmax.f32 %v334, 0.0
  %v339 = vmax.f32 %v335, 0.0
  %v340 = vmax.f32 %v336, 0.0
  %341 = vst [vmem:[%s4] sm:$0xff] %v337
  %342 = vst [vmem:[%s4 + $0x8] sm:$0xff] %v338
  %343 = vst [vmem:[%s4 + $0x10] sm:$0xff] %v339
  %344 = vst [vmem:[%s4 + $0x18] sm:$0xff] %v340
  // Predicated region
  $region18: #{sdenet_forward.32} parent=0 // pred_check
    _
  $region19: #{sdenet_forward.32} parent=0 // pred_check_branch
    %346 = sbr.rel (0) target = $region21
  $region20: #{sdenet_forward.32} parent=0 // pred_region
    _
  $region21: #{sdenet_forward.32} parent=0 // pred_fallthru
    _
  // Predicated region
  $region22: #{sdenet_forward.32} parent=0 // pred_check
    _
  $region23: #{sdenet_forward.32} parent=0 // pred_check_branch
    %348 = sbr.rel (0) target = $region25
  $region24: #{sdenet_forward.32} parent=0 // pred_region
    _
  $region25: #{sdenet_forward.32} parent=0 // pred_fallthru
    _

// kernel: sdenet_forward.42
$region0: #{sdenet_forward.42}
  #allocation0 [shape = 'u32[]', space=smem, size = 0x4, offset = 0x4, fixed_abs, tag = 'smem constant byte address 0x4 - core index']
  #allocation1 [shape = 'u32[144,128]{1,0:T(1,128)}', space=vmem, size = 0x12000, scoped, tag = 'internal scratch']
  %s0 = inlined_call_operand.vmem [shape: bf16[1728,128], index: 0, kind: input, shape index: {}]
  %s1 = inlined_call_operand.vmem [shape: bf16[16,1728], index: 1, kind: input, shape index: {}]
  %s2 = inlined_call_operand.vmem [shape: f32[16,1], index: 2, kind: input, shape index: {}]
  %s3 = inlined_call_operand.vmem [shape: f32[16,128], index: 3, kind: output, shape index: {}]
  %s4 = sld [smem:[#allocation0]]
  $region22: #{sdenet_forward.42} parent=0
    _
  %s6 = ssub.s32 1, %s4
  %s7 = scalar_select 0, %s6, %s4
  // Predicated region
  $region2: #{sdenet_forward.42} parent=0 // pred_check
    _
  $region3: #{sdenet_forward.42} parent=0 // pred_check_branch
    %9 = sbr.rel (0) target = $region5
  $region4: #{sdenet_forward.42} parent=0 // pred_region
    _
  $region5: #{sdenet_forward.42} parent=0 // pred_fallthru
    _
  // Predicated region
  $region6: #{sdenet_forward.42} parent=0 // pred_check
    _
  $region7: #{sdenet_forward.42} parent=0 // pred_check_branch
    %11 = sbr.rel (0) target = $region9
  $region8: #{sdenet_forward.42} parent=0 // pred_region
    _
  $region9: #{sdenet_forward.42} parent=0 // pred_fallthru
    _
  // Predicated region
  $region10: #{sdenet_forward.42} parent=0 // pred_check
    _
  $region11: #{sdenet_forward.42} parent=0 // pred_check_branch
    %13 = sbr.rel (0) target = $region13
  $region12: #{sdenet_forward.42} parent=0 // pred_region
    _
  $region13: #{sdenet_forward.42} parent=0 // pred_fallthru
    _
  %v15 = vld [vmem:[%s1] sm:$0xff]
  %v16 = vld [vmem:[%s1 + $0x8] sm:$0xff]
  %v17 = vld [vmem:[%s1 + $0x10] sm:$0xff]
  %v18 = vld [vmem:[%s1 + $0x18] sm:$0xff]
  %v19 = vld [vmem:[%s1 + $0x20] sm:$0xff]
  %v20 = vld [vmem:[%s1 + $0x28] sm:$0xff]
  %v21 = vld [vmem:[%s1 + $0x30] sm:$0xff]
  %v22 = vld [vmem:[%s1 + $0x38] sm:$0xff]
  %v23 = vld [vmem:[%s1 + $0x40] sm:$0xff]
  %v24 = vld [vmem:[%s1 + $0x48] sm:$0xff]
  %v25 = vld [vmem:[%s1 + $0x50] sm:$0xff]
  %v26 = vld [vmem:[%s1 + $0x58] sm:$0xff]
  %v27 = vld [vmem:[%s1 + $0x60] sm:$0xff]
  %v28 = vld [vmem:[%s1 + $0x68] sm:$0xff]
  %v29 = vld [vmem:[%s0] sm:$0xf]
  %v30 = vld [vmem:[%s0 + $0x4] sm:$0xf]
  %v31 = vld [vmem:[%s0 + $0x8] sm:$0xf]
  %v32 = vld [vmem:[%s0 + $0xc] sm:$0xf]
  %v33 = vld [vmem:[%s0 + $0x10] sm:$0xf]
  %v34 = vld [vmem:[%s0 + $0x14] sm:$0xf]
  %v35 = vld [vmem:[%s0 + $0x18] sm:$0xf]
  %v36 = vld [vmem:[%s0 + $0x1c] sm:$0xf]
  %v37 = vld [vmem:[%s0 + $0x20] sm:$0xf]
  %v38 = vld [vmem:[%s0 + $0x24] sm:$0xf]
  %v39 = vld [vmem:[%s0 + $0x28] sm:$0xf]
  %v40 = vld [vmem:[%s0 + $0x2c] sm:$0xf]
  %v41 = vld [vmem:[%s0 + $0x30] sm:$0xf]
  %v42 = vld [vmem:[%s0 + $0x34] sm:$0xf]
  %v43 = vld [vmem:[%s0 + $0x38] sm:$0xf]
  %v44 = vld [vmem:[%s0 + $0x3c] sm:$0xf]
  %v45 = vld [vmem:[%s0 + $0x40] sm:$0xf]
  %v46 = vld [vmem:[%s0 + $0x44] sm:$0xf]
  %v47 = vld [vmem:[%s0 + $0x48] sm:$0xf]
  %v48 = vld [vmem:[%s0 + $0x4c] sm:$0xf]
  %v49 = vld [vmem:[%s0 + $0x50] sm:$0xf]
  %v50 = vld [vmem:[%s0 + $0x54] sm:$0xf]
  %v51 = vld [vmem:[%s0 + $0x58] sm:$0xf]
  %v52 = vld [vmem:[%s0 + $0x5c] sm:$0xf]
  %v53 = vld [vmem:[%s0 + $0x60] sm:$0xf]
  %v54 = vld [vmem:[%s0 + $0x64] sm:$0xf]
  %v55 = vld [vmem:[%s0 + $0x68] sm:$0xf]
  %v56 = vld [vmem:[%s0 + $0x6c] sm:$0xf]
  %v57 = vld [vmem:[%s0 + $0x70] sm:$0xf]
  %v58 = vld [vmem:[%s0 + $0x74] sm:$0xf]
  %v59 = vld [vmem:[%s0 + $0x78] sm:$0xf]
  %v60 = vld [vmem:[%s0 + $0x7c] sm:$0xf]
  %v61 = vld [vmem:[%s0 + $0x80] sm:$0xf]
  %v62 = vld [vmem:[%s0 + $0x84] sm:$0xf]
  %v63 = vld [vmem:[%s0 + $0x88] sm:$0xf]
  %v64 = vld [vmem:[%s0 + $0x8c] sm:$0xf]
  %v65 = vld [vmem:[%s0 + $0x90] sm:$0xf]
  %v66 = vld [vmem:[%s0 + $0x94] sm:$0xf]
  %v67 = vld [vmem:[%s0 + $0x98] sm:$0xf]
  %v68 = vld [vmem:[%s0 + $0x9c] sm:$0xf]
  %v69 = vld [vmem:[%s0 + $0xa0] sm:$0xf]
  %v70 = vld [vmem:[%s0 + $0xa4] sm:$0xf]
  %v71 = vld [vmem:[%s0 + $0xa8] sm:$0xf]
  %v72 = vld [vmem:[%s0 + $0xac] sm:$0xf]
  %v73 = vld [vmem:[%s0 + $0xb0] sm:$0xf]
  %v74 = vld [vmem:[%s0 + $0xb4] sm:$0xf]
  %v75 = vld [vmem:[%s0 + $0xb8] sm:$0xf]
  %v76 = vld [vmem:[%s0 + $0xbc] sm:$0xf]
  %v77 = vld [vmem:[%s0 + $0xc0] sm:$0xf]
  %v78 = vld [vmem:[%s0 + $0xc4] sm:$0xf]
  %v79 = vld [vmem:[%s0 + $0xc8] sm:$0xf]
  %v80 = vld [vmem:[%s0 + $0xcc] sm:$0xf]
  %v81 = vld [vmem:[%s0 + $0xd0] sm:$0xf]
  %v82 = vld [vmem:[%s0 + $0xd4] sm:$0xf]
  %v83 = vld [vmem:[%s0 + $0xd8] sm:$0xf]
  %v84 = vld [vmem:[%s0 + $0xdc] sm:$0xf]
  %v85 = vld [vmem:[%s0 + $0xe0] sm:$0xf]
  %v86 = vld [vmem:[%s0 + $0xe4] sm:$0xf]
  %v87 = vld [vmem:[%s0 + $0xe8] sm:$0xf]
  %v88 = vld [vmem:[%s0 + $0xec] sm:$0xf]
  %v89 = vld [vmem:[%s0 + $0xf0] sm:$0xf]
  %v90 = vld [vmem:[%s0 + $0xf4] sm:$0xf]
  %v91 = vld [vmem:[%s0 + $0xf8] sm:$0xf]
  %v92 = vld [vmem:[%s0 + $0xfc] sm:$0xf]
  %v93 = vld [vmem:[%s0 + $0x100] sm:$0xf]
  %v94 = vld [vmem:[%s0 + $0x104] sm:$0xf]
  %v95 = vld [vmem:[%s0 + $0x108] sm:$0xf]
  %v96 = vld [vmem:[%s0 + $0x10c] sm:$0xf]
  %v97 = vld [vmem:[%s0 + $0x110] sm:$0xf]
  %v98 = vld [vmem:[%s0 + $0x114] sm:$0xf]
  %v99 = vld [vmem:[%s0 + $0x118] sm:$0xf]
  %v100 = vld [vmem:[%s0 + $0x11c] sm:$0xf]
  %v101 = vld [vmem:[%s0 + $0x120] sm:$0xf]
  %v102 = vld [vmem:[%s0 + $0x124] sm:$0xf]
  %v103 = vld [vmem:[%s0 + $0x128] sm:$0xf]
  %v104 = vld [vmem:[%s0 + $0x12c] sm:$0xf]
  %v105 = vld [vmem:[%s0 + $0x130] sm:$0xf]
  %v106 = vld [vmem:[%s0 + $0x134] sm:$0xf]
  %v107 = vld [vmem:[%s0 + $0x138] sm:$0xf]
  %v108 = vld [vmem:[%s0 + $0x13c] sm:$0xf]
  %v109 = vld [vmem:[%s0 + $0x140] sm:$0xf]
  %v110 = vld [vmem:[%s0 + $0x144] sm:$0xf]
  %v111 = vld [vmem:[%s0 + $0x148] sm:$0xf]
  %v112 = vld [vmem:[%s0 + $0x14c] sm:$0xf]
  %v113 = vld [vmem:[%s0 + $0x150] sm:$0xf]
  %v114 = vld [vmem:[%s0 + $0x154] sm:$0xf]
  %v115 = vld [vmem:[%s0 + $0x158] sm:$0xf]
  %v116 = vld [vmem:[%s0 + $0x15c] sm:$0xf]
  %v117 = vld [vmem:[%s0 + $0x160] sm:$0xf]
  %v118 = vld [vmem:[%s0 + $0x164] sm:$0xf]
  %v119 = vld [vmem:[%s0 + $0x168] sm:$0xf]
  %v120 = vld [vmem:[%s0 + $0x16c] sm:$0xf]
  %v121 = vld [vmem:[%s0 + $0x170] sm:$0xf]
  %v122 = vld [vmem:[%s0 + $0x174] sm:$0xf]
  %v123 = vld [vmem:[%s0 + $0x178] sm:$0xf]
  %v124 = vld [vmem:[%s0 + $0x17c] sm:$0xf]
  %v125 = vld [vmem:[%s0 + $0x180] sm:$0xf]
  %v126 = vld [vmem:[%s0 + $0x184] sm:$0xf]
  %v127 = vld [vmem:[%s0 + $0x188] sm:$0xf]
  %v128 = vld [vmem:[%s0 + $0x18c] sm:$0xf]
  %v129 = vld [vmem:[%s0 + $0x190] sm:$0xf]
  %v130 = vld [vmem:[%s0 + $0x194] sm:$0xf]
  %v131 = vld [vmem:[%s0 + $0x198] sm:$0xf]
  %v132 = vld [vmem:[%s0 + $0x19c] sm:$0xf]
  %v133 = vld [vmem:[%s0 + $0x1a0] sm:$0xf]
  %v134 = vld [vmem:[%s0 + $0x1a4] sm:$0xf]
  %v135 = vld [vmem:[%s0 + $0x1a8] sm:$0xf]
  %v136 = vld [vmem:[%s0 + $0x1ac] sm:$0xf]
  %v137 = vld [vmem:[%s0 + $0x1b0] sm:$0xf]
  %v138 = vld [vmem:[%s0 + $0x1b4] sm:$0xf]
  %v139 = vld [vmem:[%s0 + $0x1b8] sm:$0xf]
  %v140 = vld [vmem:[%s0 + $0x1bc] sm:$0xf]
  %v141 = vld [vmem:[%s0 + $0x1c0] sm:$0xf]
  %v142 = vld [vmem:[%s0 + $0x1c4] sm:$0xf]
  %v143 = vld [vmem:[%s0 + $0x1c8] sm:$0xf]
  %v144 = vld [vmem:[%s0 + $0x1cc] sm:$0xf]
  %v145 = vld [vmem:[%s0 + $0x1d0] sm:$0xf]
  %v146 = vld [vmem:[%s0 + $0x1d4] sm:$0xf]
  %v147 = vld [vmem:[%s0 + $0x1d8] sm:$0xf]
  %v148 = vld [vmem:[%s0 + $0x1dc] sm:$0xf]
  %v149 = vld [vmem:[%s0 + $0x1e0] sm:$0xf]
  %v150 = vld [vmem:[%s0 + $0x1e4] sm:$0xf]
  %v151 = vld [vmem:[%s0 + $0x1e8] sm:$0xf]
  %v152 = vld [vmem:[%s0 + $0x1ec] sm:$0xf]
  %v153 = vld [vmem:[%s0 + $0x1f0] sm:$0xf]
  %v154 = vld [vmem:[%s0 + $0x1f4] sm:$0xf]
  %v155 = vld [vmem:[%s0 + $0x1f8] sm:$0xf]
  %v156 = vld [vmem:[%s0 + $0x1fc] sm:$0xf]
  %v157 = vld [vmem:[%s0 + $0x200] sm:$0xf]
  %v158 = vld [vmem:[%s0 + $0x204] sm:$0xf]
  %v159 = vld [vmem:[%s0 + $0x208] sm:$0xf]
  %v160 = vld [vmem:[%s0 + $0x20c] sm:$0xf]
  %v161 = vld [vmem:[%s0 + $0x210] sm:$0xf]
  %v162 = vld [vmem:[%s0 + $0x214] sm:$0xf]
  %v163 = vld [vmem:[%s0 + $0x218] sm:$0xf]
  %v164 = vld [vmem:[%s0 + $0x21c] sm:$0xf]
  %v165 = vld [vmem:[%s0 + $0x220] sm:$0xf]
  %v166 = vld [vmem:[%s0 + $0x224] sm:$0xf]
  %v167 = vld [vmem:[%s0 + $0x228] sm:$0xf]
  %v168 = vld [vmem:[%s0 + $0x22c] sm:$0xf]
  %v169 = vld [vmem:[%s0 + $0x230] sm:$0xf]
  %v170 = vld [vmem:[%s0 + $0x234] sm:$0xf]
  %v171 = vld [vmem:[%s0 + $0x238] sm:$0xf]
  %v172 = vld [vmem:[%s0 + $0x23c] sm:$0xf]
  %v173 = vld [vmem:[%s0 + $0x240] sm:$0xf]
  %v174 = vld [vmem:[%s0 + $0x244] sm:$0xf]
  %v175 = vld [vmem:[%s0 + $0x248] sm:$0xf]
  %v176 = vld [vmem:[%s0 + $0x24c] sm:$0xf]
  %v177 = vld [vmem:[%s0 + $0x250] sm:$0xf]
  %v178 = vld [vmem:[%s0 + $0x254] sm:$0xf]
  %v179 = vld [vmem:[%s0 + $0x258] sm:$0xf]
  %v180 = vld [vmem:[%s0 + $0x25c] sm:$0xf]
  %v181 = vld [vmem:[%s0 + $0x260] sm:$0xf]
  %v182 = vld [vmem:[%s0 + $0x264] sm:$0xf]
  %v183 = vld [vmem:[%s0 + $0x268] sm:$0xf]
  %v184 = vld [vmem:[%s0 + $0x26c] sm:$0xf]
  %v185 = vld [vmem:[%s0 + $0x270] sm:$0xf]
  %v186 = vld [vmem:[%s0 + $0x274] sm:$0xf]
  %v187 = vld [vmem:[%s0 + $0x278] sm:$0xf]
  %v188 = vld [vmem:[%s0 + $0x27c] sm:$0xf]
  %v189 = vld [vmem:[%s0 + $0x280] sm:$0xf]
  %v190 = vld [vmem:[%s0 + $0x284] sm:$0xf]
  %v191 = vld [vmem:[%s0 + $0x288] sm:$0xf]
  %v192 = vld [vmem:[%s0 + $0x28c] sm:$0xf]
  %v193 = vld [vmem:[%s0 + $0x290] sm:$0xf]
  %v194 = vld [vmem:[%s0 + $0x294] sm:$0xf]
  %v195 = vld [vmem:[%s0 + $0x298] sm:$0xf]
  %v196 = vld [vmem:[%s0 + $0x29c] sm:$0xf]
  %v197 = vld [vmem:[%s0 + $0x2a0] sm:$0xf]
  %v198 = vld [vmem:[%s0 + $0x2a4] sm:$0xf]
  %v199 = vld [vmem:[%s0 + $0x2a8] sm:$0xf]
  %v200 = vld [vmem:[%s0 + $0x2ac] sm:$0xf]
  %v201 = vld [vmem:[%s0 + $0x2b0] sm:$0xf]
  %v202 = vld [vmem:[%s0 + $0x2b4] sm:$0xf]
  %v203 = vld [vmem:[%s0 + $0x2b8] sm:$0xf]
  %v204 = vld [vmem:[%s0 + $0x2bc] sm:$0xf]
  %v205 = vld [vmem:[%s0 + $0x2c0] sm:$0xf]
  %v206 = vld [vmem:[%s0 + $0x2c4] sm:$0xf]
  %v207 = vld [vmem:[%s0 + $0x2c8] sm:$0xf]
  %v208 = vld [vmem:[%s0 + $0x2cc] sm:$0xf]
  %v209 = vld [vmem:[%s0 + $0x2d0] sm:$0xf]
  %v210 = vld [vmem:[%s0 + $0x2d4] sm:$0xf]
  %v211 = vld [vmem:[%s0 + $0x2d8] sm:$0xf]
  %v212 = vld [vmem:[%s0 + $0x2dc] sm:$0xf]
  %v213 = vld [vmem:[%s0 + $0x2e0] sm:$0xf]
  %v214 = vld [vmem:[%s0 + $0x2e4] sm:$0xf]
  %v215 = vld [vmem:[%s0 + $0x2e8] sm:$0xf]
  %v216 = vld [vmem:[%s0 + $0x2ec] sm:$0xf]
  %v217 = vld [vmem:[%s0 + $0x2f0] sm:$0xf]
  %v218 = vld [vmem:[%s0 + $0x2f4] sm:$0xf]
  %v219 = vld [vmem:[%s0 + $0x2f8] sm:$0xf]
  %v220 = vld [vmem:[%s0 + $0x2fc] sm:$0xf]
  %v221 = vld [vmem:[%s0 + $0x300] sm:$0xf]
  %v222 = vld [vmem:[%s0 + $0x304] sm:$0xf]
  %v223 = vld [vmem:[%s0 + $0x308] sm:$0xf]
  %v224 = vld [vmem:[%s0 + $0x30c] sm:$0xf]
  %v225 = vld [vmem:[%s0 + $0x310] sm:$0xf]
  %v226 = vld [vmem:[%s0 + $0x314] sm:$0xf]
  %v227 = vld [vmem:[%s0 + $0x318] sm:$0xf]
  %v228 = vld [vmem:[%s0 + $0x31c] sm:$0xf]
  %v229 = vld [vmem:[%s0 + $0x320] sm:$0xf]
  %v230 = vld [vmem:[%s0 + $0x324] sm:$0xf]
  %v231 = vld [vmem:[%s0 + $0x328] sm:$0xf]
  %v232 = vld [vmem:[%s0 + $0x32c] sm:$0xf]
  %v233 = vld [vmem:[%s0 + $0x330] sm:$0xf]
  %v234 = vld [vmem:[%s0 + $0x334] sm:$0xf]
  %v235 = vld [vmem:[%s0 + $0x338] sm:$0xf]
  %v236 = vld [vmem:[%s0 + $0x33c] sm:$0xf]
  %v237 = vld [vmem:[%s0 + $0x340] sm:$0xf]
  %v238 = vld [vmem:[%s0 + $0x344] sm:$0xf]
  %v239 = vld [vmem:[%s0 + $0x348] sm:$0xf]
  %v240 = vld [vmem:[%s0 + $0x34c] sm:$0xf]
  %v241 = vld [vmem:[%s0 + $0x350] sm:$0xf]
  %v242 = vld [vmem:[%s0 + $0x354] sm:$0xf]
  %v243 = vld [vmem:[%s0 + $0x358] sm:$0xf]
  %v244 = vld [vmem:[%s0 + $0x35c] sm:$0xf]
  %v245 = vld [vmem:[%s2] sm:$0xff]
  %v246 = vld [vmem:[%s2 + $0x8] sm:$0xff]
  %248 = vset.pattern.permute.xlu0 0
  %249 = vperm.xlu0 %248, %v245
  %v250 = vpop.permute.xlu0 %249
  %253 = vset.pattern.permute.xlu0 0
  %254 = vperm.xlu0 %253, %v246
  %v255 = vpop.permute.xlu0 %254
  %v271 = vunpack.c.l.b16 %v15
  %v272 = vunpack.c.h.b16 %v15
  %v273 = vunpack.c.l.b16 %v16
  %v274 = vunpack.c.h.b16 %v16
  %v275 = vunpack.c.l.b16 %v17
  %v276 = vunpack.c.h.b16 %v17
  %v277 = vunpack.c.l.b16 %v18
  %v278 = vunpack.c.h.b16 %v18
  %v279 = vunpack.c.l.b16 %v19
  %v280 = vunpack.c.h.b16 %v19
  %v281 = vunpack.c.l.b16 %v20
  %v282 = vunpack.c.h.b16 %v20
  %v283 = vunpack.c.l.b16 %v21
  %v284 = vunpack.c.h.b16 %v21
  %v285 = vunpack.c.l.b16 %v22
  %v286 = vunpack.c.h.b16 %v22
  %v287 = vunpack.c.l.b16 %v23
  %v288 = vunpack.c.h.b16 %v23
  %v289 = vunpack.c.l.b16 %v24
  %v290 = vunpack.c.h.b16 %v24
  %v291 = vunpack.c.l.b16 %v25
  %v292 = vunpack.c.h.b16 %v25
  %v293 = vunpack.c.l.b16 %v26
  %v294 = vunpack.c.h.b16 %v26
  %v295 = vunpack.c.l.b16 %v27
  %v296 = vunpack.c.h.b16 %v27
  %v297 = vunpack.c.l.b16 %v28
  %v298 = vunpack.c.h.b16 %v28
  %v299 = vpack.c.b16 %v285, %v271
  %v300 = vpack.c.b16 %v286, %v272
  %v301 = vpack.c.b16 %v287, %v273
  %v302 = vpack.c.b16 %v288, %v274
  %v303 = vpack.c.b16 %v289, %v275
  %v304 = vpack.c.b16 %v290, %v276
  %v305 = vpack.c.b16 %v291, %v277
  %v306 = vpack.c.b16 %v292, %v278
  %v307 = vpack.c.b16 %v293, %v279
  %v308 = vpack.c.b16 %v294, %v280
  %v309 = vpack.c.b16 %v295, %v281
  %v310 = vpack.c.b16 %v296, %v282
  %v311 = vpack.c.b16 %v297, %v283
  %v312 = vpack.c.b16 %v298, %v284
  %v542 = vunpack.c.l.b16 %v29
  %v543 = vunpack.c.l.b16 %v30
  %v544 = vunpack.c.l.b16 %v31
  %v545 = vunpack.c.l.b16 %v32
  %v546 = vunpack.c.l.b16 %v33
  %v547 = vunpack.c.l.b16 %v34
  %v548 = vunpack.c.l.b16 %v35
  %v549 = vunpack.c.l.b16 %v36
  %v550 = vunpack.c.l.b16 %v37
  %v551 = vunpack.c.l.b16 %v38
  %v552 = vunpack.c.l.b16 %v39
  %v553 = vunpack.c.l.b16 %v40
  %v554 = vunpack.c.l.b16 %v41
  %v555 = vunpack.c.l.b16 %v42
  %v556 = vunpack.c.l.b16 %v43
  %v557 = vunpack.c.l.b16 %v44
  %v558 = vunpack.c.l.b16 %v45
  %v559 = vunpack.c.l.b16 %v46
  %v560 = vunpack.c.l.b16 %v47
  %v561 = vunpack.c.l.b16 %v48
  %v562 = vunpack.c.l.b16 %v49
  %v563 = vunpack.c.l.b16 %v50
  %v564 = vunpack.c.l.b16 %v51
  %v565 = vunpack.c.l.b16 %v52
  %v566 = vunpack.c.l.b16 %v53
  %v567 = vunpack.c.l.b16 %v54
  %v568 = vunpack.c.l.b16 %v55
  %v569 = vunpack.c.l.b16 %v56
  %v570 = vunpack.c.l.b16 %v57
  %v571 = vunpack.c.l.b16 %v58
  %v572 = vunpack.c.l.b16 %v59
  %v573 = vunpack.c.l.b16 %v60
  %v574 = vunpack.c.l.b16 %v61
  %v575 = vunpack.c.l.b16 %v62
  %v576 = vunpack.c.l.b16 %v63
  %v577 = vunpack.c.l.b16 %v64
  %v578 = vunpack.c.l.b16 %v65
  %v579 = vunpack.c.l.b16 %v66
  %v580 = vunpack.c.l.b16 %v67
  %v581 = vunpack.c.l.b16 %v68
  %v582 = vunpack.c.l.b16 %v69
  %v583 = vunpack.c.l.b16 %v70
  %v584 = vunpack.c.l.b16 %v71
  %v585 = vunpack.c.l.b16 %v72
  %v586 = vunpack.c.l.b16 %v73
  %v587 = vunpack.c.l.b16 %v74
  %v588 = vunpack.c.l.b16 %v75
  %v589 = vunpack.c.l.b16 %v76
  %v590 = vunpack.c.l.b16 %v77
  %v591 = vunpack.c.l.b16 %v78
  %v592 = vunpack.c.l.b16 %v79
  %v593 = vunpack.c.l.b16 %v80
  %v594 = vunpack.c.l.b16 %v81
  %v595 = vunpack.c.l.b16 %v82
  %v596 = vunpack.c.l.b16 %v83
  %v597 = vunpack.c.l.b16 %v84
  %v598 = vunpack.c.l.b16 %v85
  %v599 = vunpack.c.l.b16 %v86
  %v600 = vunpack.c.l.b16 %v87
  %v601 = vunpack.c.l.b16 %v88
  %v602 = vunpack.c.l.b16 %v89
  %v603 = vunpack.c.l.b16 %v90
  %v604 = vunpack.c.l.b16 %v91
  %v605 = vunpack.c.l.b16 %v92
  %v606 = vunpack.c.l.b16 %v93
  %v607 = vunpack.c.l.b16 %v94
  %v608 = vunpack.c.l.b16 %v95
  %v609 = vunpack.c.l.b16 %v96
  %v610 = vunpack.c.l.b16 %v97
  %v611 = vunpack.c.l.b16 %v98
  %v612 = vunpack.c.l.b16 %v99
  %v613 = vunpack.c.l.b16 %v100
  %v614 = vunpack.c.l.b16 %v101
  %v615 = vunpack.c.l.b16 %v102
  %v616 = vunpack.c.l.b16 %v103
  %v617 = vunpack.c.l.b16 %v104
  %v618 = vunpack.c.l.b16 %v105
  %v619 = vunpack.c.l.b16 %v106
  %v620 = vunpack.c.l.b16 %v107
  %v621 = vunpack.c.l.b16 %v108
  %v622 = vunpack.c.l.b16 %v109
  %v623 = vunpack.c.l.b16 %v110
  %v624 = vunpack.c.l.b16 %v111
  %v625 = vunpack.c.l.b16 %v112
  %v626 = vunpack.c.l.b16 %v113
  %v627 = vunpack.c.l.b16 %v114
  %v628 = vunpack.c.l.b16 %v115
  %v629 = vunpack.c.l.b16 %v116
  %v630 = vunpack.c.l.b16 %v117
  %v631 = vunpack.c.l.b16 %v118
  %v632 = vunpack.c.l.b16 %v119
  %v633 = vunpack.c.l.b16 %v120
  %v634 = vunpack.c.l.b16 %v121
  %v635 = vunpack.c.l.b16 %v122
  %v636 = vunpack.c.l.b16 %v123
  %v637 = vunpack.c.l.b16 %v124
  %v638 = vunpack.c.l.b16 %v125
  %v639 = vunpack.c.l.b16 %v126
  %v640 = vunpack.c.l.b16 %v127
  %v641 = vunpack.c.l.b16 %v128
  %v642 = vunpack.c.l.b16 %v129
  %v643 = vunpack.c.l.b16 %v130
  %v644 = vunpack.c.l.b16 %v131
  %v645 = vunpack.c.l.b16 %v132
  %v646 = vunpack.c.l.b16 %v133
  %v647 = vunpack.c.l.b16 %v134
  %v648 = vunpack.c.l.b16 %v135
  %v649 = vunpack.c.l.b16 %v136
  %v650 = vunpack.c.l.b16 %v137
  %v651 = vunpack.c.l.b16 %v138
  %v652 = vunpack.c.l.b16 %v139
  %v653 = vunpack.c.l.b16 %v140
  %v654 = vunpack.c.l.b16 %v141
  %v655 = vunpack.c.l.b16 %v142
  %v656 = vunpack.c.l.b16 %v143
  %v657 = vunpack.c.l.b16 %v144
  %v658 = vunpack.c.l.b16 %v145
  %v659 = vunpack.c.l.b16 %v146
  %v660 = vunpack.c.l.b16 %v147
  %v661 = vunpack.c.l.b16 %v148
  %v662 = vunpack.c.l.b16 %v149
  %v663 = vunpack.c.l.b16 %v150
  %v664 = vunpack.c.l.b16 %v151
  %v665 = vunpack.c.l.b16 %v152
  %v666 = vunpack.c.l.b16 %v153
  %v667 = vunpack.c.l.b16 %v154
  %v668 = vunpack.c.l.b16 %v155
  %v669 = vunpack.c.l.b16 %v156
  %v670 = vunpack.c.l.b16 %v157
  %v671 = vunpack.c.l.b16 %v158
  %v672 = vunpack.c.l.b16 %v159
  %v673 = vunpack.c.l.b16 %v160
  %v674 = vunpack.c.l.b16 %v161
  %v675 = vunpack.c.l.b16 %v162
  %v676 = vunpack.c.l.b16 %v163
  %v677 = vunpack.c.l.b16 %v164
  %v678 = vunpack.c.l.b16 %v165
  %v679 = vunpack.c.l.b16 %v166
  %v680 = vunpack.c.l.b16 %v167
  %v681 = vunpack.c.l.b16 %v168
  %v682 = vunpack.c.l.b16 %v169
  %v683 = vunpack.c.l.b16 %v170
  %v684 = vunpack.c.l.b16 %v171
  %v685 = vunpack.c.l.b16 %v172
  %v686 = vunpack.c.l.b16 %v173
  %v687 = vunpack.c.l.b16 %v174
  %v688 = vunpack.c.l.b16 %v175
  %v689 = vunpack.c.l.b16 %v176
  %v690 = vunpack.c.l.b16 %v177
  %v691 = vunpack.c.l.b16 %v178
  %v692 = vunpack.c.l.b16 %v179
  %v693 = vunpack.c.l.b16 %v180
  %v694 = vunpack.c.l.b16 %v181
  %v695 = vunpack.c.l.b16 %v182
  %v696 = vunpack.c.l.b16 %v183
  %v697 = vunpack.c.l.b16 %v184
  %v698 = vunpack.c.l.b16 %v185
  %v699 = vunpack.c.l.b16 %v186
  %v700 = vunpack.c.l.b16 %v187
  %v701 = vunpack.c.l.b16 %v188
  %v702 = vunpack.c.l.b16 %v189
  %v703 = vunpack.c.l.b16 %v190
  %v704 = vunpack.c.l.b16 %v191
  %v705 = vunpack.c.l.b16 %v192
  %v706 = vunpack.c.l.b16 %v193
  %v707 = vunpack.c.l.b16 %v194
  %v708 = vunpack.c.l.b16 %v195
  %v709 = vunpack.c.l.b16 %v196
  %v710 = vunpack.c.l.b16 %v197
  %v711 = vunpack.c.l.b16 %v198
  %v712 = vunpack.c.l.b16 %v199
  %v713 = vunpack.c.l.b16 %v200
  %v714 = vunpack.c.l.b16 %v201
  %v715 = vunpack.c.l.b16 %v202
  %v716 = vunpack.c.l.b16 %v203
  %v717 = vunpack.c.l.b16 %v204
  %v718 = vunpack.c.l.b16 %v205
  %v719 = vunpack.c.l.b16 %v206
  %v720 = vunpack.c.l.b16 %v207
  %v721 = vunpack.c.l.b16 %v208
  %v722 = vunpack.c.l.b16 %v209
  %v723 = vunpack.c.l.b16 %v210
  %v724 = vunpack.c.l.b16 %v211
  %v725 = vunpack.c.l.b16 %v212
  %v726 = vunpack.c.l.b16 %v213
  %v727 = vunpack.c.l.b16 %v214
  %v728 = vunpack.c.l.b16 %v215
  %v729 = vunpack.c.l.b16 %v216
  %v730 = vunpack.c.l.b16 %v217
  %v731 = vunpack.c.l.b16 %v218
  %v732 = vunpack.c.l.b16 %v219
  %v733 = vunpack.c.l.b16 %v220
  %v734 = vunpack.c.l.b16 %v221
  %v735 = vunpack.c.l.b16 %v222
  %v736 = vunpack.c.l.b16 %v223
  %v737 = vunpack.c.l.b16 %v224
  %v738 = vunpack.c.l.b16 %v225
  %v739 = vunpack.c.l.b16 %v226
  %v740 = vunpack.c.l.b16 %v227
  %v741 = vunpack.c.l.b16 %v228
  %v742 = vunpack.c.l.b16 %v229
  %v743 = vunpack.c.l.b16 %v230
  %v744 = vunpack.c.l.b16 %v231
  %v745 = vunpack.c.l.b16 %v232
  %v746 = vunpack.c.l.b16 %v233
  %v747 = vunpack.c.l.b16 %v234
  %v748 = vunpack.c.l.b16 %v235
  %v749 = vunpack.c.l.b16 %v236
  %v750 = vunpack.c.l.b16 %v237
  %v751 = vunpack.c.l.b16 %v238
  %v752 = vunpack.c.l.b16 %v239
  %v753 = vunpack.c.l.b16 %v240
  %v754 = vunpack.c.l.b16 %v241
  %v755 = vunpack.c.l.b16 %v242
  %v756 = vunpack.c.l.b16 %v243
  %v757 = vunpack.c.l.b16 %v244
  %v758 = vpack.c.b16 %v543, %v542
  %v759 = vpack.c.b16 %v545, %v544
  %v760 = vpack.c.b16 %v547, %v546
  %v761 = vpack.c.b16 %v549, %v548
  %v762 = vpack.c.b16 %v551, %v550
  %v763 = vpack.c.b16 %v553, %v552
  %v764 = vpack.c.b16 %v555, %v554
  %v765 = vpack.c.b16 %v557, %v556
  %v766 = vpack.c.b16 %v559, %v558
  %v767 = vpack.c.b16 %v561, %v560
  %v768 = vpack.c.b16 %v563, %v562
  %v769 = vpack.c.b16 %v565, %v564
  %v770 = vpack.c.b16 %v567, %v566
  %v771 = vpack.c.b16 %v569, %v568
  %v772 = vpack.c.b16 %v571, %v570
  %v773 = vpack.c.b16 %v573, %v572
  %v774 = vpack.c.b16 %v575, %v574
  %v775 = vpack.c.b16 %v577, %v576
  %v776 = vpack.c.b16 %v579, %v578
  %v777 = vpack.c.b16 %v581, %v580
  %v778 = vpack.c.b16 %v583, %v582
  %v779 = vpack.c.b16 %v585, %v584
  %v780 = vpack.c.b16 %v587, %v586
  %v781 = vpack.c.b16 %v589, %v588
  %v782 = vpack.c.b16 %v591, %v590
  %v783 = vpack.c.b16 %v593, %v592
  %v784 = vpack.c.b16 %v595, %v594
  %v785 = vpack.c.b16 %v597, %v596
  %v786 = vpack.c.b16 %v599, %v598
  %v787 = vpack.c.b16 %v601, %v600
  %v788 = vpack.c.b16 %v603, %v602
  %v789 = vpack.c.b16 %v605, %v604
  %v790 = vpack.c.b16 %v607, %v606
  %v791 = vpack.c.b16 %v609, %v608
  %v792 = vpack.c.b16 %v611, %v610
  %v793 = vpack.c.b16 %v613, %v612
  %v794 = vpack.c.b16 %v615, %v614
  %v795 = vpack.c.b16 %v617, %v616
  %v796 = vpack.c.b16 %v619, %v618
  %v797 = vpack.c.b16 %v621, %v620
  %v798 = vpack.c.b16 %v623, %v622
  %v799 = vpack.c.b16 %v625, %v624
  %v800 = vpack.c.b16 %v627, %v626
  %v801 = vpack.c.b16 %v629, %v628
  %v802 = vpack.c.b16 %v631, %v630
  %v803 = vpack.c.b16 %v633, %v632
  %v804 = vpack.c.b16 %v635, %v634
  %v805 = vpack.c.b16 %v637, %v636
  %v806 = vpack.c.b16 %v639, %v638
  %v807 = vpack.c.b16 %v641, %v640
  %v808 = vpack.c.b16 %v643, %v642
  %v809 = vpack.c.b16 %v645, %v644
  %v810 = vpack.c.b16 %v647, %v646
  %v811 = vpack.c.b16 %v649, %v648
  %v812 = vpack.c.b16 %v651, %v650
  %v813 = vpack.c.b16 %v653, %v652
  %v814 = vpack.c.b16 %v655, %v654
  %v815 = vpack.c.b16 %v657, %v656
  %v816 = vpack.c.b16 %v659, %v658
  %v817 = vpack.c.b16 %v661, %v660
  %v818 = vpack.c.b16 %v663, %v662
  %v819 = vpack.c.b16 %v665, %v664
  %v820 = vpack.c.b16 %v667, %v666
  %v821 = vpack.c.b16 %v669, %v668
  %v822 = vpack.c.b16 %v671, %v670
  %v823 = vpack.c.b16 %v673, %v672
  %v824 = vpack.c.b16 %v675, %v674
  %v825 = vpack.c.b16 %v677, %v676
  %v826 = vpack.c.b16 %v679, %v678
  %v827 = vpack.c.b16 %v681, %v680
  %v828 = vpack.c.b16 %v683, %v682
  %v829 = vpack.c.b16 %v685, %v684
  %v830 = vpack.c.b16 %v687, %v686
  %v831 = vpack.c.b16 %v689, %v688
  %v832 = vpack.c.b16 %v691, %v690
  %v833 = vpack.c.b16 %v693, %v692
  %v834 = vpack.c.b16 %v695, %v694
  %v835 = vpack.c.b16 %v697, %v696
  %v836 = vpack.c.b16 %v699, %v698
  %v837 = vpack.c.b16 %v701, %v700
  %v838 = vpack.c.b16 %v703, %v702
  %v839 = vpack.c.b16 %v705, %v704
  %v840 = vpack.c.b16 %v707, %v706
  %v841 = vpack.c.b16 %v709, %v708
  %v842 = vpack.c.b16 %v711, %v710
  %v843 = vpack.c.b16 %v713, %v712
  %v844 = vpack.c.b16 %v715, %v714
  %v845 = vpack.c.b16 %v717, %v716
  %v846 = vpack.c.b16 %v719, %v718
  %v847 = vpack.c.b16 %v721, %v720
  %v848 = vpack.c.b16 %v723, %v722
  %v849 = vpack.c.b16 %v725, %v724
  %v850 = vpack.c.b16 %v727, %v726
  %v851 = vpack.c.b16 %v729, %v728
  %v852 = vpack.c.b16 %v731, %v730
  %v853 = vpack.c.b16 %v733, %v732
  %v854 = vpack.c.b16 %v735, %v734
  %v855 = vpack.c.b16 %v737, %v736
  %v856 = vpack.c.b16 %v739, %v738
  %v857 = vpack.c.b16 %v741, %v740
  %v858 = vpack.c.b16 %v743, %v742
  %v859 = vpack.c.b16 %v745, %v744
  %v860 = vpack.c.b16 %v747, %v746
  %v861 = vpack.c.b16 %v749, %v748
  %v862 = vpack.c.b16 %v751, %v750
  %v863 = vpack.c.b16 %v753, %v752
  %v864 = vpack.c.b16 %v755, %v754
  %v865 = vpack.c.b16 %v757, %v756
  %vm974 = vcmask 523264
  %v976 = vsel %vm974, %v312, 0
  %978 = vmatprep.subr.bf16.mxu0 0
  %979 = vmatpush1.bf16.msra.mxu0 %v758
  %980 = vmatprep.subr.bf16.mxu0 0
  %981 = vmatpush1.bf16.msra.mxu0 %v759
  %982 = vmatprep.subr.bf16.mxu0 0
  %983 = vmatpush1.bf16.msra.mxu0 %v760
  %984 = vmatprep.subr.bf16.mxu0 0
  %985 = vmatpush1.bf16.msra.mxu0 %v761
  %986 = vmatprep.subr.bf16.mxu0 0
  %987 = vmatpush1.bf16.msra.mxu0 %v762
  %988 = vmatprep.subr.bf16.mxu0 0
  %989 = vmatpush1.bf16.msra.mxu0 %v763
  %990 = vmatprep.subr.bf16.mxu0 0
  %991 = vmatpush1.bf16.msra.mxu0 %v764
  %992 = vmatprep.subr.bf16.mxu0 0
  %993 = vmatpush1.bf16.msra.mxu0 %v765
  %994 = vmatprep.subr.bf16.mxu0 0
  %995 = vmatpush1.bf16.msra.mxu0 %v766
  %996 = vmatprep.subr.bf16.mxu0 0
  %997 = vmatpush1.bf16.msra.mxu0 %v767
  %998 = vmatprep.subr.bf16.mxu0 0
  %999 = vmatpush1.bf16.msra.mxu0 %v768
  %1000 = vmatprep.subr.bf16.mxu0 0
  %1001 = vmatpush1.bf16.msra.mxu0 %v769
  %1002 = vmatprep.subr.bf16.mxu0 0
  %1003 = vmatpush1.bf16.msra.mxu0 %v770
  %1004 = vmatprep.subr.bf16.mxu0 0
  %1005 = vmatpush1.bf16.msra.mxu0 %v771
  %1006 = vmatprep.subr.bf16.mxu0 0
  %1007 = vmatpush1.bf16.msra.mxu0 %v772
  %1008 = vmatprep.subr.bf16.mxu0 0
  %1009 = vmatpush1.bf16.msra.mxu0 %v773
  %1010 = vmatprep.mubr.bf16.mxu0 %v300
  %1011 = vmatmul.mubr.bf16.gmra.mrb[0].mxu0 %v299
  %v1012 = vpop.f32.mrb[0].mxu0
  %v1013 = vadd.f32 %v250, %v1012
  %v1014 = vpop.f32.mrb[0].mxu0
  %v1015 = vpop.f32.mrb[0].mxu0
  %v1016 = vadd.f32 %v255, %v1015
  %v1017 = vpop.f32.mrb[0].mxu0
  %1018 = vdwg.mxu0
  %1019 = vmatprep.subr.bf16.mxu0 0
  %1020 = vmatpush1.bf16.msra.mxu0 %v774
  %1021 = vmatprep.subr.bf16.mxu0 0
  %1022 = vmatpush1.bf16.msra.mxu0 %v775
  %1023 = vmatprep.subr.bf16.mxu0 0
  %1024 = vmatpush1.bf16.msra.mxu0 %v776
  %1025 = vmatprep.subr.bf16.mxu0 0
  %1026 = vmatpush1.bf16.msra.mxu0 %v777
  %1027 = vmatprep.subr.bf16.mxu0 0
  %1028 = vmatpush1.bf16.msra.mxu0 %v778
  %1029 = vmatprep.subr.bf16.mxu0 0
  %1030 = vmatpush1.bf16.msra.mxu0 %v779
  %1031 = vmatprep.subr.bf16.mxu0 0
  %1032 = vmatpush1.bf16.msra.mxu0 %v780
  %1033 = vmatprep.subr.bf16.mxu0 0
  %1034 = vmatpush1.bf16.msra.mxu0 %v781
  %1035 = vmatprep.subr.bf16.mxu0 0
  %1036 = vmatpush1.bf16.msra.mxu0 %v782
  %1037 = vmatprep.subr.bf16.mxu0 0
  %1038 = vmatpush1.bf16.msra.mxu0 %v783
  %1039 = vmatprep.subr.bf16.mxu0 0
  %1040 = vmatpush1.bf16.msra.mxu0 %v784
  %1041 = vmatprep.subr.bf16.mxu0 0
  %1042 = vmatpush1.bf16.msra.mxu0 %v785
  %1043 = vmatprep.subr.bf16.mxu0 0
  %1044 = vmatpush1.bf16.msra.mxu0 %v786
  %1045 = vmatprep.subr.bf16.mxu0 0
  %1046 = vmatpush1.bf16.msra.mxu0 %v787
  %1047 = vmatprep.subr.bf16.mxu0 0
  %1048 = vmatpush1.bf16.msra.mxu0 %v788
  %1049 = vmatprep.subr.bf16.mxu0 0
  %1050 = vmatpush1.bf16.msra.mxu0 %v789
  %1051 = vmatprep.mubr.bf16.mxu0 %v302
  %1052 = vmatmul.mubr.bf16.gmra.mrb[0].mxu0 %v301
  %v1053 = vpop.f32.mrb[0].mxu0
  %v1054 = vadd.f32 %v1013, %v1053
  %v1055 = vpop.f32.mrb[0].mxu0
  %v1056 = vpop.f32.mrb[0].mxu0
  %v1057 = vadd.f32 %v1016, %v1056
  %v1058 = vpop.f32.mrb[0].mxu0
  %1059 = vdwg.mxu0
  %1060 = vmatprep.subr.bf16.mxu0 0
  %1061 = vmatpush1.bf16.msra.mxu0 %v790
  %1062 = vmatprep.subr.bf16.mxu0 0
  %1063 = vmatpush1.bf16.msra.mxu0 %v791
  %1064 = vmatprep.subr.bf16.mxu0 0
  %1065 = vmatpush1.bf16.msra.mxu0 %v792
  %1066 = vmatprep.subr.bf16.mxu0 0
  %1067 = vmatpush1.bf16.msra.mxu0 %v793
  %1068 = vmatprep.subr.bf16.mxu0 0
  %1069 = vmatpush1.bf16.msra.mxu0 %v794
  %1070 = vmatprep.subr.bf16.mxu0 0
  %1071 = vmatpush1.bf16.msra.mxu0 %v795
  %1072 = vmatprep.subr.bf16.mxu0 0
  %1073 = vmatpush1.bf16.msra.mxu0 %v796
  %1074 = vmatprep.subr.bf16.mxu0 0
  %1075 = vmatpush1.bf16.msra.mxu0 %v797
  %1076 = vmatprep.subr.bf16.mxu0 0
  %1077 = vmatpush1.bf16.msra.mxu0 %v798
  %1078 = vmatprep.subr.bf16.mxu0 0
  %1079 = vmatpush1.bf16.msra.mxu0 %v799
  %1080 = vmatprep.subr.bf16.mxu0 0
  %1081 = vmatpush1.bf16.msra.mxu0 %v800
  %1082 = vmatprep.subr.bf16.mxu0 0
  %1083 = vmatpush1.bf16.msra.mxu0 %v801
  %1084 = vmatprep.subr.bf16.mxu0 0
  %1085 = vmatpush1.bf16.msra.mxu0 %v802
  %1086 = vmatprep.subr.bf16.mxu0 0
  %1087 = vmatpush1.bf16.msra.mxu0 %v803
  %1088 = vmatprep.subr.bf16.mxu0 0
  %1089 = vmatpush1.bf16.msra.mxu0 %v804
  %1090 = vmatprep.subr.bf16.mxu0 0
  %1091 = vmatpush1.bf16.msra.mxu0 %v805
  %1092 = vmatprep.mubr.bf16.mxu0 %v304
  %1093 = vmatmul.mubr.bf16.gmra.mrb[0].mxu0 %v303
  %v1094 = vpop.f32.mrb[0].mxu0
  %v1095 = vadd.f32 %v1054, %v1094
  %v1096 = vpop.f32.mrb[0].mxu0
  %v1097 = vpop.f32.mrb[0].mxu0
  %v1098 = vadd.f32 %v1057, %v1097
  %v1099 = vpop.f32.mrb[0].mxu0
  %1100 = vdwg.mxu0
  %1101 = vmatprep.subr.bf16.mxu0 0
  %1102 = vmatpush1.bf16.msra.mxu0 %v806
  %1103 = vmatprep.subr.bf16.mxu0 0
  %1104 = vmatpush1.bf16.msra.mxu0 %v807
  %1105 = vmatprep.subr.bf16.mxu0 0
  %1106 = vmatpush1.bf16.msra.mxu0 %v808
  %1107 = vmatprep.subr.bf16.mxu0 0
  %1108 = vmatpush1.bf16.msra.mxu0 %v809
  %1109 = vmatprep.subr.bf16.mxu0 0
  %1110 = vmatpush1.bf16.msra.mxu0 %v810
  %1111 = vmatprep.subr.bf16.mxu0 0
  %1112 = vmatpush1.bf16.msra.mxu0 %v811
  %1113 = vmatprep.subr.bf16.mxu0 0
  %1114 = vmatpush1.bf16.msra.mxu0 %v812
  %1115 = vmatprep.subr.bf16.mxu0 0
  %1116 = vmatpush1.bf16.msra.mxu0 %v813
  %1117 = vmatprep.subr.bf16.mxu0 0
  %1118 = vmatpush1.bf16.msra.mxu0 %v814
  %1119 = vmatprep.subr.bf16.mxu0 0
  %1120 = vmatpush1.bf16.msra.mxu0 %v815
  %1121 = vmatprep.subr.bf16.mxu0 0
  %1122 = vmatpush1.bf16.msra.mxu0 %v816
  %1123 = vmatprep.subr.bf16.mxu0 0
  %1124 = vmatpush1.bf16.msra.mxu0 %v817
  %1125 = vmatprep.subr.bf16.mxu0 0
  %1126 = vmatpush1.bf16.msra.mxu0 %v818
  %1127 = vmatprep.subr.bf16.mxu0 0
  %1128 = vmatpush1.bf16.msra.mxu0 %v819
  %1129 = vmatprep.subr.bf16.mxu0 0
  %1130 = vmatpush1.bf16.msra.mxu0 %v820
  %1131 = vmatprep.subr.bf16.mxu0 0
  %1132 = vmatpush1.bf16.msra.mxu0 %v821
  %1133 = vmatprep.mubr.bf16.mxu0 %v306
  %1134 = vmatmul.mubr.bf16.gmra.mrb[0].mxu0 %v305
  %v1135 = vpop.f32.mrb[0].mxu0
  %v1136 = vadd.f32 %v1095, %v1135
  %v1137 = vpop.f32.mrb[0].mxu0
  %v1138 = vpop.f32.mrb[0].mxu0
  %v1139 = vadd.f32 %v1098, %v1138
  %v1140 = vpop.f32.mrb[0].mxu0
  %1141 = vdwg.mxu0
  %1142 = vmatprep.subr.bf16.mxu0 0
  %1143 = vmatpush1.bf16.msra.mxu0 %v822
  %1144 = vmatprep.subr.bf16.mxu0 0
  %1145 = vmatpush1.bf16.msra.mxu0 %v823
  %1146 = vmatprep.subr.bf16.mxu0 0
  %1147 = vmatpush1.bf16.msra.mxu0 %v824
  %1148 = vmatprep.subr.bf16.mxu0 0
  %1149 = vmatpush1.bf16.msra.mxu0 %v825
  %1150 = vmatprep.subr.bf16.mxu0 0
  %1151 = vmatpush1.bf16.msra.mxu0 %v826
  %1152 = vmatprep.subr.bf16.mxu0 0
  %1153 = vmatpush1.bf16.msra.mxu0 %v827
  %1154 = vmatprep.subr.bf16.mxu0 0
  %1155 = vmatpush1.bf16.msra.mxu0 %v828
  %1156 = vmatprep.subr.bf16.mxu0 0
  %1157 = vmatpush1.bf16.msra.mxu0 %v829
  %1158 = vmatprep.subr.bf16.mxu0 0
  %1159 = vmatpush1.bf16.msra.mxu0 %v830
  %1160 = vmatprep.subr.bf16.mxu0 0
  %1161 = vmatpush1.bf16.msra.mxu0 %v831
  %1162 = vmatprep.subr.bf16.mxu0 0
  %1163 = vmatpush1.bf16.msra.mxu0 %v832
  %1164 = vmatprep.subr.bf16.mxu0 0
  %1165 = vmatpush1.bf16.msra.mxu0 %v833
  %1166 = vmatprep.subr.bf16.mxu0 0
  %1167 = vmatpush1.bf16.msra.mxu0 %v834
  %1168 = vmatprep.subr.bf16.mxu0 0
  %1169 = vmatpush1.bf16.msra.mxu0 %v835
  %1170 = vmatprep.subr.bf16.mxu0 0
  %1171 = vmatpush1.bf16.msra.mxu0 %v836
  %1172 = vmatprep.subr.bf16.mxu0 0
  %1173 = vmatpush1.bf16.msra.mxu0 %v837
  %1174 = vmatprep.mubr.bf16.mxu0 %v308
  %1175 = vmatmul.mubr.bf16.gmra.mrb[0].mxu0 %v307
  %v1176 = vpop.f32.mrb[0].mxu0
  %v1177 = vadd.f32 %v1136, %v1176
  %v1178 = vpop.f32.mrb[0].mxu0
  %v1179 = vpop.f32.mrb[0].mxu0
  %v1180 = vadd.f32 %v1139, %v1179
  %v1181 = vpop.f32.mrb[0].mxu0
  %1182 = vdwg.mxu0
  %1183 = vmatprep.subr.bf16.mxu0 0
  %1184 = vmatpush1.bf16.msra.mxu0 %v838
  %1185 = vmatprep.subr.bf16.mxu0 0
  %1186 = vmatpush1.bf16.msra.mxu0 %v839
  %1187 = vmatprep.subr.bf16.mxu0 0
  %1188 = vmatpush1.bf16.msra.mxu0 %v840
  %1189 = vmatprep.subr.bf16.mxu0 0
  %1190 = vmatpush1.bf16.msra.mxu0 %v841
  %1191 = vmatprep.subr.bf16.mxu0 0
  %1192 = vmatpush1.bf16.msra.mxu0 %v842
  %1193 = vmatprep.subr.bf16.mxu0 0
  %1194 = vmatpush1.bf16.msra.mxu0 %v843
  %1195 = vmatprep.subr.bf16.mxu0 0
  %1196 = vmatpush1.bf16.msra.mxu0 %v844
  %1197 = vmatprep.subr.bf16.mxu0 0
  %1198 = vmatpush1.bf16.msra.mxu0 %v845
  %1199 = vmatprep.subr.bf16.mxu0 0
  %1200 = vmatpush1.bf16.msra.mxu0 %v846
  %1201 = vmatprep.subr.bf16.mxu0 0
  %1202 = vmatpush1.bf16.msra.mxu0 %v847
  %1203 = vmatprep.subr.bf16.mxu0 0
  %1204 = vmatpush1.bf16.msra.mxu0 %v848
  %1205 = vmatprep.subr.bf16.mxu0 0
  %1206 = vmatpush1.bf16.msra.mxu0 %v849
  %1207 = vmatprep.subr.bf16.mxu0 0
  %1208 = vmatpush1.bf16.msra.mxu0 %v850
  %1209 = vmatprep.subr.bf16.mxu0 0
  %1210 = vmatpush1.bf16.msra.mxu0 %v851
  %1211 = vmatprep.subr.bf16.mxu0 0
  %1212 = vmatpush1.bf16.msra.mxu0 %v852
  %1213 = vmatprep.subr.bf16.mxu0 0
  %1214 = vmatpush1.bf16.msra.mxu0 %v853
  %1215 = vmatprep.mubr.bf16.mxu0 %v310
  %1216 = vmatmul.mubr.bf16.gmra.mrb[0].mxu0 %v309
  %v1217 = vpop.f32.mrb[0].mxu0
  %v1218 = vadd.f32 %v1177, %v1217
  %v1219 = vpop.f32.mrb[0].mxu0
  %v1220 = vpop.f32.mrb[0].mxu0
  %v1221 = vadd.f32 %v1180, %v1220
  %v1222 = vpop.f32.mrb[0].mxu0
  %1223 = vdwg.mxu0
  %1224 = vmatprep.subr.bf16.mxu0 0
  %1225 = vmatpush1.bf16.msra.mxu0 %v854
  %1226 = vmatprep.subr.bf16.mxu0 0
  %1227 = vmatpush1.bf16.msra.mxu0 %v855
  %1228 = vmatprep.subr.bf16.mxu0 0
  %1229 = vmatpush1.bf16.msra.mxu0 %v856
  %1230 = vmatprep.subr.bf16.mxu0 0
  %1231 = vmatpush1.bf16.msra.mxu0 %v857
  %1232 = vmatprep.subr.bf16.mxu0 0
  %1233 = vmatpush1.bf16.msra.mxu0 %v858
  %1234 = vmatprep.subr.bf16.mxu0 0
  %1235 = vmatpush1.bf16.msra.mxu0 %v859
  %1236 = vmatprep.subr.bf16.mxu0 0
  %1237 = vmatpush1.bf16.msra.mxu0 %v860
  %1238 = vmatprep.subr.bf16.mxu0 0
  %1239 = vmatpush1.bf16.msra.mxu0 %v861
  %1240 = vmatprep.subr.bf16.mxu0 0
  %1241 = vmatpush1.bf16.msra.mxu0 %v862
  %1242 = vmatprep.subr.bf16.mxu0 0
  %1243 = vmatpush1.bf16.msra.mxu0 %v863
  %1244 = vmatprep.subr.bf16.mxu0 0
  %1245 = vmatpush1.bf16.msra.mxu0 %v864
  %1246 = vmatprep.subr.bf16.mxu0 0
  %1247 = vmatpush1.bf16.msra.mxu0 %v865
  %1248 = vmatprep.subr.bf16.mxu0 0
  %1249 = vmatpush1.bf16.msra.mxu0 0
  %1250 = vmatprep.subr.bf16.mxu0 0
  %1251 = vmatpush1.bf16.msra.mxu0 0
  %1252 = vmatprep.subr.bf16.mxu0 0
  %1253 = vmatpush1.bf16.msra.mxu0 0
  %1254 = vmatprep.subr.bf16.mxu0 0
  %1255 = vmatpush1.bf16.msra.mxu0 0
  %1256 = vmatprep.mubr.bf16.mxu0 %v976
  %1257 = vmatmul.mubr.bf16.gmra.mrb[0].mxu0 %v311
  %v1258 = vpop.f32.mrb[0].mxu0
  %v1259 = vadd.f32 %v1218, %v1258
  %v1260 = vpop.f32.mrb[0].mxu0
  %v1261 = vpop.f32.mrb[0].mxu0
  %v1262 = vadd.f32 %v1221, %v1261
  %v1263 = vpop.f32.mrb[0].mxu0
  %1264 = vdwg.mxu0
  %v1265 = vmax.f32 %v1259, 0.0
  %v1266 = vmax.f32 %v1262, 0.0
  %1267 = vst [vmem:[%s3] sm:$0xff] %v1265
  %1268 = vst [vmem:[%s3 + $0x8] sm:$0xff] %v1266
  // Predicated region
  $region14: #{sdenet_forward.42} parent=0 // pred_check
    _
  $region15: #{sdenet_forward.42} parent=0 // pred_check_branch
    %1270 = sbr.rel (0) target = $region17
  $region16: #{sdenet_forward.42} parent=0 // pred_region
    _
  $region17: #{sdenet_forward.42} parent=0 // pred_fallthru
    _
  // Predicated region
  $region18: #{sdenet_forward.42} parent=0 // pred_check
    _
  $region19: #{sdenet_forward.42} parent=0 // pred_check_branch
    %1272 = sbr.rel (0) target = $region21
  $region20: #{sdenet_forward.42} parent=0 // pred_region
    _
  $region21: #{sdenet_forward.42} parent=0 // pred_fallthru
    _

// kernel: sdenet_forward.43
$region0: #{sdenet_forward.43}
  #allocation0 [shape = 'u32[]', space=smem, size = 0x4, offset = 0x4, fixed_abs, tag = 'smem constant byte address 0x4 - core index']
  #allocation1 [shape = 'u32[144,128]{1,0:T(1,128)}', space=vmem, size = 0x12000, scoped, tag = 'internal scratch']
  %s0 = inlined_call_operand.vmem [shape: bf16[432,128], index: 0, kind: input, shape index: {}]
  %s1 = inlined_call_operand.vmem [shape: bf16[16,432], index: 1, kind: input, shape index: {}]
  %s2 = inlined_call_operand.vmem [shape: f32[16,1], index: 2, kind: input, shape index: {}]
  %s3 = inlined_call_operand.vmem [shape: f32[16,128], index: 3, kind: output, shape index: {}]
  %s4 = sld [smem:[#allocation0]]
  $region22: #{sdenet_forward.43} parent=0
    _
  %s6 = ssub.s32 1, %s4
  %s7 = scalar_select 0, %s6, %s4
  // Predicated region
  $region2: #{sdenet_forward.43} parent=0 // pred_check
    _
  $region3: #{sdenet_forward.43} parent=0 // pred_check_branch
    %9 = sbr.rel (0) target = $region5
  $region4: #{sdenet_forward.43} parent=0 // pred_region
    _
  $region5: #{sdenet_forward.43} parent=0 // pred_fallthru
    _
  // Predicated region
  $region6: #{sdenet_forward.43} parent=0 // pred_check
    _
  $region7: #{sdenet_forward.43} parent=0 // pred_check_branch
    %11 = sbr.rel (0) target = $region9
  $region8: #{sdenet_forward.43} parent=0 // pred_region
    _
  $region9: #{sdenet_forward.43} parent=0 // pred_fallthru
    _
  // Predicated region
  $region10: #{sdenet_forward.43} parent=0 // pred_check
    _
  $region11: #{sdenet_forward.43} parent=0 // pred_check_branch
    %13 = sbr.rel (0) target = $region13
  $region12: #{sdenet_forward.43} parent=0 // pred_region
    _
  $region13: #{sdenet_forward.43} parent=0 // pred_fallthru
    _
  %v15 = vld [vmem:[%s1] sm:$0xff]
  %v16 = vld [vmem:[%s1 + $0x8] sm:$0xff]
  %v17 = vld [vmem:[%s1 + $0x10] sm:$0xff]
  %v18 = vld [vmem:[%s1 + $0x18] sm:$0xff]
  %v19 = vld [vmem:[%s0] sm:$0xf]
  %v20 = vld [vmem:[%s0 + $0x4] sm:$0xf]
  %v21 = vld [vmem:[%s0 + $0x8] sm:$0xf]
  %v22 = vld [vmem:[%s0 + $0xc] sm:$0xf]
  %v23 = vld [vmem:[%s0 + $0x10] sm:$0xf]
  %v24 = vld [vmem:[%s0 + $0x14] sm:$0xf]
  %v25 = vld [vmem:[%s0 + $0x18] sm:$0xf]
  %v26 = vld [vmem:[%s0 + $0x1c] sm:$0xf]
  %v27 = vld [vmem:[%s0 + $0x20] sm:$0xf]
  %v28 = vld [vmem:[%s0 + $0x24] sm:$0xf]
  %v29 = vld [vmem:[%s0 + $0x28] sm:$0xf]
  %v30 = vld [vmem:[%s0 + $0x2c] sm:$0xf]
  %v31 = vld [vmem:[%s0 + $0x30] sm:$0xf]
  %v32 = vld [vmem:[%s0 + $0x34] sm:$0xf]
  %v33 = vld [vmem:[%s0 + $0x38] sm:$0xf]
  %v34 = vld [vmem:[%s0 + $0x3c] sm:$0xf]
  %v35 = vld [vmem:[%s0 + $0x40] sm:$0xf]
  %v36 = vld [vmem:[%s0 + $0x44] sm:$0xf]
  %v37 = vld [vmem:[%s0 + $0x48] sm:$0xf]
  %v38 = vld [vmem:[%s0 + $0x4c] sm:$0xf]
  %v39 = vld [vmem:[%s0 + $0x50] sm:$0xf]
  %v40 = vld [vmem:[%s0 + $0x54] sm:$0xf]
  %v41 = vld [vmem:[%s0 + $0x58] sm:$0xf]
  %v42 = vld [vmem:[%s0 + $0x5c] sm:$0xf]
  %v43 = vld [vmem:[%s0 + $0x60] sm:$0xf]
  %v44 = vld [vmem:[%s0 + $0x64] sm:$0xf]
  %v45 = vld [vmem:[%s0 + $0x68] sm:$0xf]
  %v46 = vld [vmem:[%s0 + $0x6c] sm:$0xf]
  %v47 = vld [vmem:[%s0 + $0x70] sm:$0xf]
  %v48 = vld [vmem:[%s0 + $0x74] sm:$0xf]
  %v49 = vld [vmem:[%s0 + $0x78] sm:$0xf]
  %v50 = vld [vmem:[%s0 + $0x7c] sm:$0xf]
  %v51 = vld [vmem:[%s0 + $0x80] sm:$0xf]
  %v52 = vld [vmem:[%s0 + $0x84] sm:$0xf]
  %v53 = vld [vmem:[%s0 + $0x88] sm:$0xf]
  %v54 = vld [vmem:[%s0 + $0x8c] sm:$0xf]
  %v55 = vld [vmem:[%s0 + $0x90] sm:$0xf]
  %v56 = vld [vmem:[%s0 + $0x94] sm:$0xf]
  %v57 = vld [vmem:[%s0 + $0x98] sm:$0xf]
  %v58 = vld [vmem:[%s0 + $0x9c] sm:$0xf]
  %v59 = vld [vmem:[%s0 + $0xa0] sm:$0xf]
  %v60 = vld [vmem:[%s0 + $0xa4] sm:$0xf]
  %v61 = vld [vmem:[%s0 + $0xa8] sm:$0xf]
  %v62 = vld [vmem:[%s0 + $0xac] sm:$0xf]
  %v63 = vld [vmem:[%s0 + $0xb0] sm:$0xf]
  %v64 = vld [vmem:[%s0 + $0xb4] sm:$0xf]
  %v65 = vld [vmem:[%s0 + $0xb8] sm:$0xf]
  %v66 = vld [vmem:[%s0 + $0xbc] sm:$0xf]
  %v67 = vld [vmem:[%s0 + $0xc0] sm:$0xf]
  %v68 = vld [vmem:[%s0 + $0xc4] sm:$0xf]
  %v69 = vld [vmem:[%s0 + $0xc8] sm:$0xf]
  %v70 = vld [vmem:[%s0 + $0xcc] sm:$0xf]
  %v71 = vld [vmem:[%s0 + $0xd0] sm:$0xf]
  %v72 = vld [vmem:[%s0 + $0xd4] sm:$0xf]
  %v73 = vld [vmem:[%s2] sm:$0xff]
  %v74 = vld [vmem:[%s2 + $0x8] sm:$0xff]
  %76 = vset.pattern.permute.xlu0 0
  %77 = vperm.xlu0 %76, %v73
  %v78 = vpop.permute.xlu0 %77
  %81 = vset.pattern.permute.xlu0 0
  %82 = vperm.xlu0 %81, %v74
  %v83 = vpop.permute.xlu0 %82
  %v89 = vunpack.c.l.b16 %v15
  %v90 = vunpack.c.h.b16 %v15
  %v91 = vunpack.c.l.b16 %v16
  %v92 = vunpack.c.h.b16 %v16
  %v93 = vunpack.c.l.b16 %v17
  %v94 = vunpack.c.h.b16 %v17
  %v95 = vunpack.c.l.b16 %v18
  %v96 = vunpack.c.h.b16 %v18
  %v97 = vpack.c.b16 %v93, %v89
  %v98 = vpack.c.b16 %v94, %v90
  %v99 = vpack.c.b16 %v95, %v91
  %v100 = vpack.c.b16 %v96, %v92
  %v158 = vunpack.c.l.b16 %v19
  %v159 = vunpack.c.l.b16 %v20
  %v160 = vunpack.c.l.b16 %v21
  %v161 = vunpack.c.l.b16 %v22
  %v162 = vunpack.c.l.b16 %v23
  %v163 = vunpack.c.l.b16 %v24
  %v164 = vunpack.c.l.b16 %v25
  %v165 = vunpack.c.l.b16 %v26
  %v166 = vunpack.c.l.b16 %v27
  %v167 = vunpack.c.l.b16 %v28
  %v168 = vunpack.c.l.b16 %v29
  %v169 = vunpack.c.l.b16 %v30
  %v170 = vunpack.c.l.b16 %v31
  %v171 = vunpack.c.l.b16 %v32
  %v172 = vunpack.c.l.b16 %v33
  %v173 = vunpack.c.l.b16 %v34
  %v174 = vunpack.c.l.b16 %v35
  %v175 = vunpack.c.l.b16 %v36
  %v176 = vunpack.c.l.b16 %v37
  %v177 = vunpack.c.l.b16 %v38
  %v178 = vunpack.c.l.b16 %v39
  %v179 = vunpack.c.l.b16 %v40
  %v180 = vunpack.c.l.b16 %v41
  %v181 = vunpack.c.l.b16 %v42
  %v182 = vunpack.c.l.b16 %v43
  %v183 = vunpack.c.l.b16 %v44
  %v184 = vunpack.c.l.b16 %v45
  %v185 = vunpack.c.l.b16 %v46
  %v186 = vunpack.c.l.b16 %v47
  %v187 = vunpack.c.l.b16 %v48
  %v188 = vunpack.c.l.b16 %v49
  %v189 = vunpack.c.l.b16 %v50
  %v190 = vunpack.c.l.b16 %v51
  %v191 = vunpack.c.l.b16 %v52
  %v192 = vunpack.c.l.b16 %v53
  %v193 = vunpack.c.l.b16 %v54
  %v194 = vunpack.c.l.b16 %v55
  %v195 = vunpack.c.l.b16 %v56
  %v196 = vunpack.c.l.b16 %v57
  %v197 = vunpack.c.l.b16 %v58
  %v198 = vunpack.c.l.b16 %v59
  %v199 = vunpack.c.l.b16 %v60
  %v200 = vunpack.c.l.b16 %v61
  %v201 = vunpack.c.l.b16 %v62
  %v202 = vunpack.c.l.b16 %v63
  %v203 = vunpack.c.l.b16 %v64
  %v204 = vunpack.c.l.b16 %v65
  %v205 = vunpack.c.l.b16 %v66
  %v206 = vunpack.c.l.b16 %v67
  %v207 = vunpack.c.l.b16 %v68
  %v208 = vunpack.c.l.b16 %v69
  %v209 = vunpack.c.l.b16 %v70
  %v210 = vunpack.c.l.b16 %v71
  %v211 = vunpack.c.l.b16 %v72
  %v212 = vpack.c.b16 %v159, %v158
  %v213 = vpack.c.b16 %v161, %v160
  %v214 = vpack.c.b16 %v163, %v162
  %v215 = vpack.c.b16 %v165, %v164
  %v216 = vpack.c.b16 %v167, %v166
  %v217 = vpack.c.b16 %v169, %v168
  %v218 = vpack.c.b16 %v171, %v170
  %v219 = vpack.c.b16 %v173, %v172
  %v220 = vpack.c.b16 %v175, %v174
  %v221 = vpack.c.b16 %v177, %v176
  %v222 = vpack.c.b16 %v179, %v178
  %v223 = vpack.c.b16 %v181, %v180
  %v224 = vpack.c.b16 %v183, %v182
  %v225 = vpack.c.b16 %v185, %v184
  %v226 = vpack.c.b16 %v187, %v186
  %v227 = vpack.c.b16 %v189, %v188
  %v228 = vpack.c.b16 %v191, %v190
  %v229 = vpack.c.b16 %v193, %v192
  %v230 = vpack.c.b16 %v195, %v194
  %v231 = vpack.c.b16 %v197, %v196
  %v232 = vpack.c.b16 %v199, %v198
  %v233 = vpack.c.b16 %v201, %v200
  %v234 = vpack.c.b16 %v203, %v202
  %v235 = vpack.c.b16 %v205, %v204
  %v236 = vpack.c.b16 %v207, %v206
  %v237 = vpack.c.b16 %v209, %v208
  %v238 = vpack.c.b16 %v211, %v210
  %vm266 = vcmask 392192
  %v268 = vsel %vm266, %v100, 0
  %270 = vmatprep.subr.bf16.mxu0 0
  %271 = vmatpush1.bf16.msra.mxu0 %v212
  %272 = vmatprep.subr.bf16.mxu0 0
  %273 = vmatpush1.bf16.msra.mxu0 %v213
  %274 = vmatprep.subr.bf16.mxu0 0
  %275 = vmatpush1.bf16.msra.mxu0 %v214
  %276 = vmatprep.subr.bf16.mxu0 0
  %277 = vmatpush1.bf16.msra.mxu0 %v215
  %278 = vmatprep.subr.bf16.mxu0 0
  %279 = vmatpush1.bf16.msra.mxu0 %v216
  %280 = vmatprep.subr.bf16.mxu0 0
  %281 = vmatpush1.bf16.msra.mxu0 %v217
  %282 = vmatprep.subr.bf16.mxu0 0
  %283 = vmatpush1.bf16.msra.mxu0 %v218
  %284 = vmatprep.subr.bf16.mxu0 0
  %285 = vmatpush1.bf16.msra.mxu0 %v219
  %286 = vmatprep.subr.bf16.mxu0 0
  %287 = vmatpush1.bf16.msra.mxu0 %v220
  %288 = vmatprep.subr.bf16.mxu0 0
  %289 = vmatpush1.bf16.msra.mxu0 %v221
  %290 = vmatprep.subr.bf16.mxu0 0
  %291 = vmatpush1.bf16.msra.mxu0 %v222
  %292 = vmatprep.subr.bf16.mxu0 0
  %293 = vmatpush1.bf16.msra.mxu0 %v223
  %294 = vmatprep.subr.bf16.mxu0 0
  %295 = vmatpush1.bf16.msra.mxu0 %v224
  %296 = vmatprep.subr.bf16.mxu0 0
  %297 = vmatpush1.bf16.msra.mxu0 %v225
  %298 = vmatprep.subr.bf16.mxu0 0
  %299 = vmatpush1.bf16.msra.mxu0 %v226
  %300 = vmatprep.subr.bf16.mxu0 0
  %301 = vmatpush1.bf16.msra.mxu0 %v227
  %302 = vmatprep.mubr.bf16.mxu0 %v98
  %303 = vmatmul.mubr.bf16.gmra.mrb[0].mxu0 %v97
  %v304 = vpop.f32.mrb[0].mxu0
  %v305 = vadd.f32 %v78, %v304
  %v306 = vpop.f32.mrb[0].mxu0
  %v307 = vpop.f32.mrb[0].mxu0
  %v308 = vadd.f32 %v83, %v307
  %v309 = vpop.f32.mrb[0].mxu0
  %310 = vdwg.mxu0
  %311 = vmatprep.subr.bf16.mxu0 0
  %312 = vmatpush1.bf16.msra.mxu0 %v228
  %313 = vmatprep.subr.bf16.mxu0 0
  %314 = vmatpush1.bf16.msra.mxu0 %v229
  %315 = vmatprep.subr.bf16.mxu0 0
  %316 = vmatpush1.bf16.msra.mxu0 %v230
  %317 = vmatprep.subr.bf16.mxu0 0
  %318 = vmatpush1.bf16.msra.mxu0 %v231
  %319 = vmatprep.subr.bf16.mxu0 0
  %320 = vmatpush1.bf16.msra.mxu0 %v232
  %321 = vmatprep.subr.bf16.mxu0 0
  %322 = vmatpush1.bf16.msra.mxu0 %v233
  %323 = vmatprep.subr.bf16.mxu0 0
  %324 = vmatpush1.bf16.msra.mxu0 %v234
  %325 = vmatprep.subr.bf16.mxu0 0
  %326 = vmatpush1.bf16.msra.mxu0 %v235
  %327 = vmatprep.subr.bf16.mxu0 0
  %328 = vmatpush1.bf16.msra.mxu0 %v236
  %329 = vmatprep.subr.bf16.mxu0 0
  %330 = vmatpush1.bf16.msra.mxu0 %v237
  %331 = vmatprep.subr.bf16.mxu0 0
  %332 = vmatpush1.bf16.msra.mxu0 %v238
  %333 = vmatprep.subr.bf16.mxu0 0
  %334 = vmatpush1.bf16.msra.mxu0 0
  %335 = vmatprep.subr.bf16.mxu0 0
  %336 = vmatpush1.bf16.msra.mxu0 0
  %337 = vmatprep.subr.bf16.mxu0 0
  %338 = vmatpush1.bf16.msra.mxu0 0
  %339 = vmatprep.subr.bf16.mxu0 0
  %340 = vmatpush1.bf16.msra.mxu0 0
  %341 = vmatprep.subr.bf16.mxu0 0
  %342 = vmatpush1.bf16.msra.mxu0 0
  %343 = vmatprep.mubr.bf16.mxu0 %v268
  %344 = vmatmul.mubr.bf16.gmra.mrb[0].mxu0 %v99
  %v345 = vpop.f32.mrb[0].mxu0
  %v346 = vadd.f32 %v305, %v345
  %v347 = vpop.f32.mrb[0].mxu0
  %v348 = vpop.f32.mrb[0].mxu0
  %v349 = vadd.f32 %v308, %v348
  %v350 = vpop.f32.mrb[0].mxu0
  %351 = vdwg.mxu0
  %v352 = vmax.f32 %v346, 0.0
  %v353 = vmax.f32 %v349, 0.0
  %354 = vst [vmem:[%s3] sm:$0xff] %v352
  %355 = vst [vmem:[%s3 + $0x8] sm:$0xff] %v353
  // Predicated region
  $region14: #{sdenet_forward.43} parent=0 // pred_check
    _
  $region15: #{sdenet_forward.43} parent=0 // pred_check_branch
    %357 = sbr.rel (0) target = $region17
  $region16: #{sdenet_forward.43} parent=0 // pred_region
    _
  $region17: #{sdenet_forward.43} parent=0 // pred_fallthru
    _
  // Predicated region
  $region18: #{sdenet_forward.43} parent=0 // pred_check
    _
  $region19: #{sdenet_forward.43} parent=0 // pred_check_branch
    %359 = sbr.rel (0) target = $region21
  $region20: #{sdenet_forward.43} parent=0 // pred_region
    _
  $region21: #{sdenet_forward.43} parent=0 // pred_fallthru
    _

// kernel: sdenet_forward.44
$region0: #{sdenet_forward.44}
  #allocation0 [shape = 'u32[]', space=smem, size = 0x4, offset = 0x4, fixed_abs, tag = 'smem constant byte address 0x4 - core index']
  #allocation1 [shape = 'u32[144,128]{1,0:T(1,128)}', space=vmem, size = 0x12000, scoped, tag = 'internal scratch']
  %s0 = inlined_call_operand.vmem [shape: bf16[432,128], index: 0, kind: input, shape index: {}]
  %s1 = inlined_call_operand.vmem [shape: bf16[16,432], index: 1, kind: input, shape index: {}]
  %s2 = inlined_call_operand.vmem [shape: f32[16,1], index: 2, kind: input, shape index: {}]
  %s3 = inlined_call_operand.vmem [shape: f32[16,128], index: 3, kind: input, shape index: {}]
  %s4 = inlined_call_operand.vmem [shape: f32[16,128], index: 4, kind: output, shape index: {}]
  %s5 = sld [smem:[#allocation0]]
  $region26: #{sdenet_forward.44} parent=0
    _
  %s7 = ssub.s32 1, %s5
  %s8 = scalar_select 0, %s7, %s5
  // Predicated region
  $region2: #{sdenet_forward.44} parent=0 // pred_check
    _
  $region3: #{sdenet_forward.44} parent=0 // pred_check_branch
    %10 = sbr.rel (0) target = $region5
  $region4: #{sdenet_forward.44} parent=0 // pred_region
    _
  $region5: #{sdenet_forward.44} parent=0 // pred_fallthru
    _
  // Predicated region
  $region6: #{sdenet_forward.44} parent=0 // pred_check
    _
  $region7: #{sdenet_forward.44} parent=0 // pred_check_branch
    %12 = sbr.rel (0) target = $region9
  $region8: #{sdenet_forward.44} parent=0 // pred_region
    _
  $region9: #{sdenet_forward.44} parent=0 // pred_fallthru
    _
  // Predicated region
  $region10: #{sdenet_forward.44} parent=0 // pred_check
    _
  $region11: #{sdenet_forward.44} parent=0 // pred_check_branch
    %14 = sbr.rel (0) target = $region13
  $region12: #{sdenet_forward.44} parent=0 // pred_region
    _
  $region13: #{sdenet_forward.44} parent=0 // pred_fallthru
    _
  // Predicated region
  $region14: #{sdenet_forward.44} parent=0 // pred_check
    _
  $region15: #{sdenet_forward.44} parent=0 // pred_check_branch
    %16 = sbr.rel (0) target = $region17
  $region16: #{sdenet_forward.44} parent=0 // pred_region
    _
  $region17: #{sdenet_forward.44} parent=0 // pred_fallthru
    _
  %v18 = vld [vmem:[%s1] sm:$0xff]
  %v19 = vld [vmem:[%s1 + $0x8] sm:$0xff]
  %v20 = vld [vmem:[%s1 + $0x10] sm:$0xff]
  %v21 = vld [vmem:[%s1 + $0x18] sm:$0xff]
  %v22 = vld [vmem:[%s0] sm:$0xf]
  %v23 = vld [vmem:[%s0 + $0x4] sm:$0xf]
  %v24 = vld [vmem:[%s0 + $0x8] sm:$0xf]
  %v25 = vld [vmem:[%s0 + $0xc] sm:$0xf]
  %v26 = vld [vmem:[%s0 + $0x10] sm:$0xf]
  %v27 = vld [vmem:[%s0 + $0x14] sm:$0xf]
  %v28 = vld [vmem:[%s0 + $0x18] sm:$0xf]
  %v29 = vld [vmem:[%s0 + $0x1c] sm:$0xf]
  %v30 = vld [vmem:[%s0 + $0x20] sm:$0xf]
  %v31 = vld [vmem:[%s0 + $0x24] sm:$0xf]
  %v32 = vld [vmem:[%s0 + $0x28] sm:$0xf]
  %v33 = vld [vmem:[%s0 + $0x2c] sm:$0xf]
  %v34 = vld [vmem:[%s0 + $0x30] sm:$0xf]
  %v35 = vld [vmem:[%s0 + $0x34] sm:$0xf]
  %v36 = vld [vmem:[%s0 + $0x38] sm:$0xf]
  %v37 = vld [vmem:[%s0 + $0x3c] sm:$0xf]
  %v38 = vld [vmem:[%s0 + $0x40] sm:$0xf]
  %v39 = vld [vmem:[%s0 + $0x44] sm:$0xf]
  %v40 = vld [vmem:[%s0 + $0x48] sm:$0xf]
  %v41 = vld [vmem:[%s0 + $0x4c] sm:$0xf]
  %v42 = vld [vmem:[%s0 + $0x50] sm:$0xf]
  %v43 = vld [vmem:[%s0 + $0x54] sm:$0xf]
  %v44 = vld [vmem:[%s0 + $0x58] sm:$0xf]
  %v45 = vld [vmem:[%s0 + $0x5c] sm:$0xf]
  %v46 = vld [vmem:[%s0 + $0x60] sm:$0xf]
  %v47 = vld [vmem:[%s0 + $0x64] sm:$0xf]
  %v48 = vld [vmem:[%s0 + $0x68] sm:$0xf]
  %v49 = vld [vmem:[%s0 + $0x6c] sm:$0xf]
  %v50 = vld [vmem:[%s0 + $0x70] sm:$0xf]
  %v51 = vld [vmem:[%s0 + $0x74] sm:$0xf]
  %v52 = vld [vmem:[%s0 + $0x78] sm:$0xf]
  %v53 = vld [vmem:[%s0 + $0x7c] sm:$0xf]
  %v54 = vld [vmem:[%s0 + $0x80] sm:$0xf]
  %v55 = vld [vmem:[%s0 + $0x84] sm:$0xf]
  %v56 = vld [vmem:[%s0 + $0x88] sm:$0xf]
  %v57 = vld [vmem:[%s0 + $0x8c] sm:$0xf]
  %v58 = vld [vmem:[%s0 + $0x90] sm:$0xf]
  %v59 = vld [vmem:[%s0 + $0x94] sm:$0xf]
  %v60 = vld [vmem:[%s0 + $0x98] sm:$0xf]
  %v61 = vld [vmem:[%s0 + $0x9c] sm:$0xf]
  %v62 = vld [vmem:[%s0 + $0xa0] sm:$0xf]
  %v63 = vld [vmem:[%s0 + $0xa4] sm:$0xf]
  %v64 = vld [vmem:[%s0 + $0xa8] sm:$0xf]
  %v65 = vld [vmem:[%s0 + $0xac] sm:$0xf]
  %v66 = vld [vmem:[%s0 + $0xb0] sm:$0xf]
  %v67 = vld [vmem:[%s0 + $0xb4] sm:$0xf]
  %v68 = vld [vmem:[%s0 + $0xb8] sm:$0xf]
  %v69 = vld [vmem:[%s0 + $0xbc] sm:$0xf]
  %v70 = vld [vmem:[%s0 + $0xc0] sm:$0xf]
  %v71 = vld [vmem:[%s0 + $0xc4] sm:$0xf]
  %v72 = vld [vmem:[%s0 + $0xc8] sm:$0xf]
  %v73 = vld [vmem:[%s0 + $0xcc] sm:$0xf]
  %v74 = vld [vmem:[%s0 + $0xd0] sm:$0xf]
  %v75 = vld [vmem:[%s0 + $0xd4] sm:$0xf]
  %v76 = vld [vmem:[%s2] sm:$0xff]
  %v77 = vld [vmem:[%s2 + $0x8] sm:$0xff]
  %79 = vset.pattern.permute.xlu0 0
  %80 = vperm.xlu0 %79, %v76
  %v81 = vpop.permute.xlu0 %80
  %84 = vset.pattern.permute.xlu0 0
  %85 = vperm.xlu0 %84, %v77
  %v86 = vpop.permute.xlu0 %85
  %v92 = vunpack.c.l.b16 %v18
  %v93 = vunpack.c.h.b16 %v18
  %v94 = vunpack.c.l.b16 %v19
  %v95 = vunpack.c.h.b16 %v19
  %v96 = vunpack.c.l.b16 %v20
  %v97 = vunpack.c.h.b16 %v20
  %v98 = vunpack.c.l.b16 %v21
  %v99 = vunpack.c.h.b16 %v21
  %v100 = vpack.c.b16 %v96, %v92
  %v101 = vpack.c.b16 %v97, %v93
  %v102 = vpack.c.b16 %v98, %v94
  %v103 = vpack.c.b16 %v99, %v95
  %v161 = vunpack.c.l.b16 %v22
  %v162 = vunpack.c.l.b16 %v23
  %v163 = vunpack.c.l.b16 %v24
  %v164 = vunpack.c.l.b16 %v25
  %v165 = vunpack.c.l.b16 %v26
  %v166 = vunpack.c.l.b16 %v27
  %v167 = vunpack.c.l.b16 %v28
  %v168 = vunpack.c.l.b16 %v29
  %v169 = vunpack.c.l.b16 %v30
  %v170 = vunpack.c.l.b16 %v31
  %v171 = vunpack.c.l.b16 %v32
  %v172 = vunpack.c.l.b16 %v33
  %v173 = vunpack.c.l.b16 %v34
  %v174 = vunpack.c.l.b16 %v35
  %v175 = vunpack.c.l.b16 %v36
  %v176 = vunpack.c.l.b16 %v37
  %v177 = vunpack.c.l.b16 %v38
  %v178 = vunpack.c.l.b16 %v39
  %v179 = vunpack.c.l.b16 %v40
  %v180 = vunpack.c.l.b16 %v41
  %v181 = vunpack.c.l.b16 %v42
  %v182 = vunpack.c.l.b16 %v43
  %v183 = vunpack.c.l.b16 %v44
  %v184 = vunpack.c.l.b16 %v45
  %v185 = vunpack.c.l.b16 %v46
  %v186 = vunpack.c.l.b16 %v47
  %v187 = vunpack.c.l.b16 %v48
  %v188 = vunpack.c.l.b16 %v49
  %v189 = vunpack.c.l.b16 %v50
  %v190 = vunpack.c.l.b16 %v51
  %v191 = vunpack.c.l.b16 %v52
  %v192 = vunpack.c.l.b16 %v53
  %v193 = vunpack.c.l.b16 %v54
  %v194 = vunpack.c.l.b16 %v55
  %v195 = vunpack.c.l.b16 %v56
  %v196 = vunpack.c.l.b16 %v57
  %v197 = vunpack.c.l.b16 %v58
  %v198 = vunpack.c.l.b16 %v59
  %v199 = vunpack.c.l.b16 %v60
  %v200 = vunpack.c.l.b16 %v61
  %v201 = vunpack.c.l.b16 %v62
  %v202 = vunpack.c.l.b16 %v63
  %v203 = vunpack.c.l.b16 %v64
  %v204 = vunpack.c.l.b16 %v65
  %v205 = vunpack.c.l.b16 %v66
  %v206 = vunpack.c.l.b16 %v67
  %v207 = vunpack.c.l.b16 %v68
  %v208 = vunpack.c.l.b16 %v69
  %v209 = vunpack.c.l.b16 %v70
  %v210 = vunpack.c.l.b16 %v71
  %v211 = vunpack.c.l.b16 %v72
  %v212 = vunpack.c.l.b16 %v73
  %v213 = vunpack.c.l.b16 %v74
  %v214 = vunpack.c.l.b16 %v75
  %v215 = vpack.c.b16 %v162, %v161
  %v216 = vpack.c.b16 %v164, %v163
  %v217 = vpack.c.b16 %v166, %v165
  %v218 = vpack.c.b16 %v168, %v167
  %v219 = vpack.c.b16 %v170, %v169
  %v220 = vpack.c.b16 %v172, %v171
  %v221 = vpack.c.b16 %v174, %v173
  %v222 = vpack.c.b16 %v176, %v175
  %v223 = vpack.c.b16 %v178, %v177
  %v224 = vpack.c.b16 %v180, %v179
  %v225 = vpack.c.b16 %v182, %v181
  %v226 = vpack.c.b16 %v184, %v183
  %v227 = vpack.c.b16 %v186, %v185
  %v228 = vpack.c.b16 %v188, %v187
  %v229 = vpack.c.b16 %v190, %v189
  %v230 = vpack.c.b16 %v192, %v191
  %v231 = vpack.c.b16 %v194, %v193
  %v232 = vpack.c.b16 %v196, %v195
  %v233 = vpack.c.b16 %v198, %v197
  %v234 = vpack.c.b16 %v200, %v199
  %v235 = vpack.c.b16 %v202, %v201
  %v236 = vpack.c.b16 %v204, %v203
  %v237 = vpack.c.b16 %v206, %v205
  %v238 = vpack.c.b16 %v208, %v207
  %v239 = vpack.c.b16 %v210, %v209
  %v240 = vpack.c.b16 %v212, %v211
  %v241 = vpack.c.b16 %v214, %v213
  %vm269 = vcmask 392192
  %v271 = vsel %vm269, %v103, 0
  %273 = vmatprep.subr.bf16.mxu0 0
  %274 = vmatpush1.bf16.msra.mxu0 %v215
  %275 = vmatprep.subr.bf16.mxu0 0
  %276 = vmatpush1.bf16.msra.mxu0 %v216
  %277 = vmatprep.subr.bf16.mxu0 0
  %278 = vmatpush1.bf16.msra.mxu0 %v217
  %279 = vmatprep.subr.bf16.mxu0 0
  %280 = vmatpush1.bf16.msra.mxu0 %v218
  %281 = vmatprep.subr.bf16.mxu0 0
  %282 = vmatpush1.bf16.msra.mxu0 %v219
  %283 = vmatprep.subr.bf16.mxu0 0
  %284 = vmatpush1.bf16.msra.mxu0 %v220
  %285 = vmatprep.subr.bf16.mxu0 0
  %286 = vmatpush1.bf16.msra.mxu0 %v221
  %287 = vmatprep.subr.bf16.mxu0 0
  %288 = vmatpush1.bf16.msra.mxu0 %v222
  %289 = vmatprep.subr.bf16.mxu0 0
  %290 = vmatpush1.bf16.msra.mxu0 %v223
  %291 = vmatprep.subr.bf16.mxu0 0
  %292 = vmatpush1.bf16.msra.mxu0 %v224
  %293 = vmatprep.subr.bf16.mxu0 0
  %294 = vmatpush1.bf16.msra.mxu0 %v225
  %295 = vmatprep.subr.bf16.mxu0 0
  %296 = vmatpush1.bf16.msra.mxu0 %v226
  %297 = vmatprep.subr.bf16.mxu0 0
  %298 = vmatpush1.bf16.msra.mxu0 %v227
  %299 = vmatprep.subr.bf16.mxu0 0
  %300 = vmatpush1.bf16.msra.mxu0 %v228
  %301 = vmatprep.subr.bf16.mxu0 0
  %302 = vmatpush1.bf16.msra.mxu0 %v229
  %303 = vmatprep.subr.bf16.mxu0 0
  %304 = vmatpush1.bf16.msra.mxu0 %v230
  %305 = vmatprep.mubr.bf16.mxu0 %v101
  %306 = vmatmul.mubr.bf16.gmra.mrb[0].mxu0 %v100
  %v307 = vpop.f32.mrb[0].mxu0
  %v308 = vadd.f32 %v81, %v307
  %v309 = vpop.f32.mrb[0].mxu0
  %v310 = vpop.f32.mrb[0].mxu0
  %v311 = vadd.f32 %v86, %v310
  %v312 = vpop.f32.mrb[0].mxu0
  %313 = vdwg.mxu0
  %314 = vmatprep.subr.bf16.mxu0 0
  %315 = vmatpush1.bf16.msra.mxu0 %v231
  %316 = vmatprep.subr.bf16.mxu0 0
  %317 = vmatpush1.bf16.msra.mxu0 %v232
  %318 = vmatprep.subr.bf16.mxu0 0
  %319 = vmatpush1.bf16.msra.mxu0 %v233
  %320 = vmatprep.subr.bf16.mxu0 0
  %321 = vmatpush1.bf16.msra.mxu0 %v234
  %322 = vmatprep.subr.bf16.mxu0 0
  %323 = vmatpush1.bf16.msra.mxu0 %v235
  %324 = vmatprep.subr.bf16.mxu0 0
  %325 = vmatpush1.bf16.msra.mxu0 %v236
  %326 = vmatprep.subr.bf16.mxu0 0
  %327 = vmatpush1.bf16.msra.mxu0 %v237
  %328 = vmatprep.subr.bf16.mxu0 0
  %329 = vmatpush1.bf16.msra.mxu0 %v238
  %330 = vmatprep.subr.bf16.mxu0 0
  %331 = vmatpush1.bf16.msra.mxu0 %v239
  %332 = vmatprep.subr.bf16.mxu0 0
  %333 = vmatpush1.bf16.msra.mxu0 %v240
  %334 = vmatprep.subr.bf16.mxu0 0
  %335 = vmatpush1.bf16.msra.mxu0 %v241
  %336 = vmatprep.subr.bf16.mxu0 0
  %337 = vmatpush1.bf16.msra.mxu0 0
  %338 = vmatprep.subr.bf16.mxu0 0
  %339 = vmatpush1.bf16.msra.mxu0 0
  %340 = vmatprep.subr.bf16.mxu0 0
  %341 = vmatpush1.bf16.msra.mxu0 0
  %342 = vmatprep.subr.bf16.mxu0 0
  %343 = vmatpush1.bf16.msra.mxu0 0
  %344 = vmatprep.subr.bf16.mxu0 0
  %345 = vmatpush1.bf16.msra.mxu0 0
  %346 = vmatprep.mubr.bf16.mxu0 %v271
  %347 = vmatmul.mubr.bf16.gmra.mrb[0].mxu0 %v102
  %v348 = vpop.f32.mrb[0].mxu0
  %v349 = vadd.f32 %v308, %v348
  %v350 = vpop.f32.mrb[0].mxu0
  %v351 = vpop.f32.mrb[0].mxu0
  %v352 = vadd.f32 %v311, %v351
  %v353 = vpop.f32.mrb[0].mxu0
  %354 = vdwg.mxu0
  %v355 = vld [vmem:[%s3] sm:$0xff]
  %v356 = vld [vmem:[%s3 + $0x8] sm:$0xff]
  %v357 = vadd.f32 %v349, %v355
  %v358 = vadd.f32 %v352, %v356
  %v359 = vmax.f32 %v357, 0.0
  %v360 = vmax.f32 %v358, 0.0
  %361 = vst [vmem:[%s4] sm:$0xff] %v359
  %362 = vst [vmem:[%s4 + $0x8] sm:$0xff] %v360
  // Predicated region
  $region18: #{sdenet_forward.44} parent=0 // pred_check
    _
  $region19: #{sdenet_forward.44} parent=0 // pred_check_branch
    %364 = sbr.rel (0) target = $region21
  $region20: #{sdenet_forward.44} parent=0 // pred_region
    _
  $region21: #{sdenet_forward.44} parent=0 // pred_fallthru
    _
  // Predicated region
  $region22: #{sdenet_forward.44} parent=0 // pred_check
    _
  $region23: #{sdenet_forward.44} parent=0 // pred_check_branch
    %366 = sbr.rel (0) target = $region25
  $region24: #{sdenet_forward.44} parent=0 // pred_region
    _
  $region25: #{sdenet_forward.44} parent=0 // pred_fallthru
    _

// kernel: sdenet_forward.46
$region0: #{sdenet_forward.46}
  #allocation0 [shape = 'u32[]', space=smem, size = 0x4, offset = 0x4, fixed_abs, tag = 'smem constant byte address 0x4 - core index']
  #allocation1 [shape = 'u32[144,128]{1,0:T(1,128)}', space=vmem, size = 0x12000, scoped, tag = 'internal scratch']
  #allocation2 [shape = 'f32[1,1]{1,0:T(1,128)S(1)}', space=vmem, size = 0x200, scoped, tag = 'scoped memory for sdenet_forward.46']
  %s0 = inlined_call_operand.vmem [shape: bf16[432,128], index: 0, kind: input, shape index: {}]
  %s1 = inlined_call_operand.vmem [shape: bf16[1,432], index: 1, kind: input, shape index: {}]
  %s2 = inlined_call_operand.<no memory space> [shape: f32[1,1], index: 2, kind: input, shape index: {}]
  %s3 = inlined_call_operand.vmem [shape: f32[1,128], index: 3, kind: output, shape index: {}]
  %s4 = sld [smem:[#allocation0]]
  $region22: #{sdenet_forward.46} parent=0
    _
  %s6 = ssub.s32 1, %s4
  %s7 = scalar_select 0, %s6, %s4
  %v8 = vstv %s2
  %9 = vst [vmem:[#allocation2] sm:$0x1] %v8
  // Predicated region
  $region2: #{sdenet_forward.46} parent=0 // pred_check
    _
  $region3: #{sdenet_forward.46} parent=0 // pred_check_branch
    %11 = sbr.rel (0) target = $region5
  $region4: #{sdenet_forward.46} parent=0 // pred_region
    _
  $region5: #{sdenet_forward.46} parent=0 // pred_fallthru
    _
  // Predicated region
  $region6: #{sdenet_forward.46} parent=0 // pred_check
    _
  $region7: #{sdenet_forward.46} parent=0 // pred_check_branch
    %13 = sbr.rel (0) target = $region9
  $region8: #{sdenet_forward.46} parent=0 // pred_region
    _
  $region9: #{sdenet_forward.46} parent=0 // pred_fallthru
    _
  // Predicated region
  $region10: #{sdenet_forward.46} parent=0 // pred_check
    _
  $region11: #{sdenet_forward.46} parent=0 // pred_check_branch
    %15 = sbr.rel (0) target = $region13
  $region12: #{sdenet_forward.46} parent=0 // pred_region
    _
  $region13: #{sdenet_forward.46} parent=0 // pred_fallthru
    _
  %v17 = vld [vmem:[%s1] sm:$0xf]
  %v18 = vld [vmem:[%s0] sm:$0xf]
  %v19 = vld [vmem:[%s0 + $0x4] sm:$0xf]
  %v20 = vld [vmem:[%s0 + $0x8] sm:$0xf]
  %v21 = vld [vmem:[%s0 + $0xc] sm:$0xf]
  %v22 = vld [vmem:[%s0 + $0x10] sm:$0xf]
  %v23 = vld [vmem:[%s0 + $0x14] sm:$0xf]
  %v24 = vld [vmem:[%s0 + $0x18] sm:$0xf]
  %v25 = vld [vmem:[%s0 + $0x1c] sm:$0xf]
  %v26 = vld [vmem:[%s0 + $0x20] sm:$0xf]
  %v27 = vld [vmem:[%s0 + $0x24] sm:$0xf]
  %v28 = vld [vmem:[%s0 + $0x28] sm:$0xf]
  %v29 = vld [vmem:[%s0 + $0x2c] sm:$0xf]
  %v30 = vld [vmem:[%s0 + $0x30] sm:$0xf]
  %v31 = vld [vmem:[%s0 + $0x34] sm:$0xf]
  %v32 = vld [vmem:[%s0 + $0x38] sm:$0xf]
  %v33 = vld [vmem:[%s0 + $0x3c] sm:$0xf]
  %v34 = vld [vmem:[%s0 + $0x40] sm:$0xf]
  %v35 = vld [vmem:[%s0 + $0x44] sm:$0xf]
  %v36 = vld [vmem:[%s0 + $0x48] sm:$0xf]
  %v37 = vld [vmem:[%s0 + $0x4c] sm:$0xf]
  %v38 = vld [vmem:[%s0 + $0x50] sm:$0xf]
  %v39 = vld [vmem:[%s0 + $0x54] sm:$0xf]
  %v40 = vld [vmem:[%s0 + $0x58] sm:$0xf]
  %v41 = vld [vmem:[%s0 + $0x5c] sm:$0xf]
  %v42 = vld [vmem:[%s0 + $0x60] sm:$0xf]
  %v43 = vld [vmem:[%s0 + $0x64] sm:$0xf]
  %v44 = vld [vmem:[%s0 + $0x68] sm:$0xf]
  %v45 = vld [vmem:[%s0 + $0x6c] sm:$0xf]
  %v46 = vld [vmem:[%s0 + $0x70] sm:$0xf]
  %v47 = vld [vmem:[%s0 + $0x74] sm:$0xf]
  %v48 = vld [vmem:[%s0 + $0x78] sm:$0xf]
  %v49 = vld [vmem:[%s0 + $0x7c] sm:$0xf]
  %v50 = vld [vmem:[%s0 + $0x80] sm:$0xf]
  %v51 = vld [vmem:[%s0 + $0x84] sm:$0xf]
  %v52 = vld [vmem:[%s0 + $0x88] sm:$0xf]
  %v53 = vld [vmem:[%s0 + $0x8c] sm:$0xf]
  %v54 = vld [vmem:[%s0 + $0x90] sm:$0xf]
  %v55 = vld [vmem:[%s0 + $0x94] sm:$0xf]
  %v56 = vld [vmem:[%s0 + $0x98] sm:$0xf]
  %v57 = vld [vmem:[%s0 + $0x9c] sm:$0xf]
  %v58 = vld [vmem:[%s0 + $0xa0] sm:$0xf]
  %v59 = vld [vmem:[%s0 + $0xa4] sm:$0xf]
  %v60 = vld [vmem:[%s0 + $0xa8] sm:$0xf]
  %v61 = vld [vmem:[%s0 + $0xac] sm:$0xf]
  %v62 = vld [vmem:[%s0 + $0xb0] sm:$0xf]
  %v63 = vld [vmem:[%s0 + $0xb4] sm:$0xf]
  %v64 = vld [vmem:[%s0 + $0xb8] sm:$0xf]
  %v65 = vld [vmem:[%s0 + $0xbc] sm:$0xf]
  %v66 = vld [vmem:[%s0 + $0xc0] sm:$0xf]
  %v67 = vld [vmem:[%s0 + $0xc4] sm:$0xf]
  %v68 = vld [vmem:[%s0 + $0xc8] sm:$0xf]
  %v69 = vld [vmem:[%s0 + $0xcc] sm:$0xf]
  %v70 = vld [vmem:[%s0 + $0xd0] sm:$0xf]
  %v71 = vld [vmem:[%s0 + $0xd4] sm:$0xf]
  %v72 = vld [vmem:[#allocation2] sm:$0x1]
  %74 = vset.pattern.permute.xlu0 0
  %75 = vperm.xlu0 %74, %v72
  %v76 = vpop.permute.xlu0 %75
  %v78 = vlaneseq
  %v79 = vshrl.u32 %v78, 7
  %v80 = vsub.s32 0, %v79
  %v81 = vrot.slane %v76, %v80
  %v84 = vunpack.c.l.s4 1966171168
  %v85 = vunpack.c.0.s8 %v84
  %v86 = vlaneseq
  %v87 = vshrl.u32 %v86, 7
  %v88 = vsub.s32 %v85, %v87
  %v89 = vrot.slane %v17, %v88
  %v90 = vcombine.high %v89, %v89
  %v92 = vunpack.c.l.s4 1966171168
  %v93 = vunpack.c.0.s8 %v92
  %v94 = vlaneseq
  %v95 = vshrl.u32 %v94, 7
  %v96 = vsub.s32 %v93, %v95
  %v97 = vrot.slane %v89, %v96
  %v99 = vunpack.c.l.s4 1966171168
  %v100 = vunpack.c.0.s8 %v99
  %v101 = vlaneseq
  %v102 = vshrl.u32 %v101, 7
  %v103 = vsub.s32 %v100, %v102
  %v104 = vrot.slane %v90, %v103
  %v105 = vcombine.high %v97, %v97
  %v106 = vcombine.high %v104, %v104
  %v164 = vunpack.c.l.b16 %v18
  %v165 = vunpack.c.l.b16 %v19
  %v166 = vunpack.c.l.b16 %v20
  %v167 = vunpack.c.l.b16 %v21
  %v168 = vunpack.c.l.b16 %v22
  %v169 = vunpack.c.l.b16 %v23
  %v170 = vunpack.c.l.b16 %v24
  %v171 = vunpack.c.l.b16 %v25
  %v172 = vunpack.c.l.b16 %v26
  %v173 = vunpack.c.l.b16 %v27
  %v174 = vunpack.c.l.b16 %v28
  %v175 = vunpack.c.l.b16 %v29
  %v176 = vunpack.c.l.b16 %v30
  %v177 = vunpack.c.l.b16 %v31
  %v178 = vunpack.c.l.b16 %v32
  %v179 = vunpack.c.l.b16 %v33
  %v180 = vunpack.c.l.b16 %v34
  %v181 = vunpack.c.l.b16 %v35
  %v182 = vunpack.c.l.b16 %v36
  %v183 = vunpack.c.l.b16 %v37
  %v184 = vunpack.c.l.b16 %v38
  %v185 = vunpack.c.l.b16 %v39
  %v186 = vunpack.c.l.b16 %v40
  %v187 = vunpack.c.l.b16 %v41
  %v188 = vunpack.c.l.b16 %v42
  %v189 = vunpack.c.l.b16 %v43
  %v190 = vunpack.c.l.b16 %v44
  %v191 = vunpack.c.l.b16 %v45
  %v192 = vunpack.c.l.b16 %v46
  %v193 = vunpack.c.l.b16 %v47
  %v194 = vunpack.c.l.b16 %v48
  %v195 = vunpack.c.l.b16 %v49
  %v196 = vunpack.c.l.b16 %v50
  %v197 = vunpack.c.l.b16 %v51
  %v198 = vunpack.c.l.b16 %v52
  %v199 = vunpack.c.l.b16 %v53
  %v200 = vunpack.c.l.b16 %v54
  %v201 = vunpack.c.l.b16 %v55
  %v202 = vunpack.c.l.b16 %v56
  %v203 = vunpack.c.l.b16 %v57
  %v204 = vunpack.c.l.b16 %v58
  %v205 = vunpack.c.l.b16 %v59
  %v206 = vunpack.c.l.b16 %v60
  %v207 = vunpack.c.l.b16 %v61
  %v208 = vunpack.c.l.b16 %v62
  %v209 = vunpack.c.l.b16 %v63
  %v210 = vunpack.c.l.b16 %v64
  %v211 = vunpack.c.l.b16 %v65
  %v212 = vunpack.c.l.b16 %v66
  %v213 = vunpack.c.l.b16 %v67
  %v214 = vunpack.c.l.b16 %v68
  %v215 = vunpack.c.l.b16 %v69
  %v216 = vunpack.c.l.b16 %v70
  %v217 = vunpack.c.l.b16 %v71
  %v218 = vpack.c.b16 %v165, %v164
  %v219 = vpack.c.b16 %v167, %v166
  %v220 = vpack.c.b16 %v169, %v168
  %v221 = vpack.c.b16 %v171, %v170
  %v222 = vpack.c.b16 %v173, %v172
  %v223 = vpack.c.b16 %v175, %v174
  %v224 = vpack.c.b16 %v177, %v176
  %v225 = vpack.c.b16 %v179, %v178
  %v226 = vpack.c.b16 %v181, %v180
  %v227 = vpack.c.b16 %v183, %v182
  %v228 = vpack.c.b16 %v185, %v184
  %v229 = vpack.c.b16 %v187, %v186
  %v230 = vpack.c.b16 %v189, %v188
  %v231 = vpack.c.b16 %v191, %v190
  %v232 = vpack.c.b16 %v193, %v192
  %v233 = vpack.c.b16 %v195, %v194
  %v234 = vpack.c.b16 %v197, %v196
  %v235 = vpack.c.b16 %v199, %v198
  %v236 = vpack.c.b16 %v201, %v200
  %v237 = vpack.c.b16 %v203, %v202
  %v238 = vpack.c.b16 %v205, %v204
  %v239 = vpack.c.b16 %v207, %v206
  %v240 = vpack.c.b16 %v209, %v208
  %v241 = vpack.c.b16 %v211, %v210
  %v242 = vpack.c.b16 %v213, %v212
  %v243 = vpack.c.b16 %v215, %v214
  %v244 = vpack.c.b16 %v217, %v216
  %vm272 = vcmask 392192
  %v274 = vsel %vm272, %v106, 0
  %276 = vmatprep.subr.bf16.mxu0 0
  %277 = vmatpush1.bf16.msra.mxu0 %v218
  %278 = vmatprep.subr.bf16.mxu0 0
  %279 = vmatpush1.bf16.msra.mxu0 %v219
  %280 = vmatprep.subr.bf16.mxu0 0
  %281 = vmatpush1.bf16.msra.mxu0 %v220
  %282 = vmatprep.subr.bf16.mxu0 0
  %283 = vmatpush1.bf16.msra.mxu0 %v221
  %284 = vmatprep.subr.bf16.mxu0 0
  %285 = vmatpush1.bf16.msra.mxu0 %v222
  %286 = vmatprep.subr.bf16.mxu0 0
  %287 = vmatpush1.bf16.msra.mxu0 %v223
  %288 = vmatprep.subr.bf16.mxu0 0
  %289 = vmatpush1.bf16.msra.mxu0 %v224
  %290 = vmatprep.subr.bf16.mxu0 0
  %291 = vmatpush1.bf16.msra.mxu0 %v225
  %292 = vmatprep.subr.bf16.mxu0 0
  %293 = vmatpush1.bf16.msra.mxu0 %v226
  %294 = vmatprep.subr.bf16.mxu0 0
  %295 = vmatpush1.bf16.msra.mxu0 %v227
  %296 = vmatprep.subr.bf16.mxu0 0
  %297 = vmatpush1.bf16.msra.mxu0 %v228
  %298 = vmatprep.subr.bf16.mxu0 0
  %299 = vmatpush1.bf16.msra.mxu0 %v229
  %300 = vmatprep.subr.bf16.mxu0 0
  %301 = vmatpush1.bf16.msra.mxu0 %v230
  %302 = vmatprep.subr.bf16.mxu0 0
  %303 = vmatpush1.bf16.msra.mxu0 %v231
  %304 = vmatprep.subr.bf16.mxu0 0
  %305 = vmatpush1.bf16.msra.mxu0 %v232
  %306 = vmatprep.subr.bf16.mxu0 0
  %307 = vmatpush1.bf16.msra.mxu0 %v233
  %308 = vmatprep.mubr.bf16.mxu0 %v104
  %309 = vmatmul.mubr.bf16.gmra.mrb[0].mxu0 %v97
  %v310 = vpop.f32.mrb[0].mxu0
  %v311 = vadd.f32 %v81, %v310
  %v312 = vpop.f32.mrb[0].mxu0
  %v313 = vpop.f32.mrb[0].mxu0
  %v314 = vpop.f32.mrb[0].mxu0
  %315 = vdwg.mxu0
  %316 = vmatprep.subr.bf16.mxu0 0
  %317 = vmatpush1.bf16.msra.mxu0 %v234
  %318 = vmatprep.subr.bf16.mxu0 0
  %319 = vmatpush1.bf16.msra.mxu0 %v235
  %320 = vmatprep.subr.bf16.mxu0 0
  %321 = vmatpush1.bf16.msra.mxu0 %v236
  %322 = vmatprep.subr.bf16.mxu0 0
  %323 = vmatpush1.bf16.msra.mxu0 %v237
  %324 = vmatprep.subr.bf16.mxu0 0
  %325 = vmatpush1.bf16.msra.mxu0 %v238
  %326 = vmatprep.subr.bf16.mxu0 0
  %327 = vmatpush1.bf16.msra.mxu0 %v239
  %328 = vmatprep.subr.bf16.mxu0 0
  %329 = vmatpush1.bf16.msra.mxu0 %v240
  %330 = vmatprep.subr.bf16.mxu0 0
  %331 = vmatpush1.bf16.msra.mxu0 %v241
  %332 = vmatprep.subr.bf16.mxu0 0
  %333 = vmatpush1.bf16.msra.mxu0 %v242
  %334 = vmatprep.subr.bf16.mxu0 0
  %335 = vmatpush1.bf16.msra.mxu0 %v243
  %336 = vmatprep.subr.bf16.mxu0 0
  %337 = vmatpush1.bf16.msra.mxu0 %v244
  %338 = vmatprep.subr.bf16.mxu0 0
  %339 = vmatpush1.bf16.msra.mxu0 0
  %340 = vmatprep.subr.bf16.mxu0 0
  %341 = vmatpush1.bf16.msra.mxu0 0
  %342 = vmatprep.subr.bf16.mxu0 0
  %343 = vmatpush1.bf16.msra.mxu0 0
  %344 = vmatprep.subr.bf16.mxu0 0
  %345 = vmatpush1.bf16.msra.mxu0 0
  %346 = vmatprep.subr.bf16.mxu0 0
  %347 = vmatpush1.bf16.msra.mxu0 0
  %348 = vmatprep.mubr.bf16.mxu0 %v274
  %349 = vmatmul.mubr.bf16.gmra.mrb[0].mxu0 %v105
  %v350 = vpop.f32.mrb[0].mxu0
  %v351 = vadd.f32 %v311, %v350
  %v352 = vpop.f32.mrb[0].mxu0
  %v353 = vpop.f32.mrb[0].mxu0
  %v354 = vpop.f32.mrb[0].mxu0
  %355 = vdwg.mxu0
  %356 = vst [vmem:[%s3] sm:$0x1] %v351
  // Predicated region
  $region14: #{sdenet_forward.46} parent=0 // pred_check
    _
  $region15: #{sdenet_forward.46} parent=0 // pred_check_branch
    %358 = sbr.rel (0) target = $region17
  $region16: #{sdenet_forward.46} parent=0 // pred_region
    _
  $region17: #{sdenet_forward.46} parent=0 // pred_fallthru
    _
  // Predicated region
  $region18: #{sdenet_forward.46} parent=0 // pred_check
    _
  $region19: #{sdenet_forward.46} parent=0 // pred_check_branch
    %360 = sbr.rel (0) target = $region21
  $region20: #{sdenet_forward.46} parent=0 // pred_region
    _
  $region21: #{sdenet_forward.46} parent=0 // pred_fallthru
    _

// kernel: sdenet_forward.47
$region0: #{sdenet_forward.47}
  #allocation0 [shape = 'u32[]', space=smem, size = 0x4, offset = 0x4, fixed_abs, tag = 'smem constant byte address 0x4 - core index']
  #allocation1 [shape = 'u32[144,128]{1,0:T(1,128)}', space=vmem, size = 0x12000, scoped, tag = 'internal scratch']
  %s0 = inlined_call_operand.vmem [shape: f32[4,512], index: 0, kind: input, shape index: {}]
  %s1 = inlined_call_operand.vmem [shape: f32[16,4], index: 1, kind: input, shape index: {}]
  %s2 = inlined_call_operand.vmem [shape: f32[16,1], index: 2, kind: input, shape index: {}]
  %s3 = inlined_call_operand.vmem [shape: f32[1,512], index: 3, kind: output, shape index: {}]
  %s4 = sld [smem:[#allocation0]]
  $region22: #{sdenet_forward.47} parent=0
    _
  %s6 = ssub.s32 1, %s4
  %s7 = scalar_select 0, %s6, %s4
  // Predicated region
  $region2: #{sdenet_forward.47} parent=0 // pred_check
    _
  $region3: #{sdenet_forward.47} parent=0 // pred_check_branch
    %9 = sbr.rel (0) target = $region5
  $region4: #{sdenet_forward.47} parent=0 // pred_region
    _
  $region5: #{sdenet_forward.47} parent=0 // pred_fallthru
    _
  // Predicated region
  $region6: #{sdenet_forward.47} parent=0 // pred_check
    _
  $region7: #{sdenet_forward.47} parent=0 // pred_check_branch
    %11 = sbr.rel (0) target = $region9
  $region8: #{sdenet_forward.47} parent=0 // pred_region
    _
  $region9: #{sdenet_forward.47} parent=0 // pred_fallthru
    _
  // Predicated region
  $region10: #{sdenet_forward.47} parent=0 // pred_check
    _
  $region11: #{sdenet_forward.47} parent=0 // pred_check_branch
    %13 = sbr.rel (0) target = $region13
  $region12: #{sdenet_forward.47} parent=0 // pred_region
    _
  $region13: #{sdenet_forward.47} parent=0 // pred_fallthru
    _
  %v14 = vld [vmem:[%s0] sm:$0xff]
  %v15 = vld [vmem:[%s0 + $0x8] sm:$0xff]
  %v16 = vld [vmem:[%s1] sm:$0xff]
  %v17 = vld [vmem:[%s1 + $0x8] sm:$0xff]
  %19 = vset.pattern.permute.xlu0 0
  %20 = vperm.xlu0 %19, %v16
  %v21 = vpop.permute.xlu0 %20
  %24 = vset.pattern.permute.xlu0 0
  %25 = vperm.xlu0 %24, %v17
  %v26 = vpop.permute.xlu0 %25
  %v30 = vlaneseq
  %v31 = vshrl.u32 %v30, 7
  %v32 = vsub.s32 0, %v31
  %v33 = vrot.slane %v14, %v32
  %v34 = vlaneseq
  %v35 = vshrl.u32 %v34, 7
  %v36 = vsub.s32 4, %v35
  %v37 = vrot.slane %v14, %v36
  %v38 = vlaneseq
  %v39 = vshrl.u32 %v38, 7
  %v40 = vsub.s32 0, %v39
  %v41 = vrot.slane %v15, %v40
  %v42 = vlaneseq
  %v43 = vshrl.u32 %v42, 7
  %v44 = vsub.s32 4, %v43
  %v45 = vrot.slane %v15, %v44
  %v50 = vlaneseq
  %v51 = vshrl.u32 %v50, 7
  %v52 = vsub.s32 0, %v51
  %v53 = vrot.slane %v33, %v52
  %v54 = vlaneseq
  %v55 = vshrl.u32 %v54, 7
  %v56 = vsub.s32 0, %v55
  %v57 = vrot.slane %v37, %v56
  %v58 = vlaneseq
  %v59 = vshrl.u32 %v58, 7
  %v60 = vsub.s32 0, %v59
  %v61 = vrot.slane %v41, %v60
  %v62 = vlaneseq
  %v63 = vshrl.u32 %v62, 7
  %v64 = vsub.s32 0, %v63
  %v65 = vrot.slane %v45, %v64
  %v66 = vmul.f32 %v21, %v53
  %v67 = vmul.f32 %v21, %v57
  %v68 = vmul.f32 %v21, %v61
  %v69 = vmul.f32 %v21, %v65
  %v70 = vmul.f32 %v26, %v53
  %v71 = vmul.f32 %v26, %v57
  %v72 = vmul.f32 %v26, %v61
  %v73 = vmul.f32 %v26, %v65
  %74 = vset.pattern.permute.xlu0 1
  %75 = vperm.xlu0 %74, %v16
  %v76 = vpop.permute.xlu0 %75
  %78 = vset.pattern.permute.xlu0 1
  %79 = vperm.xlu0 %78, %v17
  %v80 = vpop.permute.xlu0 %79
  %v82 = vlaneseq
  %v83 = vshrl.u32 %v82, 7
  %v84 = vsub.s32 1, %v83
  %v85 = vrot.slane %v14, %v84
  %v86 = vlaneseq
  %v87 = vshrl.u32 %v86, 7
  %v88 = vsub.s32 5, %v87
  %v89 = vrot.slane %v14, %v88
  %v90 = vlaneseq
  %v91 = vshrl.u32 %v90, 7
  %v92 = vsub.s32 1, %v91
  %v93 = vrot.slane %v15, %v92
  %v94 = vlaneseq
  %v95 = vshrl.u32 %v94, 7
  %v96 = vsub.s32 5, %v95
  %v97 = vrot.slane %v15, %v96
  %v102 = vlaneseq
  %v103 = vshrl.u32 %v102, 7
  %v104 = vsub.s32 1, %v103
  %v105 = vrot.slane %v85, %v104
  %v106 = vlaneseq
  %v107 = vshrl.u32 %v106, 7
  %v108 = vsub.s32 1, %v107
  %v109 = vrot.slane %v89, %v108
  %v110 = vlaneseq
  %v111 = vshrl.u32 %v110, 7
  %v112 = vsub.s32 1, %v111
  %v113 = vrot.slane %v93, %v112
  %v114 = vlaneseq
  %v115 = vshrl.u32 %v114, 7
  %v116 = vsub.s32 1, %v115
  %v117 = vrot.slane %v97, %v116
  %v118 = vmul.f32 %v76, %v105
  %v119 = vmul.f32 %v76, %v109
  %v120 = vmul.f32 %v76, %v113
  %v121 = vmul.f32 %v76, %v117
  %v122 = vmul.f32 %v80, %v105
  %v123 = vmul.f32 %v80, %v109
  %v124 = vmul.f32 %v80, %v113
  %v125 = vmul.f32 %v80, %v117
  %v126 = vadd.f32 %v66, %v118
  %v127 = vadd.f32 %v67, %v119
  %v128 = vadd.f32 %v68, %v120
  %v129 = vadd.f32 %v69, %v121
  %v130 = vadd.f32 %v70, %v122
  %v131 = vadd.f32 %v71, %v123
  %v132 = vadd.f32 %v72, %v124
  %v133 = vadd.f32 %v73, %v125
  %134 = vset.pattern.permute.xlu0 2
  %135 = vperm.xlu0 %134, %v16
  %v136 = vpop.permute.xlu0 %135
  %138 = vset.pattern.permute.xlu0 2
  %139 = vperm.xlu0 %138, %v17
  %v140 = vpop.permute.xlu0 %139
  %v142 = vlaneseq
  %v143 = vshrl.u32 %v142, 7
  %v144 = vsub.s32 2, %v143
  %v145 = vrot.slane %v14, %v144
  %v146 = vlaneseq
  %v147 = vshrl.u32 %v146, 7
  %v148 = vsub.s32 6, %v147
  %v149 = vrot.slane %v14, %v148
  %v150 = vlaneseq
  %v151 = vshrl.u32 %v150, 7
  %v152 = vsub.s32 2, %v151
  %v153 = vrot.slane %v15, %v152
  %v154 = vlaneseq
  %v155 = vshrl.u32 %v154, 7
  %v156 = vsub.s32 6, %v155
  %v157 = vrot.slane %v15, %v156
  %v162 = vlaneseq
  %v163 = vshrl.u32 %v162, 7
  %v164 = vsub.s32 2, %v163
  %v165 = vrot.slane %v145, %v164
  %v166 = vlaneseq
  %v167 = vshrl.u32 %v166, 7
  %v168 = vsub.s32 2, %v167
  %v169 = vrot.slane %v149, %v168
  %v170 = vlaneseq
  %v171 = vshrl.u32 %v170, 7
  %v172 = vsub.s32 2, %v171
  %v173 = vrot.slane %v153, %v172
  %v174 = vlaneseq
  %v175 = vshrl.u32 %v174, 7
  %v176 = vsub.s32 2, %v175
  %v177 = vrot.slane %v157, %v176
  %v178 = vmul.f32 %v136, %v165
  %v179 = vmul.f32 %v136, %v169
  %v180 = vmul.f32 %v136, %v173
  %v181 = vmul.f32 %v136, %v177
  %v182 = vmul.f32 %v140, %v165
  %v183 = vmul.f32 %v140, %v169
  %v184 = vmul.f32 %v140, %v173
  %v185 = vmul.f32 %v140, %v177
  %v186 = vadd.f32 %v126, %v178
  %v187 = vadd.f32 %v127, %v179
  %v188 = vadd.f32 %v128, %v180
  %v189 = vadd.f32 %v129, %v181
  %v190 = vadd.f32 %v130, %v182
  %v191 = vadd.f32 %v131, %v183
  %v192 = vadd.f32 %v132, %v184
  %v193 = vadd.f32 %v133, %v185
  %194 = vset.pattern.permute.xlu0 3
  %195 = vperm.xlu0 %194, %v16
  %v196 = vpop.permute.xlu0 %195
  %198 = vset.pattern.permute.xlu0 3
  %199 = vperm.xlu0 %198, %v17
  %v200 = vpop.permute.xlu0 %199
  %v202 = vlaneseq
  %v203 = vshrl.u32 %v202, 7
  %v204 = vsub.s32 3, %v203
  %v205 = vrot.slane %v14, %v204
  %v206 = vlaneseq
  %v207 = vshrl.u32 %v206, 7
  %v208 = vsub.s32 7, %v207
  %v209 = vrot.slane %v14, %v208
  %v210 = vlaneseq
  %v211 = vshrl.u32 %v210, 7
  %v212 = vsub.s32 3, %v211
  %v213 = vrot.slane %v15, %v212
  %v214 = vlaneseq
  %v215 = vshrl.u32 %v214, 7
  %v216 = vsub.s32 7, %v215
  %v217 = vrot.slane %v15, %v216
  %v222 = vlaneseq
  %v223 = vshrl.u32 %v222, 7
  %v224 = vsub.s32 3, %v223
  %v225 = vrot.slane %v205, %v224
  %v226 = vlaneseq
  %v227 = vshrl.u32 %v226, 7
  %v228 = vsub.s32 3, %v227
  %v229 = vrot.slane %v209, %v228
  %v230 = vlaneseq
  %v231 = vshrl.u32 %v230, 7
  %v232 = vsub.s32 3, %v231
  %v233 = vrot.slane %v213, %v232
  %v234 = vlaneseq
  %v235 = vshrl.u32 %v234, 7
  %v236 = vsub.s32 3, %v235
  %v237 = vrot.slane %v217, %v236
  %v238 = vmul.f32 %v196, %v225
  %v239 = vmul.f32 %v196, %v229
  %v240 = vmul.f32 %v196, %v233
  %v241 = vmul.f32 %v196, %v237
  %v242 = vmul.f32 %v200, %v225
  %v243 = vmul.f32 %v200, %v229
  %v244 = vmul.f32 %v200, %v233
  %v245 = vmul.f32 %v200, %v237
  %v246 = vadd.f32 %v186, %v238
  %v247 = vadd.f32 %v187, %v239
  %v248 = vadd.f32 %v188, %v240
  %v249 = vadd.f32 %v189, %v241
  %v250 = vadd.f32 %v190, %v242
  %v251 = vadd.f32 %v191, %v243
  %v252 = vadd.f32 %v192, %v244
  %v253 = vadd.f32 %v193, %v245
  %v254 = vsub.f32 0.0, %v246
  %v255 = vsub.f32 0.0, %v247
  %v256 = vsub.f32 0.0, %v248
  %v257 = vsub.f32 0.0, %v249
  %v258 = vsub.f32 0.0, %v250
  %v259 = vsub.f32 0.0, %v251
  %v260 = vsub.f32 0.0, %v252
  %v261 = vsub.f32 0.0, %v253
  %v262 = vmax.f32 %v254, %v258
  %v263 = vrot.slane %v262, 4
  %v264 = vmax.f32 %v262, %v263
  %v265 = vrot.slane %v264, 2
  %v266 = vmax.f32 %v264, %v265
  %v267 = vrot.slane %v266, 1
  %v268 = vmax.f32 %v266, %v267
  %v269 = vmax.f32 %v255, %v259
  %v270 = vrot.slane %v269, 4
  %v271 = vmax.f32 %v269, %v270
  %v272 = vrot.slane %v271, 2
  %v273 = vmax.f32 %v271, %v272
  %v274 = vrot.slane %v273, 1
  %v275 = vmax.f32 %v273, %v274
  %v276 = vmax.f32 %v256, %v260
  %v277 = vrot.slane %v276, 4
  %v278 = vmax.f32 %v276, %v277
  %v279 = vrot.slane %v278, 2
  %v280 = vmax.f32 %v278, %v279
  %v281 = vrot.slane %v280, 1
  %v282 = vmax.f32 %v280, %v281
  %v283 = vmax.f32 %v257, %v261
  %v284 = vrot.slane %v283, 4
  %v285 = vmax.f32 %v283, %v284
  %v286 = vrot.slane %v285, 2
  %v287 = vmax.f32 %v285, %v286
  %v288 = vrot.slane %v287, 1
  %v289 = vmax.f32 %v287, %v288
  %v290 = vsub.f32 %v254, %v268
  %v291 = vsub.f32 %v255, %v275
  %v292 = vsub.f32 %v256, %v282
  %v293 = vsub.f32 %v257, %v289
  %v294 = vsub.f32 %v258, %v268
  %v295 = vsub.f32 %v259, %v275
  %v296 = vsub.f32 %v260, %v282
  %v297 = vsub.f32 %v261, %v289
  %v298 = vmul.f32 %v290, 1.442695
  %v299 = vpow.pop %v298
  %v300 = vmul.f32 %v291, 1.442695
  %v301 = vpow.pop %v300
  %v302 = vmul.f32 %v292, 1.442695
  %v303 = vpow.pop %v302
  %v304 = vmul.f32 %v293, 1.442695
  %v305 = vpow.pop %v304
  %v306 = vmul.f32 %v294, 1.442695
  %v307 = vpow.pop %v306
  %v308 = vmul.f32 %v295, 1.442695
  %v309 = vpow.pop %v308
  %v310 = vmul.f32 %v296, 1.442695
  %v311 = vpow.pop %v310
  %v312 = vmul.f32 %v297, 1.442695
  %v313 = vpow.pop %v312
  %v314 = vadd.f32 %v299, %v307
  %v315 = vrot.slane %v314, 4
  %v316 = vadd.f32 %v314, %v315
  %v317 = vrot.slane %v316, 2
  %v318 = vadd.f32 %v316, %v317
  %v319 = vrot.slane %v318, 1
  %v320 = vadd.f32 %v318, %v319
  %v321 = vadd.f32 %v301, %v309
  %v322 = vrot.slane %v321, 4
  %v323 = vadd.f32 %v321, %v322
  %v324 = vrot.slane %v323, 2
  %v325 = vadd.f32 %v323, %v324
  %v326 = vrot.slane %v325, 1
  %v327 = vadd.f32 %v325, %v326
  %v328 = vadd.f32 %v303, %v311
  %v329 = vrot.slane %v328, 4
  %v330 = vadd.f32 %v328, %v329
  %v331 = vrot.slane %v330, 2
  %v332 = vadd.f32 %v330, %v331
  %v333 = vrot.slane %v332, 1
  %v334 = vadd.f32 %v332, %v333
  %v335 = vadd.f32 %v305, %v313
  %v336 = vrot.slane %v335, 4
  %v337 = vadd.f32 %v335, %v336
  %v338 = vrot.slane %v337, 2
  %v339 = vadd.f32 %v337, %v338
  %v340 = vrot.slane %v339, 1
  %v341 = vadd.f32 %v339, %v340
  %v342 = vrcp.pop %v320
  %v343 = vmul.f32 %v299, %v342
  %v344 = vrcp.pop %v327
  %v345 = vmul.f32 %v301, %v344
  %v346 = vrcp.pop %v334
  %v347 = vmul.f32 %v303, %v346
  %v348 = vrcp.pop %v341
  %v349 = vmul.f32 %v305, %v348
  %v350 = vmul.f32 %v307, %v342
  %v351 = vmul.f32 %v309, %v344
  %v352 = vmul.f32 %v311, %v346
  %v353 = vmul.f32 %v313, %v348
  %v354 = vld [vmem:[%s2] sm:$0xff]
  %v355 = vld [vmem:[%s2 + $0x8] sm:$0xff]
  %357 = vset.pattern.permute.xlu0 0
  %358 = vperm.xlu0 %357, %v354
  %v359 = vpop.permute.xlu0 %358
  %362 = vset.pattern.permute.xlu0 0
  %363 = vperm.xlu0 %362, %v355
  %v364 = vpop.permute.xlu0 %363
  %v366 = vmul.f32 %v343, %v359
  %v367 = vmul.f32 %v345, %v359
  %v368 = vmul.f32 %v347, %v359
  %v369 = vmul.f32 %v349, %v359
  %v370 = vmul.f32 %v350, %v364
  %v371 = vmul.f32 %v351, %v364
  %v372 = vmul.f32 %v352, %v364
  %v373 = vmul.f32 %v353, %v364
  %v374 = vadd.f32 %v366, %v370
  %v375 = vrot.slane %v374, 4
  %v376 = vadd.f32 %v374, %v375
  %v377 = vrot.slane %v376, 2
  %v378 = vadd.f32 %v376, %v377
  %v379 = vrot.slane %v378, 1
  %v380 = vadd.f32 %v378, %v379
  %v381 = vadd.f32 %v367, %v371
  %v382 = vrot.slane %v381, 4
  %v383 = vadd.f32 %v381, %v382
  %v384 = vrot.slane %v383, 2
  %v385 = vadd.f32 %v383, %v384
  %v386 = vrot.slane %v385, 1
  %v387 = vadd.f32 %v385, %v386
  %v388 = vadd.f32 %v368, %v372
  %v389 = vrot.slane %v388, 4
  %v390 = vadd.f32 %v388, %v389
  %v391 = vrot.slane %v390, 2
  %v392 = vadd.f32 %v390, %v391
  %v393 = vrot.slane %v392, 1
  %v394 = vadd.f32 %v392, %v393
  %v395 = vadd.f32 %v369, %v373
  %v396 = vrot.slane %v395, 4
  %v397 = vadd.f32 %v395, %v396
  %v398 = vrot.slane %v397, 2
  %v399 = vadd.f32 %v397, %v398
  %v400 = vrot.slane %v399, 1
  %v401 = vadd.f32 %v399, %v400
  %v406 = vcombine.low %v380, %v387
  %v407 = vcombine.low %v394, %v401
  %v409 = vunpack.c.l.s4 1966171168
  %v410 = vunpack.c.0.s8 %v409
  %v411 = vlaneseq
  %v412 = vshrl.u32 %v411, 7
  %v413 = vsub.s32 %v410, %v412
  %v414 = vrot.slane %v406, %v413
  %v416 = vunpack.c.l.s4 1966171168
  %v417 = vunpack.c.0.s8 %v416
  %v418 = vlaneseq
  %v419 = vshrl.u32 %v418, 7
  %v420 = vsub.s32 %v417, %v419
  %v421 = vrot.slane %v407, %v420
  %v422 = vcombine.low %v414, %v421
  %v424 = vunpack.c.l.s4 1966171168
  %v425 = vunpack.c.0.s8 %v424
  %v426 = vlaneseq
  %v427 = vshrl.u32 %v426, 7
  %v428 = vsub.s32 %v425, %v427
  %v429 = vrot.slane %v422, %v428
  %v431 = vlaneseq
  %vm432 = vcmp.ge.s32.totalorder %v431, 0
  %vm433 = vcmp.lt.s32.totalorder %v431, 512
  %vm434 = vmand %vm432, %vm433
  %435 = vst.msk [vmem:[%s3] sm:$0xf] %vm434, %v429
  // Predicated region
  $region14: #{sdenet_forward.47} parent=0 // pred_check
    _
  $region15: #{sdenet_forward.47} parent=0 // pred_check_branch
    %437 = sbr.rel (0) target = $region17
  $region16: #{sdenet_forward.47} parent=0 // pred_region
    _
  $region17: #{sdenet_forward.47} parent=0 // pred_fallthru
    _
  // Predicated region
  $region18: #{sdenet_forward.47} parent=0 // pred_check
    _
  $region19: #{sdenet_forward.47} parent=0 // pred_check_branch
    %439 = sbr.rel (0) target = $region21
  $region20: #{sdenet_forward.47} parent=0 // pred_region
    _
  $region21: #{sdenet_forward.47} parent=0 // pred_fallthru
    _

</llo_original>
